<compile_context>
chip_gen: v7x
topology: tpu7x:2x2x1
jax: 0.10.0
libtpu: 0.0.40
codegen_flags: <defaults>
</compile_context>

<pallas_src>
import jax
import jax.numpy as jnp
from jax.experimental import pallas as pl
from jax.experimental.pallas import tpu as pltpu

# ---- Module hyper-parameters (consistent with fc1 = Linear(red_out*4*4, 1024),
#      i.e. the final feature map is 4x4) ----
RED_K = 3        # red_kernel
RED_S = 1        # red_stride
NONRED_K = 1     # nonred_kernel
NONRED_S = 1     # nonred_stride
RED_OUT = 8      # red_out
NONRED_OUT = 6   # nonred_out
F_SIZE = 4
IN_SPATIAL = 12  # 12 -> 10 -> 10 -> 8 -> 8 -> 6 -> 6 -> 4

_IMG = IN_SPATIAL * IN_SPATIAL                       # 144 lanes per image slab
_SHIFTS = tuple(i * IN_SPATIAL + j                    # tap t = i*3 + j -> lane shift
                for i in range(RED_K) for j in range(RED_K))


# ----------------------------- fused Pallas kernel -----------------------------
def _fused_net_kernel(xs_ref, w1_ref, b1_ref, wn_ref, bn_ref,
                      w2_ref, b2_ref, wf1_ref, bf1_ref, wf2_ref, bf2_ref,
                      o_ref, act_scr, flat_scr):
    """Entire Net forward.  Activations are channel-major (C, L) with the 12x12
    grid in lanes (L = batch*144 padded to a lane-tile multiple); VALID crops are
    folded, so only the 4x4 block at grid offset (0..3, 0..3) is read at the end.
    Everything stays resident in VMEM."""
    f32, bf16 = jnp.float32, jnp.bfloat16
    lpad = xs_ref.shape[1]
    batch = o_ref.shape[0]

    def conv_non(a):
        # 1x1 conv_non + ReLU: (6, 8) @ (8, L).
        return jnp.maximum(
            jnp.dot(wn_ref[...], a.astype(bf16), preferred_element_type=f32)
            + bn_ref[...], 0.0)

    def conv_red(a):
        # 3x3 conv2_red + ReLU: tap t = lane roll by i*12+j (XLU) + channel mix
        # (8, 6) @ (6, L) on the MXU; crop is folded (garbage lanes never read).
        acc = jnp.dot(w2_ref[0], a.astype(bf16), preferred_element_type=f32)
        for t in range(1, RED_K * RED_K):
            shifted = pltpu.roll(a, shift=lpad - _SHIFTS[t], axis=1)
            acc = acc + jnp.dot(w2_ref[t], shifted.astype(bf16),
                                preferred_element_type=f32)
        return jnp.maximum(acc + b2_ref[...], 0.0)

    # conv1_red: the wrapper supplies the 9 tap-shifted input copies (Cin == 1),
    # so layer 1 is a single (8, 9) @ (9, L) matmul.
    act = jnp.maximum(
        jnp.dot(w1_ref[...], xs_ref[...], preferred_element_type=f32)
        + b1_ref[...], 0.0)                                   # (8, L)

    act = conv_red(conv_non(act))                             # (8, L)
    act = conv_red(conv_non(act))                             # (8, L)
    act = conv_red(conv_non(act))                             # (8, L), valid 4x4 at y,x < 4

    # Assemble the PyTorch (c, h, w) flatten as a lane-dense (batch, 128) slab
    # with small static VMEM copies (work is linear in batch), then fc1 is a
    # single K=128 matmul against the original (transposed) weight.
    act_scr[...] = act
    for n in range(batch):
        for c in range(RED_OUT):
            for y in range(F_SIZE):
                src = act_scr[pl.ds(c, 1),
                              pl.ds(n * _IMG + y * IN_SPATIAL, F_SIZE)]
                flat_scr[pl.ds(n, 1),
                         pl.ds(c * F_SIZE * F_SIZE + y * F_SIZE, F_SIZE)] = src

    h = jnp.maximum(
        jnp.dot(flat_scr[...].astype(bf16), wf1_ref[...],
                preferred_element_type=f32) + bf1_ref[...], 0.0)        # (N, 1024)

    # fc2 + ReLU as elementwise multiply + lane reduction (f32, weight stays a
    # (1, 1024) row; no lane-padded (1024, 1) operand is materialized).
    out = jnp.sum(h * wf2_ref[...], axis=-1, keepdims=True) + bf2_ref[...]
    out = jnp.maximum(out, 0.0)                                         # (N, 1)

    # Lane-dense store: write a full (N, 128) slab; the wrapper slices column 0.
    o_ref[...] = jnp.broadcast_to(out, o_ref.shape)


# ------------------- one-time parameter preparation (batch-independent) ---------
def prepare_fused(params):
    """Re-layout all parameters once.  Everything here is O(1) bytes (no gather
    matrices, nothing scales with batch)."""
    w1, b1 = params["conv1_red"]    # (8, 1, 3, 3), (8,)
    w2, b2 = params["conv2_red"]    # (8, 6, 3, 3), (8,)
    wn, bn = params["conv_non"]     # (6, 8, 1, 1), (6,)
    wf1, bf1 = params["fc1"]        # (1024, 128), (1024,)
    wf2, bf2 = params["fc2"]        # (1, 1024), (1,)
    bf16, f32 = jnp.bfloat16, jnp.float32
    return {
        # conv1 taps as (8, 9), tap t = i*3 + j (matches _SHIFTS order).
        "w1": w1[:, 0, :, :].reshape(RED_OUT, RED_K * RED_K).astype(bf16),
        "b1": b1.reshape(-1, 1).astype(f32),
        # conv2 taps as (9, 8, 6): w2t[t, co, ci] = w2[co, ci, i, j].
        "w2": jnp.transpose(w2, (2, 3, 0, 1))
                 .reshape(RED_K * RED_K, RED_OUT, NONRED_OUT).astype(bf16),
        "b2": b2.reshape(-1, 1).astype(f32),
        "wn": wn[:, :, 0, 0].astype(bf16),            # (6, 8)
        "bn": bn.reshape(-1, 1).astype(f32),
        "wf1": wf1.T.astype(bf16),                    # (128, 1024), original flatten order
        "bf1": bf1.reshape(1, -1).astype(f32),
        "wf2": wf2.astype(f32),                       # (1, 1024) row for lane reduction
        "bf2": bf2.reshape(1, 1).astype(f32),
    }


# ------------------------------- forward wrapper -------------------------------
def net_forward(x_nchw, fused):
    """Net.forward; x is NCHW (N, 1, 12, 12) float32, returns (N, 1)."""
    n = x_nchw.shape[0]
    l = n * _IMG
    lpad = pl.cdiv(l, 128) * 128              # lane-tile aligned working width

    # conv1 im2col in the wrapper (Cin == 1): 9 tap-shifted copies of the flat
    # (n, y, x)-ordered input.  Only lanes that are valid conv positions are
    # ever consumed downstream, so the zero padding / cross-image bleed is inert.
    xflat = x_nchw.reshape(l)
    xpad = jnp.concatenate(
        [xflat, jnp.zeros((lpad - l + _SHIFTS[-1],), xflat.dtype)])
    xs = jnp.stack([xpad[s:s + lpad] for s in _SHIFTS], axis=0).astype(jnp.bfloat16)

    args = (xs, fused["w1"], fused["b1"], fused["wn"], fused["bn"],
            fused["w2"], fused["b2"], fused["wf1"], fused["bf1"],
            fused["wf2"], fused["bf2"])
    vmem = pl.BlockSpec(memory_space=pltpu.MemorySpace.VMEM)
    # TODO(synk): for large batches, add a grid over the batch axis with
    # dimension_semantics=("parallel",) (and an explicit vmem_limit_bytes) so
    # v7x's two TensorCores split the work; at batch=2 a grid only adds overhead.
    padded = pl.pallas_call(
        _fused_net_kernel,
        out_shape=jax.ShapeDtypeStruct((n, 128), jnp.float32),
        in_specs=[vmem] * len(args),
        out_specs=vmem,
        scratch_shapes=[pltpu.VMEM((RED_OUT, lpad), jnp.float32),   # final conv act
                        pltpu.VMEM((n, 128), jnp.float32)],         # fc1 input slab
    )(*args)
    return padded[:, :1]


# ------------------- parameters (deterministic, PyTorch fan-in init) ------------
def init_params(key):
    ks = jax.random.split(key, 5)

    def conv_init(k, cout, cin, kh, kw):
        fan_in = cin * kh * kw
        bound = 1.0 / jnp.sqrt(float(fan_in))
        kw_, kb_ = jax.random.split(k)
        w = jax.random.uniform(kw_, (cout, cin, kh, kw), jnp.float32, -bound, bound)
        b = jax.random.uniform(kb_, (cout,), jnp.float32, -bound, bound)
        return w, b

    def linear_init(k, out_f, in_f):
        bound = 1.0 / jnp.sqrt(float(in_f))
        kw_, kb_ = jax.random.split(k)
        w = jax.random.uniform(kw_, (out_f, in_f), jnp.float32, -bound, bound)
        b = jax.random.uniform(kb_, (out_f,), jnp.float32, -bound, bound)
        return w, b

    return {
        "conv1_red": conv_init(ks[0], RED_OUT, 1, RED_K, RED_K),
        "conv2_red": conv_init(ks[1], RED_OUT, NONRED_OUT, RED_K, RED_K),
        "conv_non":  conv_init(ks[2], NONRED_OUT, RED_OUT, NONRED_K, NONRED_K),
        "fc1":       linear_init(ks[3], 1024, RED_OUT * F_SIZE * F_SIZE),
        "fc2":       linear_init(ks[4], 1, 1024),
    }


# ------------------------- pure-JAX reference for sanity check ------------------
def ref_forward(x_nchw, params):
    def conv(x, w, b, s):
        y = jax.lax.conv_general_dilated(
            x, w, (s, s), "VALID", dimension_numbers=("NCHW", "OIHW", "NCHW"))
        return jax.nn.relu(y + b[None, :, None, None])

    w1, b1 = params["conv1_red"]
    wn, bn = params["conv_non"]
    w2, b2 = params["conv2_red"]
    h = conv(x_nchw, w1, b1, RED_S)
    h = conv(h, wn, bn, NONRED_S)
    h = conv(h, w2, b2, RED_S)
    h = conv(h, wn, bn, NONRED_S)
    h = conv(h, w2, b2, RED_S)
    h = conv(h, wn, bn, NONRED_S)
    h = conv(h, w2, b2, RED_S)
    h = h.reshape(h.shape[0], -1)
    wf1, bf1 = params["fc1"]
    h = jax.nn.relu(h @ wf1.T + bf1)
    wf2, bf2 = params["fc2"]
    h = jax.nn.relu(h @ wf2.T + bf2)
    return h


if __name__ == "__main__":
    key = jax.random.PRNGKey(0)
    kx, kp = jax.random.split(key)
    batch = 2
    x = jax.random.normal(kx, (batch, 1, IN_SPATIAL, IN_SPATIAL), jnp.float32)  # NCHW
    params = init_params(kp)
    fused = prepare_fused(params)             # one-time, batch-independent re-layout

    fwd = jax.jit(net_forward)
    out = fwd(x, fused)
    jax.block_until_ready(out)
    assert out.shape == (batch, 1), out.shape

    ref = ref_forward(x, params)
    # bf16 matmul operands (f32 accumulation) -> slightly looser tolerance than f32.
    assert jnp.allclose(out, ref, atol=3e-2, rtol=3e-2), (out, ref)

    print("KERNEL_OK")
</pallas_src>

<mosaic_0001>
module attributes {stable_mosaic.version = 11 : i64} {
  func.func @_fused_net_kernel(%arg0: memref<9x384xbf16, #tpu.memory_space<vmem>>, %arg1: memref<8x9xbf16, #tpu.memory_space<vmem>>, %arg2: memref<8x1xf32, #tpu.memory_space<vmem>>, %arg3: memref<6x8xbf16, #tpu.memory_space<vmem>>, %arg4: memref<6x1xf32, #tpu.memory_space<vmem>>, %arg5: memref<9x8x6xbf16, #tpu.memory_space<vmem>>, %arg6: memref<8x1xf32, #tpu.memory_space<vmem>>, %arg7: memref<128x1024xbf16, #tpu.memory_space<vmem>>, %arg8: memref<1x1024xf32, #tpu.memory_space<vmem>>, %arg9: memref<1x1024xf32, #tpu.memory_space<vmem>>, %arg10: memref<1x1xf32, #tpu.memory_space<vmem>>, %arg11: memref<2x128xf32, #tpu.memory_space<vmem>>, %arg12: memref<8x384xf32, #tpu.memory_space<vmem>>, %arg13: memref<2x128xf32, #tpu.memory_space<vmem>>) attributes {dimension_semantics = [], scalar_prefetch = 0 : i64, scratch_operands = 2 : i64, tpu.core_type = #tpu.core_type<tc>} {
    %c0 = arith.constant 0 : index
    %c0_0 = arith.constant 0 : index
    %0 = vector.load %arg1[%c0, %c0_0] : memref<8x9xbf16, #tpu.memory_space<vmem>>, vector<8x9xbf16>
    %c0_1 = arith.constant 0 : index
    %c0_2 = arith.constant 0 : index
    %1 = vector.load %arg0[%c0_1, %c0_2] : memref<9x384xbf16, #tpu.memory_space<vmem>>, vector<9x384xbf16>
    %cst = arith.constant dense<0.000000e+00> : vector<8x384xf32>
    %2 = tpu.matmul %0, %1, %cst {dimension_numbers = #tpu.dot_dimension_numbers<[1], [0], [0], [1], [0, 0, 1, 1], [], []>} : vector<8x9xbf16>, vector<9x384xbf16>, vector<8x384xf32> -> vector<8x384xf32>
    %c0_3 = arith.constant 0 : index
    %c0_4 = arith.constant 0 : index
    %3 = vector.load %arg2[%c0_3, %c0_4] : memref<8x1xf32, #tpu.memory_space<vmem>>, vector<8x1xf32>
    %4 = vector.broadcast %3 : vector<8x1xf32> to vector<8x384xf32>
    %5 = arith.addf %2, %4 : vector<8x384xf32>
    %cst_5 = arith.constant 0.000000e+00 : f32
    %6 = vector.broadcast %cst_5 : f32 to vector<8x384xf32>
    %7 = arith.maximumf %5, %6 : vector<8x384xf32>
    %c0_6 = arith.constant 0 : index
    %c0_7 = arith.constant 0 : index
    %8 = vector.load %arg3[%c0_6, %c0_7] : memref<6x8xbf16, #tpu.memory_space<vmem>>, vector<6x8xbf16>
    %9 = arith.truncf %7 : vector<8x384xf32> to vector<8x384xbf16>
    %cst_8 = arith.constant dense<0.000000e+00> : vector<6x384xf32>
    %10 = tpu.matmul %8, %9, %cst_8 {dimension_numbers = #tpu.dot_dimension_numbers<[1], [0], [0], [1], [0, 0, 1, 1], [], []>} : vector<6x8xbf16>, vector<8x384xbf16>, vector<6x384xf32> -> vector<6x384xf32>
    %c0_9 = arith.constant 0 : index
    %c0_10 = arith.constant 0 : index
    %11 = vector.load %arg4[%c0_9, %c0_10] : memref<6x1xf32, #tpu.memory_space<vmem>>, vector<6x1xf32>
    %12 = vector.broadcast %11 : vector<6x1xf32> to vector<6x384xf32>
    %13 = arith.addf %10, %12 : vector<6x384xf32>
    %cst_11 = arith.constant 0.000000e+00 : f32
    %14 = vector.broadcast %cst_11 : f32 to vector<6x384xf32>
    %15 = arith.maximumf %13, %14 : vector<6x384xf32>
    %c0_12 = arith.constant 0 : index
    %c0_13 = arith.constant 0 : index
    %c0_14 = arith.constant 0 : index
    %16 = vector.load %arg5[%c0_12, %c0_13, %c0_14] : memref<9x8x6xbf16, #tpu.memory_space<vmem>>, vector<1x8x6xbf16>
    %17 = vector.shape_cast %16 : vector<1x8x6xbf16> to vector<8x6xbf16>
    %18 = arith.truncf %15 : vector<6x384xf32> to vector<6x384xbf16>
    %cst_15 = arith.constant dense<0.000000e+00> : vector<8x384xf32>
    %19 = tpu.matmul %17, %18, %cst_15 {dimension_numbers = #tpu.dot_dimension_numbers<[1], [0], [0], [1], [0, 0, 1, 1], [], []>} : vector<8x6xbf16>, vector<6x384xbf16>, vector<8x384xf32> -> vector<8x384xf32>
    %c383_i32 = arith.constant 383 : i32
    %20 = tpu.dynamic_rotate %15 by %c383_i32 dim 1 : vector<6x384xf32>, i32 -> vector<6x384xf32>
    %c1 = arith.constant 1 : index
    %c0_16 = arith.constant 0 : index
    %c0_17 = arith.constant 0 : index
    %21 = vector.load %arg5[%c1, %c0_16, %c0_17] : memref<9x8x6xbf16, #tpu.memory_space<vmem>>, vector<1x8x6xbf16>
    %22 = vector.shape_cast %21 : vector<1x8x6xbf16> to vector<8x6xbf16>
    %23 = arith.truncf %20 : vector<6x384xf32> to vector<6x384xbf16>
    %cst_18 = arith.constant dense<0.000000e+00> : vector<8x384xf32>
    %24 = tpu.matmul %22, %23, %cst_18 {dimension_numbers = #tpu.dot_dimension_numbers<[1], [0], [0], [1], [0, 0, 1, 1], [], []>} : vector<8x6xbf16>, vector<6x384xbf16>, vector<8x384xf32> -> vector<8x384xf32>
    %25 = arith.addf %19, %24 : vector<8x384xf32>
    %c382_i32 = arith.constant 382 : i32
    %26 = tpu.dynamic_rotate %15 by %c382_i32 dim 1 : vector<6x384xf32>, i32 -> vector<6x384xf32>
    %c2 = arith.constant 2 : index
    %c0_19 = arith.constant 0 : index
    %c0_20 = arith.constant 0 : index
    %27 = vector.load %arg5[%c2, %c0_19, %c0_20] : memref<9x8x6xbf16, #tpu.memory_space<vmem>>, vector<1x8x6xbf16>
    %28 = vector.shape_cast %27 : vector<1x8x6xbf16> to vector<8x6xbf16>
    %29 = arith.truncf %26 : vector<6x384xf32> to vector<6x384xbf16>
    %cst_21 = arith.constant dense<0.000000e+00> : vector<8x384xf32>
    %30 = tpu.matmul %28, %29, %cst_21 {dimension_numbers = #tpu.dot_dimension_numbers<[1], [0], [0], [1], [0, 0, 1, 1], [], []>} : vector<8x6xbf16>, vector<6x384xbf16>, vector<8x384xf32> -> vector<8x384xf32>
    %31 = arith.addf %25, %30 : vector<8x384xf32>
    %c372_i32 = arith.constant 372 : i32
    %32 = tpu.dynamic_rotate %15 by %c372_i32 dim 1 : vector<6x384xf32>, i32 -> vector<6x384xf32>
    %c3 = arith.constant 3 : index
    %c0_22 = arith.constant 0 : index
    %c0_23 = arith.constant 0 : index
    %33 = vector.load %arg5[%c3, %c0_22, %c0_23] : memref<9x8x6xbf16, #tpu.memory_space<vmem>>, vector<1x8x6xbf16>
    %34 = vector.shape_cast %33 : vector<1x8x6xbf16> to vector<8x6xbf16>
    %35 = arith.truncf %32 : vector<6x384xf32> to vector<6x384xbf16>
    %cst_24 = arith.constant dense<0.000000e+00> : vector<8x384xf32>
    %36 = tpu.matmul %34, %35, %cst_24 {dimension_numbers = #tpu.dot_dimension_numbers<[1], [0], [0], [1], [0, 0, 1, 1], [], []>} : vector<8x6xbf16>, vector<6x384xbf16>, vector<8x384xf32> -> vector<8x384xf32>
    %37 = arith.addf %31, %36 : vector<8x384xf32>
    %c371_i32 = arith.constant 371 : i32
    %38 = tpu.dynamic_rotate %15 by %c371_i32 dim 1 : vector<6x384xf32>, i32 -> vector<6x384xf32>
    %c4 = arith.constant 4 : index
    %c0_25 = arith.constant 0 : index
    %c0_26 = arith.constant 0 : index
    %39 = vector.load %arg5[%c4, %c0_25, %c0_26] : memref<9x8x6xbf16, #tpu.memory_space<vmem>>, vector<1x8x6xbf16>
    %40 = vector.shape_cast %39 : vector<1x8x6xbf16> to vector<8x6xbf16>
    %41 = arith.truncf %38 : vector<6x384xf32> to vector<6x384xbf16>
    %cst_27 = arith.constant dense<0.000000e+00> : vector<8x384xf32>
    %42 = tpu.matmul %40, %41, %cst_27 {dimension_numbers = #tpu.dot_dimension_numbers<[1], [0], [0], [1], [0, 0, 1, 1], [], []>} : vector<8x6xbf16>, vector<6x384xbf16>, vector<8x384xf32> -> vector<8x384xf32>
    %43 = arith.addf %37, %42 : vector<8x384xf32>
    %c370_i32 = arith.constant 370 : i32
    %44 = tpu.dynamic_rotate %15 by %c370_i32 dim 1 : vector<6x384xf32>, i32 -> vector<6x384xf32>
    %c5 = arith.constant 5 : index
    %c0_28 = arith.constant 0 : index
    %c0_29 = arith.constant 0 : index
    %45 = vector.load %arg5[%c5, %c0_28, %c0_29] : memref<9x8x6xbf16, #tpu.memory_space<vmem>>, vector<1x8x6xbf16>
    %46 = vector.shape_cast %45 : vector<1x8x6xbf16> to vector<8x6xbf16>
    %47 = arith.truncf %44 : vector<6x384xf32> to vector<6x384xbf16>
    %cst_30 = arith.constant dense<0.000000e+00> : vector<8x384xf32>
    %48 = tpu.matmul %46, %47, %cst_30 {dimension_numbers = #tpu.dot_dimension_numbers<[1], [0], [0], [1], [0, 0, 1, 1], [], []>} : vector<8x6xbf16>, vector<6x384xbf16>, vector<8x384xf32> -> vector<8x384xf32>
    %49 = arith.addf %43, %48 : vector<8x384xf32>
    %c360_i32 = arith.constant 360 : i32
    %50 = tpu.dynamic_rotate %15 by %c360_i32 dim 1 : vector<6x384xf32>, i32 -> vector<6x384xf32>
    %c6 = arith.constant 6 : index
    %c0_31 = arith.constant 0 : index
    %c0_32 = arith.constant 0 : index
    %51 = vector.load %arg5[%c6, %c0_31, %c0_32] : memref<9x8x6xbf16, #tpu.memory_space<vmem>>, vector<1x8x6xbf16>
    %52 = vector.shape_cast %51 : vector<1x8x6xbf16> to vector<8x6xbf16>
    %53 = arith.truncf %50 : vector<6x384xf32> to vector<6x384xbf16>
    %cst_33 = arith.constant dense<0.000000e+00> : vector<8x384xf32>
    %54 = tpu.matmul %52, %53, %cst_33 {dimension_numbers = #tpu.dot_dimension_numbers<[1], [0], [0], [1], [0, 0, 1, 1], [], []>} : vector<8x6xbf16>, vector<6x384xbf16>, vector<8x384xf32> -> vector<8x384xf32>
    %55 = arith.addf %49, %54 : vector<8x384xf32>
    %c359_i32 = arith.constant 359 : i32
    %56 = tpu.dynamic_rotate %15 by %c359_i32 dim 1 : vector<6x384xf32>, i32 -> vector<6x384xf32>
    %c7 = arith.constant 7 : index
    %c0_34 = arith.constant 0 : index
    %c0_35 = arith.constant 0 : index
    %57 = vector.load %arg5[%c7, %c0_34, %c0_35] : memref<9x8x6xbf16, #tpu.memory_space<vmem>>, vector<1x8x6xbf16>
    %58 = vector.shape_cast %57 : vector<1x8x6xbf16> to vector<8x6xbf16>
    %59 = arith.truncf %56 : vector<6x384xf32> to vector<6x384xbf16>
    %cst_36 = arith.constant dense<0.000000e+00> : vector<8x384xf32>
    %60 = tpu.matmul %58, %59, %cst_36 {dimension_numbers = #tpu.dot_dimension_numbers<[1], [0], [0], [1], [0, 0, 1, 1], [], []>} : vector<8x6xbf16>, vector<6x384xbf16>, vector<8x384xf32> -> vector<8x384xf32>
    %61 = arith.addf %55, %60 : vector<8x384xf32>
    %c358_i32 = arith.constant 358 : i32
    %62 = tpu.dynamic_rotate %15 by %c358_i32 dim 1 : vector<6x384xf32>, i32 -> vector<6x384xf32>
    %c8 = arith.constant 8 : index
    %c0_37 = arith.constant 0 : index
    %c0_38 = arith.constant 0 : index
    %63 = vector.load %arg5[%c8, %c0_37, %c0_38] : memref<9x8x6xbf16, #tpu.memory_space<vmem>>, vector<1x8x6xbf16>
    %64 = vector.shape_cast %63 : vector<1x8x6xbf16> to vector<8x6xbf16>
    %65 = arith.truncf %62 : vector<6x384xf32> to vector<6x384xbf16>
    %cst_39 = arith.constant dense<0.000000e+00> : vector<8x384xf32>
    %66 = tpu.matmul %64, %65, %cst_39 {dimension_numbers = #tpu.dot_dimension_numbers<[1], [0], [0], [1], [0, 0, 1, 1], [], []>} : vector<8x6xbf16>, vector<6x384xbf16>, vector<8x384xf32> -> vector<8x384xf32>
    %67 = arith.addf %61, %66 : vector<8x384xf32>
    %c0_40 = arith.constant 0 : index
    %c0_41 = arith.constant 0 : index
    %68 = vector.load %arg6[%c0_40, %c0_41] : memref<8x1xf32, #tpu.memory_space<vmem>>, vector<8x1xf32>
    %69 = vector.broadcast %68 : vector<8x1xf32> to vector<8x384xf32>
    %70 = arith.addf %67, %69 : vector<8x384xf32>
    %cst_42 = arith.constant 0.000000e+00 : f32
    %71 = vector.broadcast %cst_42 : f32 to vector<8x384xf32>
    %72 = arith.maximumf %70, %71 : vector<8x384xf32>
    %c0_43 = arith.constant 0 : index
    %c0_44 = arith.constant 0 : index
    %73 = vector.load %arg3[%c0_43, %c0_44] : memref<6x8xbf16, #tpu.memory_space<vmem>>, vector<6x8xbf16>
    %74 = arith.truncf %72 : vector<8x384xf32> to vector<8x384xbf16>
    %cst_45 = arith.constant dense<0.000000e+00> : vector<6x384xf32>
    %75 = tpu.matmul %73, %74, %cst_45 {dimension_numbers = #tpu.dot_dimension_numbers<[1], [0], [0], [1], [0, 0, 1, 1], [], []>} : vector<6x8xbf16>, vector<8x384xbf16>, vector<6x384xf32> -> vector<6x384xf32>
    %c0_46 = arith.constant 0 : index
    %c0_47 = arith.constant 0 : index
    %76 = vector.load %arg4[%c0_46, %c0_47] : memref<6x1xf32, #tpu.memory_space<vmem>>, vector<6x1xf32>
    %77 = vector.broadcast %76 : vector<6x1xf32> to vector<6x384xf32>
    %78 = arith.addf %75, %77 : vector<6x384xf32>
    %cst_48 = arith.constant 0.000000e+00 : f32
    %79 = vector.broadcast %cst_48 : f32 to vector<6x384xf32>
    %80 = arith.maximumf %78, %79 : vector<6x384xf32>
    %c0_49 = arith.constant 0 : index
    %c0_50 = arith.constant 0 : index
    %c0_51 = arith.constant 0 : index
    %81 = vector.load %arg5[%c0_49, %c0_50, %c0_51] : memref<9x8x6xbf16, #tpu.memory_space<vmem>>, vector<1x8x6xbf16>
    %82 = vector.shape_cast %81 : vector<1x8x6xbf16> to vector<8x6xbf16>
    %83 = arith.truncf %80 : vector<6x384xf32> to vector<6x384xbf16>
    %cst_52 = arith.constant dense<0.000000e+00> : vector<8x384xf32>
    %84 = tpu.matmul %82, %83, %cst_52 {dimension_numbers = #tpu.dot_dimension_numbers<[1], [0], [0], [1], [0, 0, 1, 1], [], []>} : vector<8x6xbf16>, vector<6x384xbf16>, vector<8x384xf32> -> vector<8x384xf32>
    %c383_i32_53 = arith.constant 383 : i32
    %85 = tpu.dynamic_rotate %80 by %c383_i32_53 dim 1 : vector<6x384xf32>, i32 -> vector<6x384xf32>
    %c1_54 = arith.constant 1 : index
    %c0_55 = arith.constant 0 : index
    %c0_56 = arith.constant 0 : index
    %86 = vector.load %arg5[%c1_54, %c0_55, %c0_56] : memref<9x8x6xbf16, #tpu.memory_space<vmem>>, vector<1x8x6xbf16>
    %87 = vector.shape_cast %86 : vector<1x8x6xbf16> to vector<8x6xbf16>
    %88 = arith.truncf %85 : vector<6x384xf32> to vector<6x384xbf16>
    %cst_57 = arith.constant dense<0.000000e+00> : vector<8x384xf32>
    %89 = tpu.matmul %87, %88, %cst_57 {dimension_numbers = #tpu.dot_dimension_numbers<[1], [0], [0], [1], [0, 0, 1, 1], [], []>} : vector<8x6xbf16>, vector<6x384xbf16>, vector<8x384xf32> -> vector<8x384xf32>
    %90 = arith.addf %84, %89 : vector<8x384xf32>
    %c382_i32_58 = arith.constant 382 : i32
    %91 = tpu.dynamic_rotate %80 by %c382_i32_58 dim 1 : vector<6x384xf32>, i32 -> vector<6x384xf32>
    %c2_59 = arith.constant 2 : index
    %c0_60 = arith.constant 0 : index
    %c0_61 = arith.constant 0 : index
    %92 = vector.load %arg5[%c2_59, %c0_60, %c0_61] : memref<9x8x6xbf16, #tpu.memory_space<vmem>>, vector<1x8x6xbf16>
    %93 = vector.shape_cast %92 : vector<1x8x6xbf16> to vector<8x6xbf16>
    %94 = arith.truncf %91 : vector<6x384xf32> to vector<6x384xbf16>
    %cst_62 = arith.constant dense<0.000000e+00> : vector<8x384xf32>
    %95 = tpu.matmul %93, %94, %cst_62 {dimension_numbers = #tpu.dot_dimension_numbers<[1], [0], [0], [1], [0, 0, 1, 1], [], []>} : vector<8x6xbf16>, vector<6x384xbf16>, vector<8x384xf32> -> vector<8x384xf32>
    %96 = arith.addf %90, %95 : vector<8x384xf32>
    %c372_i32_63 = arith.constant 372 : i32
    %97 = tpu.dynamic_rotate %80 by %c372_i32_63 dim 1 : vector<6x384xf32>, i32 -> vector<6x384xf32>
    %c3_64 = arith.constant 3 : index
    %c0_65 = arith.constant 0 : index
    %c0_66 = arith.constant 0 : index
    %98 = vector.load %arg5[%c3_64, %c0_65, %c0_66] : memref<9x8x6xbf16, #tpu.memory_space<vmem>>, vector<1x8x6xbf16>
    %99 = vector.shape_cast %98 : vector<1x8x6xbf16> to vector<8x6xbf16>
    %100 = arith.truncf %97 : vector<6x384xf32> to vector<6x384xbf16>
    %cst_67 = arith.constant dense<0.000000e+00> : vector<8x384xf32>
    %101 = tpu.matmul %99, %100, %cst_67 {dimension_numbers = #tpu.dot_dimension_numbers<[1], [0], [0], [1], [0, 0, 1, 1], [], []>} : vector<8x6xbf16>, vector<6x384xbf16>, vector<8x384xf32> -> vector<8x384xf32>
    %102 = arith.addf %96, %101 : vector<8x384xf32>
    %c371_i32_68 = arith.constant 371 : i32
    %103 = tpu.dynamic_rotate %80 by %c371_i32_68 dim 1 : vector<6x384xf32>, i32 -> vector<6x384xf32>
    %c4_69 = arith.constant 4 : index
    %c0_70 = arith.constant 0 : index
    %c0_71 = arith.constant 0 : index
    %104 = vector.load %arg5[%c4_69, %c0_70, %c0_71] : memref<9x8x6xbf16, #tpu.memory_space<vmem>>, vector<1x8x6xbf16>
    %105 = vector.shape_cast %104 : vector<1x8x6xbf16> to vector<8x6xbf16>
    %106 = arith.truncf %103 : vector<6x384xf32> to vector<6x384xbf16>
    %cst_72 = arith.constant dense<0.000000e+00> : vector<8x384xf32>
    %107 = tpu.matmul %105, %106, %cst_72 {dimension_numbers = #tpu.dot_dimension_numbers<[1], [0], [0], [1], [0, 0, 1, 1], [], []>} : vector<8x6xbf16>, vector<6x384xbf16>, vector<8x384xf32> -> vector<8x384xf32>
    %108 = arith.addf %102, %107 : vector<8x384xf32>
    %c370_i32_73 = arith.constant 370 : i32
    %109 = tpu.dynamic_rotate %80 by %c370_i32_73 dim 1 : vector<6x384xf32>, i32 -> vector<6x384xf32>
    %c5_74 = arith.constant 5 : index
    %c0_75 = arith.constant 0 : index
    %c0_76 = arith.constant 0 : index
    %110 = vector.load %arg5[%c5_74, %c0_75, %c0_76] : memref<9x8x6xbf16, #tpu.memory_space<vmem>>, vector<1x8x6xbf16>
    %111 = vector.shape_cast %110 : vector<1x8x6xbf16> to vector<8x6xbf16>
    %112 = arith.truncf %109 : vector<6x384xf32> to vector<6x384xbf16>
    %cst_77 = arith.constant dense<0.000000e+00> : vector<8x384xf32>
    %113 = tpu.matmul %111, %112, %cst_77 {dimension_numbers = #tpu.dot_dimension_numbers<[1], [0], [0], [1], [0, 0, 1, 1], [], []>} : vector<8x6xbf16>, vector<6x384xbf16>, vector<8x384xf32> -> vector<8x384xf32>
    %114 = arith.addf %108, %113 : vector<8x384xf32>
    %c360_i32_78 = arith.constant 360 : i32
    %115 = tpu.dynamic_rotate %80 by %c360_i32_78 dim 1 : vector<6x384xf32>, i32 -> vector<6x384xf32>
    %c6_79 = arith.constant 6 : index
    %c0_80 = arith.constant 0 : index
    %c0_81 = arith.constant 0 : index
    %116 = vector.load %arg5[%c6_79, %c0_80, %c0_81] : memref<9x8x6xbf16, #tpu.memory_space<vmem>>, vector<1x8x6xbf16>
    %117 = vector.shape_cast %116 : vector<1x8x6xbf16> to vector<8x6xbf16>
    %118 = arith.truncf %115 : vector<6x384xf32> to vector<6x384xbf16>
    %cst_82 = arith.constant dense<0.000000e+00> : vector<8x384xf32>
    %119 = tpu.matmul %117, %118, %cst_82 {dimension_numbers = #tpu.dot_dimension_numbers<[1], [0], [0], [1], [0, 0, 1, 1], [], []>} : vector<8x6xbf16>, vector<6x384xbf16>, vector<8x384xf32> -> vector<8x384xf32>
    %120 = arith.addf %114, %119 : vector<8x384xf32>
    %c359_i32_83 = arith.constant 359 : i32
    %121 = tpu.dynamic_rotate %80 by %c359_i32_83 dim 1 : vector<6x384xf32>, i32 -> vector<6x384xf32>
    %c7_84 = arith.constant 7 : index
    %c0_85 = arith.constant 0 : index
    %c0_86 = arith.constant 0 : index
    %122 = vector.load %arg5[%c7_84, %c0_85, %c0_86] : memref<9x8x6xbf16, #tpu.memory_space<vmem>>, vector<1x8x6xbf16>
    %123 = vector.shape_cast %122 : vector<1x8x6xbf16> to vector<8x6xbf16>
    %124 = arith.truncf %121 : vector<6x384xf32> to vector<6x384xbf16>
    %cst_87 = arith.constant dense<0.000000e+00> : vector<8x384xf32>
    %125 = tpu.matmul %123, %124, %cst_87 {dimension_numbers = #tpu.dot_dimension_numbers<[1], [0], [0], [1], [0, 0, 1, 1], [], []>} : vector<8x6xbf16>, vector<6x384xbf16>, vector<8x384xf32> -> vector<8x384xf32>
    %126 = arith.addf %120, %125 : vector<8x384xf32>
    %c358_i32_88 = arith.constant 358 : i32
    %127 = tpu.dynamic_rotate %80 by %c358_i32_88 dim 1 : vector<6x384xf32>, i32 -> vector<6x384xf32>
    %c8_89 = arith.constant 8 : index
    %c0_90 = arith.constant 0 : index
    %c0_91 = arith.constant 0 : index
    %128 = vector.load %arg5[%c8_89, %c0_90, %c0_91] : memref<9x8x6xbf16, #tpu.memory_space<vmem>>, vector<1x8x6xbf16>
    %129 = vector.shape_cast %128 : vector<1x8x6xbf16> to vector<8x6xbf16>
    %130 = arith.truncf %127 : vector<6x384xf32> to vector<6x384xbf16>
    %cst_92 = arith.constant dense<0.000000e+00> : vector<8x384xf32>
    %131 = tpu.matmul %129, %130, %cst_92 {dimension_numbers = #tpu.dot_dimension_numbers<[1], [0], [0], [1], [0, 0, 1, 1], [], []>} : vector<8x6xbf16>, vector<6x384xbf16>, vector<8x384xf32> -> vector<8x384xf32>
    %132 = arith.addf %126, %131 : vector<8x384xf32>
    %c0_93 = arith.constant 0 : index
    %c0_94 = arith.constant 0 : index
    %133 = vector.load %arg6[%c0_93, %c0_94] : memref<8x1xf32, #tpu.memory_space<vmem>>, vector<8x1xf32>
    %134 = vector.broadcast %133 : vector<8x1xf32> to vector<8x384xf32>
    %135 = arith.addf %132, %134 : vector<8x384xf32>
    %cst_95 = arith.constant 0.000000e+00 : f32
    %136 = vector.broadcast %cst_95 : f32 to vector<8x384xf32>
    %137 = arith.maximumf %135, %136 : vector<8x384xf32>
    %c0_96 = arith.constant 0 : index
    %c0_97 = arith.constant 0 : index
    %138 = vector.load %arg3[%c0_96, %c0_97] : memref<6x8xbf16, #tpu.memory_space<vmem>>, vector<6x8xbf16>
    %139 = arith.truncf %137 : vector<8x384xf32> to vector<8x384xbf16>
    %cst_98 = arith.constant dense<0.000000e+00> : vector<6x384xf32>
    %140 = tpu.matmul %138, %139, %cst_98 {dimension_numbers = #tpu.dot_dimension_numbers<[1], [0], [0], [1], [0, 0, 1, 1], [], []>} : vector<6x8xbf16>, vector<8x384xbf16>, vector<6x384xf32> -> vector<6x384xf32>
    %c0_99 = arith.constant 0 : index
    %c0_100 = arith.constant 0 : index
    %141 = vector.load %arg4[%c0_99, %c0_100] : memref<6x1xf32, #tpu.memory_space<vmem>>, vector<6x1xf32>
    %142 = vector.broadcast %141 : vector<6x1xf32> to vector<6x384xf32>
    %143 = arith.addf %140, %142 : vector<6x384xf32>
    %cst_101 = arith.constant 0.000000e+00 : f32
    %144 = vector.broadcast %cst_101 : f32 to vector<6x384xf32>
    %145 = arith.maximumf %143, %144 : vector<6x384xf32>
    %c0_102 = arith.constant 0 : index
    %c0_103 = arith.constant 0 : index
    %c0_104 = arith.constant 0 : index
    %146 = vector.load %arg5[%c0_102, %c0_103, %c0_104] : memref<9x8x6xbf16, #tpu.memory_space<vmem>>, vector<1x8x6xbf16>
    %147 = vector.shape_cast %146 : vector<1x8x6xbf16> to vector<8x6xbf16>
    %148 = arith.truncf %145 : vector<6x384xf32> to vector<6x384xbf16>
    %cst_105 = arith.constant dense<0.000000e+00> : vector<8x384xf32>
    %149 = tpu.matmul %147, %148, %cst_105 {dimension_numbers = #tpu.dot_dimension_numbers<[1], [0], [0], [1], [0, 0, 1, 1], [], []>} : vector<8x6xbf16>, vector<6x384xbf16>, vector<8x384xf32> -> vector<8x384xf32>
    %c383_i32_106 = arith.constant 383 : i32
    %150 = tpu.dynamic_rotate %145 by %c383_i32_106 dim 1 : vector<6x384xf32>, i32 -> vector<6x384xf32>
    %c1_107 = arith.constant 1 : index
    %c0_108 = arith.constant 0 : index
    %c0_109 = arith.constant 0 : index
    %151 = vector.load %arg5[%c1_107, %c0_108, %c0_109] : memref<9x8x6xbf16, #tpu.memory_space<vmem>>, vector<1x8x6xbf16>
    %152 = vector.shape_cast %151 : vector<1x8x6xbf16> to vector<8x6xbf16>
    %153 = arith.truncf %150 : vector<6x384xf32> to vector<6x384xbf16>
    %cst_110 = arith.constant dense<0.000000e+00> : vector<8x384xf32>
    %154 = tpu.matmul %152, %153, %cst_110 {dimension_numbers = #tpu.dot_dimension_numbers<[1], [0], [0], [1], [0, 0, 1, 1], [], []>} : vector<8x6xbf16>, vector<6x384xbf16>, vector<8x384xf32> -> vector<8x384xf32>
    %155 = arith.addf %149, %154 : vector<8x384xf32>
    %c382_i32_111 = arith.constant 382 : i32
    %156 = tpu.dynamic_rotate %145 by %c382_i32_111 dim 1 : vector<6x384xf32>, i32 -> vector<6x384xf32>
    %c2_112 = arith.constant 2 : index
    %c0_113 = arith.constant 0 : index
    %c0_114 = arith.constant 0 : index
    %157 = vector.load %arg5[%c2_112, %c0_113, %c0_114] : memref<9x8x6xbf16, #tpu.memory_space<vmem>>, vector<1x8x6xbf16>
    %158 = vector.shape_cast %157 : vector<1x8x6xbf16> to vector<8x6xbf16>
    %159 = arith.truncf %156 : vector<6x384xf32> to vector<6x384xbf16>
    %cst_115 = arith.constant dense<0.000000e+00> : vector<8x384xf32>
    %160 = tpu.matmul %158, %159, %cst_115 {dimension_numbers = #tpu.dot_dimension_numbers<[1], [0], [0], [1], [0, 0, 1, 1], [], []>} : vector<8x6xbf16>, vector<6x384xbf16>, vector<8x384xf32> -> vector<8x384xf32>
    %161 = arith.addf %155, %160 : vector<8x384xf32>
    %c372_i32_116 = arith.constant 372 : i32
    %162 = tpu.dynamic_rotate %145 by %c372_i32_116 dim 1 : vector<6x384xf32>, i32 -> vector<6x384xf32>
    %c3_117 = arith.constant 3 : index
    %c0_118 = arith.constant 0 : index
    %c0_119 = arith.constant 0 : index
    %163 = vector.load %arg5[%c3_117, %c0_118, %c0_119] : memref<9x8x6xbf16, #tpu.memory_space<vmem>>, vector<1x8x6xbf16>
    %164 = vector.shape_cast %163 : vector<1x8x6xbf16> to vector<8x6xbf16>
    %165 = arith.truncf %162 : vector<6x384xf32> to vector<6x384xbf16>
    %cst_120 = arith.constant dense<0.000000e+00> : vector<8x384xf32>
    %166 = tpu.matmul %164, %165, %cst_120 {dimension_numbers = #tpu.dot_dimension_numbers<[1], [0], [0], [1], [0, 0, 1, 1], [], []>} : vector<8x6xbf16>, vector<6x384xbf16>, vector<8x384xf32> -> vector<8x384xf32>
    %167 = arith.addf %161, %166 : vector<8x384xf32>
    %c371_i32_121 = arith.constant 371 : i32
    %168 = tpu.dynamic_rotate %145 by %c371_i32_121 dim 1 : vector<6x384xf32>, i32 -> vector<6x384xf32>
    %c4_122 = arith.constant 4 : index
    %c0_123 = arith.constant 0 : index
    %c0_124 = arith.constant 0 : index
    %169 = vector.load %arg5[%c4_122, %c0_123, %c0_124] : memref<9x8x6xbf16, #tpu.memory_space<vmem>>, vector<1x8x6xbf16>
    %170 = vector.shape_cast %169 : vector<1x8x6xbf16> to vector<8x6xbf16>
    %171 = arith.truncf %168 : vector<6x384xf32> to vector<6x384xbf16>
    %cst_125 = arith.constant dense<0.000000e+00> : vector<8x384xf32>
    %172 = tpu.matmul %170, %171, %cst_125 {dimension_numbers = #tpu.dot_dimension_numbers<[1], [0], [0], [1], [0, 0, 1, 1], [], []>} : vector<8x6xbf16>, vector<6x384xbf16>, vector<8x384xf32> -> vector<8x384xf32>
    %173 = arith.addf %167, %172 : vector<8x384xf32>
    %c370_i32_126 = arith.constant 370 : i32
    %174 = tpu.dynamic_rotate %145 by %c370_i32_126 dim 1 : vector<6x384xf32>, i32 -> vector<6x384xf32>
    %c5_127 = arith.constant 5 : index
    %c0_128 = arith.constant 0 : index
    %c0_129 = arith.constant 0 : index
    %175 = vector.load %arg5[%c5_127, %c0_128, %c0_129] : memref<9x8x6xbf16, #tpu.memory_space<vmem>>, vector<1x8x6xbf16>
    %176 = vector.shape_cast %175 : vector<1x8x6xbf16> to vector<8x6xbf16>
    %177 = arith.truncf %174 : vector<6x384xf32> to vector<6x384xbf16>
    %cst_130 = arith.constant dense<0.000000e+00> : vector<8x384xf32>
    %178 = tpu.matmul %176, %177, %cst_130 {dimension_numbers = #tpu.dot_dimension_numbers<[1], [0], [0], [1], [0, 0, 1, 1], [], []>} : vector<8x6xbf16>, vector<6x384xbf16>, vector<8x384xf32> -> vector<8x384xf32>
    %179 = arith.addf %173, %178 : vector<8x384xf32>
    %c360_i32_131 = arith.constant 360 : i32
    %180 = tpu.dynamic_rotate %145 by %c360_i32_131 dim 1 : vector<6x384xf32>, i32 -> vector<6x384xf32>
    %c6_132 = arith.constant 6 : index
    %c0_133 = arith.constant 0 : index
    %c0_134 = arith.constant 0 : index
    %181 = vector.load %arg5[%c6_132, %c0_133, %c0_134] : memref<9x8x6xbf16, #tpu.memory_space<vmem>>, vector<1x8x6xbf16>
    %182 = vector.shape_cast %181 : vector<1x8x6xbf16> to vector<8x6xbf16>
    %183 = arith.truncf %180 : vector<6x384xf32> to vector<6x384xbf16>
    %cst_135 = arith.constant dense<0.000000e+00> : vector<8x384xf32>
    %184 = tpu.matmul %182, %183, %cst_135 {dimension_numbers = #tpu.dot_dimension_numbers<[1], [0], [0], [1], [0, 0, 1, 1], [], []>} : vector<8x6xbf16>, vector<6x384xbf16>, vector<8x384xf32> -> vector<8x384xf32>
    %185 = arith.addf %179, %184 : vector<8x384xf32>
    %c359_i32_136 = arith.constant 359 : i32
    %186 = tpu.dynamic_rotate %145 by %c359_i32_136 dim 1 : vector<6x384xf32>, i32 -> vector<6x384xf32>
    %c7_137 = arith.constant 7 : index
    %c0_138 = arith.constant 0 : index
    %c0_139 = arith.constant 0 : index
    %187 = vector.load %arg5[%c7_137, %c0_138, %c0_139] : memref<9x8x6xbf16, #tpu.memory_space<vmem>>, vector<1x8x6xbf16>
    %188 = vector.shape_cast %187 : vector<1x8x6xbf16> to vector<8x6xbf16>
    %189 = arith.truncf %186 : vector<6x384xf32> to vector<6x384xbf16>
    %cst_140 = arith.constant dense<0.000000e+00> : vector<8x384xf32>
    %190 = tpu.matmul %188, %189, %cst_140 {dimension_numbers = #tpu.dot_dimension_numbers<[1], [0], [0], [1], [0, 0, 1, 1], [], []>} : vector<8x6xbf16>, vector<6x384xbf16>, vector<8x384xf32> -> vector<8x384xf32>
    %191 = arith.addf %185, %190 : vector<8x384xf32>
    %c358_i32_141 = arith.constant 358 : i32
    %192 = tpu.dynamic_rotate %145 by %c358_i32_141 dim 1 : vector<6x384xf32>, i32 -> vector<6x384xf32>
    %c8_142 = arith.constant 8 : index
    %c0_143 = arith.constant 0 : index
    %c0_144 = arith.constant 0 : index
    %193 = vector.load %arg5[%c8_142, %c0_143, %c0_144] : memref<9x8x6xbf16, #tpu.memory_space<vmem>>, vector<1x8x6xbf16>
    %194 = vector.shape_cast %193 : vector<1x8x6xbf16> to vector<8x6xbf16>
    %195 = arith.truncf %192 : vector<6x384xf32> to vector<6x384xbf16>
    %cst_145 = arith.constant dense<0.000000e+00> : vector<8x384xf32>
    %196 = tpu.matmul %194, %195, %cst_145 {dimension_numbers = #tpu.dot_dimension_numbers<[1], [0], [0], [1], [0, 0, 1, 1], [], []>} : vector<8x6xbf16>, vector<6x384xbf16>, vector<8x384xf32> -> vector<8x384xf32>
    %197 = arith.addf %191, %196 : vector<8x384xf32>
    %c0_146 = arith.constant 0 : index
    %c0_147 = arith.constant 0 : index
    %198 = vector.load %arg6[%c0_146, %c0_147] : memref<8x1xf32, #tpu.memory_space<vmem>>, vector<8x1xf32>
    %199 = vector.broadcast %198 : vector<8x1xf32> to vector<8x384xf32>
    %200 = arith.addf %197, %199 : vector<8x384xf32>
    %cst_148 = arith.constant 0.000000e+00 : f32
    %201 = vector.broadcast %cst_148 : f32 to vector<8x384xf32>
    %202 = arith.maximumf %200, %201 : vector<8x384xf32>
    %c0_149 = arith.constant 0 : index
    %c0_150 = arith.constant 0 : index
    %203 = vector.load %arg12[%c0_149, %c0_150] : memref<8x384xf32, #tpu.memory_space<vmem>>, vector<8x384xf32>
    tpu.vector_store %arg12[%c0_149, %c0_150], %202 {strides = array<i32>} : memref<8x384xf32, #tpu.memory_space<vmem>>, vector<8x384xf32>,
    %c0_151 = arith.constant 0 : index
    %c0_152 = arith.constant 0 : index
    %204 = vector.load %arg12[%c0_151, %c0_152] : memref<8x384xf32, #tpu.memory_space<vmem>>, vector<1x4xf32>
    %c0_153 = arith.constant 0 : index
    %c0_154 = arith.constant 0 : index
    %205 = vector.load %arg13[%c0_153, %c0_154] : memref<2x128xf32, #tpu.memory_space<vmem>>, vector<1x4xf32>
    tpu.vector_store %arg13[%c0_153, %c0_154], %204 {strides = array<i32>} : memref<2x128xf32, #tpu.memory_space<vmem>>, vector<1x4xf32>,
    %c0_155 = arith.constant 0 : index
    %c12 = arith.constant 12 : index
    %206 = vector.load %arg12[%c0_155, %c12] : memref<8x384xf32, #tpu.memory_space<vmem>>, vector<1x4xf32>
    %c0_156 = arith.constant 0 : index
    %c4_157 = arith.constant 4 : index
    %207 = vector.load %arg13[%c0_156, %c4_157] : memref<2x128xf32, #tpu.memory_space<vmem>>, vector<1x4xf32>
    tpu.vector_store %arg13[%c0_156, %c4_157], %206 {strides = array<i32>} : memref<2x128xf32, #tpu.memory_space<vmem>>, vector<1x4xf32>,
    %c0_158 = arith.constant 0 : index
    %c24 = arith.constant 24 : index
    %208 = vector.load %arg12[%c0_158, %c24] : memref<8x384xf32, #tpu.memory_space<vmem>>, vector<1x4xf32>
    %c0_159 = arith.constant 0 : index
    %c8_160 = arith.constant 8 : index
    %209 = vector.load %arg13[%c0_159, %c8_160] : memref<2x128xf32, #tpu.memory_space<vmem>>, vector<1x4xf32>
    tpu.vector_store %arg13[%c0_159, %c8_160], %208 {strides = array<i32>} : memref<2x128xf32, #tpu.memory_space<vmem>>, vector<1x4xf32>,
    %c0_161 = arith.constant 0 : index
    %c36 = arith.constant 36 : index
    %210 = vector.load %arg12[%c0_161, %c36] : memref<8x384xf32, #tpu.memory_space<vmem>>, vector<1x4xf32>
    %c0_162 = arith.constant 0 : index
    %c12_163 = arith.constant 12 : index
    %211 = vector.load %arg13[%c0_162, %c12_163] : memref<2x128xf32, #tpu.memory_space<vmem>>, vector<1x4xf32>
    tpu.vector_store %arg13[%c0_162, %c12_163], %210 {strides = array<i32>} : memref<2x128xf32, #tpu.memory_space<vmem>>, vector<1x4xf32>,
    %c1_164 = arith.constant 1 : index
    %c0_165 = arith.constant 0 : index
    %212 = vector.load %arg12[%c1_164, %c0_165] : memref<8x384xf32, #tpu.memory_space<vmem>>, vector<1x4xf32>
    %c0_166 = arith.constant 0 : index
    %c16 = arith.constant 16 : index
    %213 = vector.load %arg13[%c0_166, %c16] : memref<2x128xf32, #tpu.memory_space<vmem>>, vector<1x4xf32>
    tpu.vector_store %arg13[%c0_166, %c16], %212 {strides = array<i32>} : memref<2x128xf32, #tpu.memory_space<vmem>>, vector<1x4xf32>,
    %c1_167 = arith.constant 1 : index
    %c12_168 = arith.constant 12 : index
    %214 = vector.load %arg12[%c1_167, %c12_168] : memref<8x384xf32, #tpu.memory_space<vmem>>, vector<1x4xf32>
    %c0_169 = arith.constant 0 : index
    %c20 = arith.constant 20 : index
    %215 = vector.load %arg13[%c0_169, %c20] : memref<2x128xf32, #tpu.memory_space<vmem>>, vector<1x4xf32>
    tpu.vector_store %arg13[%c0_169, %c20], %214 {strides = array<i32>} : memref<2x128xf32, #tpu.memory_space<vmem>>, vector<1x4xf32>,
    %c1_170 = arith.constant 1 : index
    %c24_171 = arith.constant 24 : index
    %216 = vector.load %arg12[%c1_170, %c24_171] : memref<8x384xf32, #tpu.memory_space<vmem>>, vector<1x4xf32>
    %c0_172 = arith.constant 0 : index
    %c24_173 = arith.constant 24 : index
    %217 = vector.load %arg13[%c0_172, %c24_173] : memref<2x128xf32, #tpu.memory_space<vmem>>, vector<1x4xf32>
    tpu.vector_store %arg13[%c0_172, %c24_173], %216 {strides = array<i32>} : memref<2x128xf32, #tpu.memory_space<vmem>>, vector<1x4xf32>,
    %c1_174 = arith.constant 1 : index
    %c36_175 = arith.constant 36 : index
    %218 = vector.load %arg12[%c1_174, %c36_175] : memref<8x384xf32, #tpu.memory_space<vmem>>, vector<1x4xf32>
    %c0_176 = arith.constant 0 : index
    %c28 = arith.constant 28 : index
    %219 = vector.load %arg13[%c0_176, %c28] : memref<2x128xf32, #tpu.memory_space<vmem>>, vector<1x4xf32>
    tpu.vector_store %arg13[%c0_176, %c28], %218 {strides = array<i32>} : memref<2x128xf32, #tpu.memory_space<vmem>>, vector<1x4xf32>,
    %c2_177 = arith.constant 2 : index
    %c0_178 = arith.constant 0 : index
    %220 = vector.load %arg12[%c2_177, %c0_178] : memref<8x384xf32, #tpu.memory_space<vmem>>, vector<1x4xf32>
    %c0_179 = arith.constant 0 : index
    %c32 = arith.constant 32 : index
    %221 = vector.load %arg13[%c0_179, %c32] : memref<2x128xf32, #tpu.memory_space<vmem>>, vector<1x4xf32>
    tpu.vector_store %arg13[%c0_179, %c32], %220 {strides = array<i32>} : memref<2x128xf32, #tpu.memory_space<vmem>>, vector<1x4xf32>,
    %c2_180 = arith.constant 2 : index
    %c12_181 = arith.constant 12 : index
    %222 = vector.load %arg12[%c2_180, %c12_181] : memref<8x384xf32, #tpu.memory_space<vmem>>, vector<1x4xf32>
    %c0_182 = arith.constant 0 : index
    %c36_183 = arith.constant 36 : index
    %223 = vector.load %arg13[%c0_182, %c36_183] : memref<2x128xf32, #tpu.memory_space<vmem>>, vector<1x4xf32>
    tpu.vector_store %arg13[%c0_182, %c36_183], %222 {strides = array<i32>} : memref<2x128xf32, #tpu.memory_space<vmem>>, vector<1x4xf32>,
    %c2_184 = arith.constant 2 : index
    %c24_185 = arith.constant 24 : index
    %224 = vector.load %arg12[%c2_184, %c24_185] : memref<8x384xf32, #tpu.memory_space<vmem>>, vector<1x4xf32>
    %c0_186 = arith.constant 0 : index
    %c40 = arith.constant 40 : index
    %225 = vector.load %arg13[%c0_186, %c40] : memref<2x128xf32, #tpu.memory_space<vmem>>, vector<1x4xf32>
    tpu.vector_store %arg13[%c0_186, %c40], %224 {strides = array<i32>} : memref<2x128xf32, #tpu.memory_space<vmem>>, vector<1x4xf32>,
    %c2_187 = arith.constant 2 : index
    %c36_188 = arith.constant 36 : index
    %226 = vector.load %arg12[%c2_187, %c36_188] : memref<8x384xf32, #tpu.memory_space<vmem>>, vector<1x4xf32>
    %c0_189 = arith.constant 0 : index
    %c44 = arith.constant 44 : index
    %227 = vector.load %arg13[%c0_189, %c44] : memref<2x128xf32, #tpu.memory_space<vmem>>, vector<1x4xf32>
    tpu.vector_store %arg13[%c0_189, %c44], %226 {strides = array<i32>} : memref<2x128xf32, #tpu.memory_space<vmem>>, vector<1x4xf32>,
    %c3_190 = arith.constant 3 : index
    %c0_191 = arith.constant 0 : index
    %228 = vector.load %arg12[%c3_190, %c0_191] : memref<8x384xf32, #tpu.memory_space<vmem>>, vector<1x4xf32>
    %c0_192 = arith.constant 0 : index
    %c48 = arith.constant 48 : index
    %229 = vector.load %arg13[%c0_192, %c48] : memref<2x128xf32, #tpu.memory_space<vmem>>, vector<1x4xf32>
    tpu.vector_store %arg13[%c0_192, %c48], %228 {strides = array<i32>} : memref<2x128xf32, #tpu.memory_space<vmem>>, vector<1x4xf32>,
    %c3_193 = arith.constant 3 : index
    %c12_194 = arith.constant 12 : index
    %230 = vector.load %arg12[%c3_193, %c12_194] : memref<8x384xf32, #tpu.memory_space<vmem>>, vector<1x4xf32>
    %c0_195 = arith.constant 0 : index
    %c52 = arith.constant 52 : index
    %231 = vector.load %arg13[%c0_195, %c52] : memref<2x128xf32, #tpu.memory_space<vmem>>, vector<1x4xf32>
    tpu.vector_store %arg13[%c0_195, %c52], %230 {strides = array<i32>} : memref<2x128xf32, #tpu.memory_space<vmem>>, vector<1x4xf32>,
    %c3_196 = arith.constant 3 : index
    %c24_197 = arith.constant 24 : index
    %232 = vector.load %arg12[%c3_196, %c24_197] : memref<8x384xf32, #tpu.memory_space<vmem>>, vector<1x4xf32>
    %c0_198 = arith.constant 0 : index
    %c56 = arith.constant 56 : index
    %233 = vector.load %arg13[%c0_198, %c56] : memref<2x128xf32, #tpu.memory_space<vmem>>, vector<1x4xf32>
    tpu.vector_store %arg13[%c0_198, %c56], %232 {strides = array<i32>} : memref<2x128xf32, #tpu.memory_space<vmem>>, vector<1x4xf32>,
    %c3_199 = arith.constant 3 : index
    %c36_200 = arith.constant 36 : index
    %234 = vector.load %arg12[%c3_199, %c36_200] : memref<8x384xf32, #tpu.memory_space<vmem>>, vector<1x4xf32>
    %c0_201 = arith.constant 0 : index
    %c60 = arith.constant 60 : index
    %235 = vector.load %arg13[%c0_201, %c60] : memref<2x128xf32, #tpu.memory_space<vmem>>, vector<1x4xf32>
    tpu.vector_store %arg13[%c0_201, %c60], %234 {strides = array<i32>} : memref<2x128xf32, #tpu.memory_space<vmem>>, vector<1x4xf32>,
    %c4_202 = arith.constant 4 : index
    %c0_203 = arith.constant 0 : index
    %236 = vector.load %arg12[%c4_202, %c0_203] : memref<8x384xf32, #tpu.memory_space<vmem>>, vector<1x4xf32>
    %c0_204 = arith.constant 0 : index
    %c64 = arith.constant 64 : index
    %237 = vector.load %arg13[%c0_204, %c64] : memref<2x128xf32, #tpu.memory_space<vmem>>, vector<1x4xf32>
    tpu.vector_store %arg13[%c0_204, %c64], %236 {strides = array<i32>} : memref<2x128xf32, #tpu.memory_space<vmem>>, vector<1x4xf32>,
    %c4_205 = arith.constant 4 : index
    %c12_206 = arith.constant 12 : index
    %238 = vector.load %arg12[%c4_205, %c12_206] : memref<8x384xf32, #tpu.memory_space<vmem>>, vector<1x4xf32>
    %c0_207 = arith.constant 0 : index
    %c68 = arith.constant 68 : index
    %239 = vector.load %arg13[%c0_207, %c68] : memref<2x128xf32, #tpu.memory_space<vmem>>, vector<1x4xf32>
    tpu.vector_store %arg13[%c0_207, %c68], %238 {strides = array<i32>} : memref<2x128xf32, #tpu.memory_space<vmem>>, vector<1x4xf32>,
    %c4_208 = arith.constant 4 : index
    %c24_209 = arith.constant 24 : index
    %240 = vector.load %arg12[%c4_208, %c24_209] : memref<8x384xf32, #tpu.memory_space<vmem>>, vector<1x4xf32>
    %c0_210 = arith.constant 0 : index
    %c72 = arith.constant 72 : index
    %241 = vector.load %arg13[%c0_210, %c72] : memref<2x128xf32, #tpu.memory_space<vmem>>, vector<1x4xf32>
    tpu.vector_store %arg13[%c0_210, %c72], %240 {strides = array<i32>} : memref<2x128xf32, #tpu.memory_space<vmem>>, vector<1x4xf32>,
    %c4_211 = arith.constant 4 : index
    %c36_212 = arith.constant 36 : index
    %242 = vector.load %arg12[%c4_211, %c36_212] : memref<8x384xf32, #tpu.memory_space<vmem>>, vector<1x4xf32>
    %c0_213 = arith.constant 0 : index
    %c76 = arith.constant 76 : index
    %243 = vector.load %arg13[%c0_213, %c76] : memref<2x128xf32, #tpu.memory_space<vmem>>, vector<1x4xf32>
    tpu.vector_store %arg13[%c0_213, %c76], %242 {strides = array<i32>} : memref<2x128xf32, #tpu.memory_space<vmem>>, vector<1x4xf32>,
    %c5_214 = arith.constant 5 : index
    %c0_215 = arith.constant 0 : index
    %244 = vector.load %arg12[%c5_214, %c0_215] : memref<8x384xf32, #tpu.memory_space<vmem>>, vector<1x4xf32>
    %c0_216 = arith.constant 0 : index
    %c80 = arith.constant 80 : index
    %245 = vector.load %arg13[%c0_216, %c80] : memref<2x128xf32, #tpu.memory_space<vmem>>, vector<1x4xf32>
    tpu.vector_store %arg13[%c0_216, %c80], %244 {strides = array<i32>} : memref<2x128xf32, #tpu.memory_space<vmem>>, vector<1x4xf32>,
    %c5_217 = arith.constant 5 : index
    %c12_218 = arith.constant 12 : index
    %246 = vector.load %arg12[%c5_217, %c12_218] : memref<8x384xf32, #tpu.memory_space<vmem>>, vector<1x4xf32>
    %c0_219 = arith.constant 0 : index
    %c84 = arith.constant 84 : index
    %247 = vector.load %arg13[%c0_219, %c84] : memref<2x128xf32, #tpu.memory_space<vmem>>, vector<1x4xf32>
    tpu.vector_store %arg13[%c0_219, %c84], %246 {strides = array<i32>} : memref<2x128xf32, #tpu.memory_space<vmem>>, vector<1x4xf32>,
    %c5_220 = arith.constant 5 : index
    %c24_221 = arith.constant 24 : index
    %248 = vector.load %arg12[%c5_220, %c24_221] : memref<8x384xf32, #tpu.memory_space<vmem>>, vector<1x4xf32>
    %c0_222 = arith.constant 0 : index
    %c88 = arith.constant 88 : index
    %249 = vector.load %arg13[%c0_222, %c88] : memref<2x128xf32, #tpu.memory_space<vmem>>, vector<1x4xf32>
    tpu.vector_store %arg13[%c0_222, %c88], %248 {strides = array<i32>} : memref<2x128xf32, #tpu.memory_space<vmem>>, vector<1x4xf32>,
    %c5_223 = arith.constant 5 : index
    %c36_224 = arith.constant 36 : index
    %250 = vector.load %arg12[%c5_223, %c36_224] : memref<8x384xf32, #tpu.memory_space<vmem>>, vector<1x4xf32>
    %c0_225 = arith.constant 0 : index
    %c92 = arith.constant 92 : index
    %251 = vector.load %arg13[%c0_225, %c92] : memref<2x128xf32, #tpu.memory_space<vmem>>, vector<1x4xf32>
    tpu.vector_store %arg13[%c0_225, %c92], %250 {strides = array<i32>} : memref<2x128xf32, #tpu.memory_space<vmem>>, vector<1x4xf32>,
    %c6_226 = arith.constant 6 : index
    %c0_227 = arith.constant 0 : index
    %252 = vector.load %arg12[%c6_226, %c0_227] : memref<8x384xf32, #tpu.memory_space<vmem>>, vector<1x4xf32>
    %c0_228 = arith.constant 0 : index
    %c96 = arith.constant 96 : index
    %253 = vector.load %arg13[%c0_228, %c96] : memref<2x128xf32, #tpu.memory_space<vmem>>, vector<1x4xf32>
    tpu.vector_store %arg13[%c0_228, %c96], %252 {strides = array<i32>} : memref<2x128xf32, #tpu.memory_space<vmem>>, vector<1x4xf32>,
    %c6_229 = arith.constant 6 : index
    %c12_230 = arith.constant 12 : index
    %254 = vector.load %arg12[%c6_229, %c12_230] : memref<8x384xf32, #tpu.memory_space<vmem>>, vector<1x4xf32>
    %c0_231 = arith.constant 0 : index
    %c100 = arith.constant 100 : index
    %255 = vector.load %arg13[%c0_231, %c100] : memref<2x128xf32, #tpu.memory_space<vmem>>, vector<1x4xf32>
    tpu.vector_store %arg13[%c0_231, %c100], %254 {strides = array<i32>} : memref<2x128xf32, #tpu.memory_space<vmem>>, vector<1x4xf32>,
    %c6_232 = arith.constant 6 : index
    %c24_233 = arith.constant 24 : index
    %256 = vector.load %arg12[%c6_232, %c24_233] : memref<8x384xf32, #tpu.memory_space<vmem>>, vector<1x4xf32>
    %c0_234 = arith.constant 0 : index
    %c104 = arith.constant 104 : index
    %257 = vector.load %arg13[%c0_234, %c104] : memref<2x128xf32, #tpu.memory_space<vmem>>, vector<1x4xf32>
    tpu.vector_store %arg13[%c0_234, %c104], %256 {strides = array<i32>} : memref<2x128xf32, #tpu.memory_space<vmem>>, vector<1x4xf32>,
    %c6_235 = arith.constant 6 : index
    %c36_236 = arith.constant 36 : index
    %258 = vector.load %arg12[%c6_235, %c36_236] : memref<8x384xf32, #tpu.memory_space<vmem>>, vector<1x4xf32>
    %c0_237 = arith.constant 0 : index
    %c108 = arith.constant 108 : index
    %259 = vector.load %arg13[%c0_237, %c108] : memref<2x128xf32, #tpu.memory_space<vmem>>, vector<1x4xf32>
    tpu.vector_store %arg13[%c0_237, %c108], %258 {strides = array<i32>} : memref<2x128xf32, #tpu.memory_space<vmem>>, vector<1x4xf32>,
    %c7_238 = arith.constant 7 : index
    %c0_239 = arith.constant 0 : index
    %260 = vector.load %arg12[%c7_238, %c0_239] : memref<8x384xf32, #tpu.memory_space<vmem>>, vector<1x4xf32>
    %c0_240 = arith.constant 0 : index
    %c112 = arith.constant 112 : index
    %261 = vector.load %arg13[%c0_240, %c112] : memref<2x128xf32, #tpu.memory_space<vmem>>, vector<1x4xf32>
    tpu.vector_store %arg13[%c0_240, %c112], %260 {strides = array<i32>} : memref<2x128xf32, #tpu.memory_space<vmem>>, vector<1x4xf32>,
    %c7_241 = arith.constant 7 : index
    %c12_242 = arith.constant 12 : index
    %262 = vector.load %arg12[%c7_241, %c12_242] : memref<8x384xf32, #tpu.memory_space<vmem>>, vector<1x4xf32>
    %c0_243 = arith.constant 0 : index
    %c116 = arith.constant 116 : index
    %263 = vector.load %arg13[%c0_243, %c116] : memref<2x128xf32, #tpu.memory_space<vmem>>, vector<1x4xf32>
    tpu.vector_store %arg13[%c0_243, %c116], %262 {strides = array<i32>} : memref<2x128xf32, #tpu.memory_space<vmem>>, vector<1x4xf32>,
    %c7_244 = arith.constant 7 : index
    %c24_245 = arith.constant 24 : index
    %264 = vector.load %arg12[%c7_244, %c24_245] : memref<8x384xf32, #tpu.memory_space<vmem>>, vector<1x4xf32>
    %c0_246 = arith.constant 0 : index
    %c120 = arith.constant 120 : index
    %265 = vector.load %arg13[%c0_246, %c120] : memref<2x128xf32, #tpu.memory_space<vmem>>, vector<1x4xf32>
    tpu.vector_store %arg13[%c0_246, %c120], %264 {strides = array<i32>} : memref<2x128xf32, #tpu.memory_space<vmem>>, vector<1x4xf32>,
    %c7_247 = arith.constant 7 : index
    %c36_248 = arith.constant 36 : index
    %266 = vector.load %arg12[%c7_247, %c36_248] : memref<8x384xf32, #tpu.memory_space<vmem>>, vector<1x4xf32>
    %c0_249 = arith.constant 0 : index
    %c124 = arith.constant 124 : index
    %267 = vector.load %arg13[%c0_249, %c124] : memref<2x128xf32, #tpu.memory_space<vmem>>, vector<1x4xf32>
    tpu.vector_store %arg13[%c0_249, %c124], %266 {strides = array<i32>} : memref<2x128xf32, #tpu.memory_space<vmem>>, vector<1x4xf32>,
    %c0_250 = arith.constant 0 : index
    %c144 = arith.constant 144 : index
    %268 = vector.load %arg12[%c0_250, %c144] : memref<8x384xf32, #tpu.memory_space<vmem>>, vector<1x4xf32>
    %c1_251 = arith.constant 1 : index
    %c0_252 = arith.constant 0 : index
    %269 = vector.load %arg13[%c1_251, %c0_252] : memref<2x128xf32, #tpu.memory_space<vmem>>, vector<1x4xf32>
    tpu.vector_store %arg13[%c1_251, %c0_252], %268 {strides = array<i32>} : memref<2x128xf32, #tpu.memory_space<vmem>>, vector<1x4xf32>,
    %c0_253 = arith.constant 0 : index
    %c156 = arith.constant 156 : index
    %270 = vector.load %arg12[%c0_253, %c156] : memref<8x384xf32, #tpu.memory_space<vmem>>, vector<1x4xf32>
    %c1_254 = arith.constant 1 : index
    %c4_255 = arith.constant 4 : index
    %271 = vector.load %arg13[%c1_254, %c4_255] : memref<2x128xf32, #tpu.memory_space<vmem>>, vector<1x4xf32>
    tpu.vector_store %arg13[%c1_254, %c4_255], %270 {strides = array<i32>} : memref<2x128xf32, #tpu.memory_space<vmem>>, vector<1x4xf32>,
    %c0_256 = arith.constant 0 : index
    %c168 = arith.constant 168 : index
    %272 = vector.load %arg12[%c0_256, %c168] : memref<8x384xf32, #tpu.memory_space<vmem>>, vector<1x4xf32>
    %c1_257 = arith.constant 1 : index
    %c8_258 = arith.constant 8 : index
    %273 = vector.load %arg13[%c1_257, %c8_258] : memref<2x128xf32, #tpu.memory_space<vmem>>, vector<1x4xf32>
    tpu.vector_store %arg13[%c1_257, %c8_258], %272 {strides = array<i32>} : memref<2x128xf32, #tpu.memory_space<vmem>>, vector<1x4xf32>,
    %c0_259 = arith.constant 0 : index
    %c180 = arith.constant 180 : index
    %274 = vector.load %arg12[%c0_259, %c180] : memref<8x384xf32, #tpu.memory_space<vmem>>, vector<1x4xf32>
    %c1_260 = arith.constant 1 : index
    %c12_261 = arith.constant 12 : index
    %275 = vector.load %arg13[%c1_260, %c12_261] : memref<2x128xf32, #tpu.memory_space<vmem>>, vector<1x4xf32>
    tpu.vector_store %arg13[%c1_260, %c12_261], %274 {strides = array<i32>} : memref<2x128xf32, #tpu.memory_space<vmem>>, vector<1x4xf32>,
    %c1_262 = arith.constant 1 : index
    %c144_263 = arith.constant 144 : index
    %276 = vector.load %arg12[%c1_262, %c144_263] : memref<8x384xf32, #tpu.memory_space<vmem>>, vector<1x4xf32>
    %c1_264 = arith.constant 1 : index
    %c16_265 = arith.constant 16 : index
    %277 = vector.load %arg13[%c1_264, %c16_265] : memref<2x128xf32, #tpu.memory_space<vmem>>, vector<1x4xf32>
    tpu.vector_store %arg13[%c1_264, %c16_265], %276 {strides = array<i32>} : memref<2x128xf32, #tpu.memory_space<vmem>>, vector<1x4xf32>,
    %c1_266 = arith.constant 1 : index
    %c156_267 = arith.constant 156 : index
    %278 = vector.load %arg12[%c1_266, %c156_267] : memref<8x384xf32, #tpu.memory_space<vmem>>, vector<1x4xf32>
    %c1_268 = arith.constant 1 : index
    %c20_269 = arith.constant 20 : index
    %279 = vector.load %arg13[%c1_268, %c20_269] : memref<2x128xf32, #tpu.memory_space<vmem>>, vector<1x4xf32>
    tpu.vector_store %arg13[%c1_268, %c20_269], %278 {strides = array<i32>} : memref<2x128xf32, #tpu.memory_space<vmem>>, vector<1x4xf32>,
    %c1_270 = arith.constant 1 : index
    %c168_271 = arith.constant 168 : index
    %280 = vector.load %arg12[%c1_270, %c168_271] : memref<8x384xf32, #tpu.memory_space<vmem>>, vector<1x4xf32>
    %c1_272 = arith.constant 1 : index
    %c24_273 = arith.constant 24 : index
    %281 = vector.load %arg13[%c1_272, %c24_273] : memref<2x128xf32, #tpu.memory_space<vmem>>, vector<1x4xf32>
    tpu.vector_store %arg13[%c1_272, %c24_273], %280 {strides = array<i32>} : memref<2x128xf32, #tpu.memory_space<vmem>>, vector<1x4xf32>,
    %c1_274 = arith.constant 1 : index
    %c180_275 = arith.constant 180 : index
    %282 = vector.load %arg12[%c1_274, %c180_275] : memref<8x384xf32, #tpu.memory_space<vmem>>, vector<1x4xf32>
    %c1_276 = arith.constant 1 : index
    %c28_277 = arith.constant 28 : index
    %283 = vector.load %arg13[%c1_276, %c28_277] : memref<2x128xf32, #tpu.memory_space<vmem>>, vector<1x4xf32>
    tpu.vector_store %arg13[%c1_276, %c28_277], %282 {strides = array<i32>} : memref<2x128xf32, #tpu.memory_space<vmem>>, vector<1x4xf32>,
    %c2_278 = arith.constant 2 : index
    %c144_279 = arith.constant 144 : index
    %284 = vector.load %arg12[%c2_278, %c144_279] : memref<8x384xf32, #tpu.memory_space<vmem>>, vector<1x4xf32>
    %c1_280 = arith.constant 1 : index
    %c32_281 = arith.constant 32 : index
    %285 = vector.load %arg13[%c1_280, %c32_281] : memref<2x128xf32, #tpu.memory_space<vmem>>, vector<1x4xf32>
    tpu.vector_store %arg13[%c1_280, %c32_281], %284 {strides = array<i32>} : memref<2x128xf32, #tpu.memory_space<vmem>>, vector<1x4xf32>,
    %c2_282 = arith.constant 2 : index
    %c156_283 = arith.constant 156 : index
    %286 = vector.load %arg12[%c2_282, %c156_283] : memref<8x384xf32, #tpu.memory_space<vmem>>, vector<1x4xf32>
    %c1_284 = arith.constant 1 : index
    %c36_285 = arith.constant 36 : index
    %287 = vector.load %arg13[%c1_284, %c36_285] : memref<2x128xf32, #tpu.memory_space<vmem>>, vector<1x4xf32>
    tpu.vector_store %arg13[%c1_284, %c36_285], %286 {strides = array<i32>} : memref<2x128xf32, #tpu.memory_space<vmem>>, vector<1x4xf32>,
    %c2_286 = arith.constant 2 : index
    %c168_287 = arith.constant 168 : index
    %288 = vector.load %arg12[%c2_286, %c168_287] : memref<8x384xf32, #tpu.memory_space<vmem>>, vector<1x4xf32>
    %c1_288 = arith.constant 1 : index
    %c40_289 = arith.constant 40 : index
    %289 = vector.load %arg13[%c1_288, %c40_289] : memref<2x128xf32, #tpu.memory_space<vmem>>, vector<1x4xf32>
    tpu.vector_store %arg13[%c1_288, %c40_289], %288 {strides = array<i32>} : memref<2x128xf32, #tpu.memory_space<vmem>>, vector<1x4xf32>,
    %c2_290 = arith.constant 2 : index
    %c180_291 = arith.constant 180 : index
    %290 = vector.load %arg12[%c2_290, %c180_291] : memref<8x384xf32, #tpu.memory_space<vmem>>, vector<1x4xf32>
    %c1_292 = arith.constant 1 : index
    %c44_293 = arith.constant 44 : index
    %291 = vector.load %arg13[%c1_292, %c44_293] : memref<2x128xf32, #tpu.memory_space<vmem>>, vector<1x4xf32>
    tpu.vector_store %arg13[%c1_292, %c44_293], %290 {strides = array<i32>} : memref<2x128xf32, #tpu.memory_space<vmem>>, vector<1x4xf32>,
    %c3_294 = arith.constant 3 : index
    %c144_295 = arith.constant 144 : index
    %292 = vector.load %arg12[%c3_294, %c144_295] : memref<8x384xf32, #tpu.memory_space<vmem>>, vector<1x4xf32>
    %c1_296 = arith.constant 1 : index
    %c48_297 = arith.constant 48 : index
    %293 = vector.load %arg13[%c1_296, %c48_297] : memref<2x128xf32, #tpu.memory_space<vmem>>, vector<1x4xf32>
    tpu.vector_store %arg13[%c1_296, %c48_297], %292 {strides = array<i32>} : memref<2x128xf32, #tpu.memory_space<vmem>>, vector<1x4xf32>,
    %c3_298 = arith.constant 3 : index
    %c156_299 = arith.constant 156 : index
    %294 = vector.load %arg12[%c3_298, %c156_299] : memref<8x384xf32, #tpu.memory_space<vmem>>, vector<1x4xf32>
    %c1_300 = arith.constant 1 : index
    %c52_301 = arith.constant 52 : index
    %295 = vector.load %arg13[%c1_300, %c52_301] : memref<2x128xf32, #tpu.memory_space<vmem>>, vector<1x4xf32>
    tpu.vector_store %arg13[%c1_300, %c52_301], %294 {strides = array<i32>} : memref<2x128xf32, #tpu.memory_space<vmem>>, vector<1x4xf32>,
    %c3_302 = arith.constant 3 : index
    %c168_303 = arith.constant 168 : index
    %296 = vector.load %arg12[%c3_302, %c168_303] : memref<8x384xf32, #tpu.memory_space<vmem>>, vector<1x4xf32>
    %c1_304 = arith.constant 1 : index
    %c56_305 = arith.constant 56 : index
    %297 = vector.load %arg13[%c1_304, %c56_305] : memref<2x128xf32, #tpu.memory_space<vmem>>, vector<1x4xf32>
    tpu.vector_store %arg13[%c1_304, %c56_305], %296 {strides = array<i32>} : memref<2x128xf32, #tpu.memory_space<vmem>>, vector<1x4xf32>,
    %c3_306 = arith.constant 3 : index
    %c180_307 = arith.constant 180 : index
    %298 = vector.load %arg12[%c3_306, %c180_307] : memref<8x384xf32, #tpu.memory_space<vmem>>, vector<1x4xf32>
    %c1_308 = arith.constant 1 : index
    %c60_309 = arith.constant 60 : index
    %299 = vector.load %arg13[%c1_308, %c60_309] : memref<2x128xf32, #tpu.memory_space<vmem>>, vector<1x4xf32>
    tpu.vector_store %arg13[%c1_308, %c60_309], %298 {strides = array<i32>} : memref<2x128xf32, #tpu.memory_space<vmem>>, vector<1x4xf32>,
    %c4_310 = arith.constant 4 : index
    %c144_311 = arith.constant 144 : index
    %300 = vector.load %arg12[%c4_310, %c144_311] : memref<8x384xf32, #tpu.memory_space<vmem>>, vector<1x4xf32>
    %c1_312 = arith.constant 1 : index
    %c64_313 = arith.constant 64 : index
    %301 = vector.load %arg13[%c1_312, %c64_313] : memref<2x128xf32, #tpu.memory_space<vmem>>, vector<1x4xf32>
    tpu.vector_store %arg13[%c1_312, %c64_313], %300 {strides = array<i32>} : memref<2x128xf32, #tpu.memory_space<vmem>>, vector<1x4xf32>,
    %c4_314 = arith.constant 4 : index
    %c156_315 = arith.constant 156 : index
    %302 = vector.load %arg12[%c4_314, %c156_315] : memref<8x384xf32, #tpu.memory_space<vmem>>, vector<1x4xf32>
    %c1_316 = arith.constant 1 : index
    %c68_317 = arith.constant 68 : index
    %303 = vector.load %arg13[%c1_316, %c68_317] : memref<2x128xf32, #tpu.memory_space<vmem>>, vector<1x4xf32>
    tpu.vector_store %arg13[%c1_316, %c68_317], %302 {strides = array<i32>} : memref<2x128xf32, #tpu.memory_space<vmem>>, vector<1x4xf32>,
    %c4_318 = arith.constant 4 : index
    %c168_319 = arith.constant 168 : index
    %304 = vector.load %arg12[%c4_318, %c168_319] : memref<8x384xf32, #tpu.memory_space<vmem>>, vector<1x4xf32>
    %c1_320 = arith.constant 1 : index
    %c72_321 = arith.constant 72 : index
    %305 = vector.load %arg13[%c1_320, %c72_321] : memref<2x128xf32, #tpu.memory_space<vmem>>, vector<1x4xf32>
    tpu.vector_store %arg13[%c1_320, %c72_321], %304 {strides = array<i32>} : memref<2x128xf32, #tpu.memory_space<vmem>>, vector<1x4xf32>,
    %c4_322 = arith.constant 4 : index
    %c180_323 = arith.constant 180 : index
    %306 = vector.load %arg12[%c4_322, %c180_323] : memref<8x384xf32, #tpu.memory_space<vmem>>, vector<1x4xf32>
    %c1_324 = arith.constant 1 : index
    %c76_325 = arith.constant 76 : index
    %307 = vector.load %arg13[%c1_324, %c76_325] : memref<2x128xf32, #tpu.memory_space<vmem>>, vector<1x4xf32>
    tpu.vector_store %arg13[%c1_324, %c76_325], %306 {strides = array<i32>} : memref<2x128xf32, #tpu.memory_space<vmem>>, vector<1x4xf32>,
    %c5_326 = arith.constant 5 : index
    %c144_327 = arith.constant 144 : index
    %308 = vector.load %arg12[%c5_326, %c144_327] : memref<8x384xf32, #tpu.memory_space<vmem>>, vector<1x4xf32>
    %c1_328 = arith.constant 1 : index
    %c80_329 = arith.constant 80 : index
    %309 = vector.load %arg13[%c1_328, %c80_329] : memref<2x128xf32, #tpu.memory_space<vmem>>, vector<1x4xf32>
    tpu.vector_store %arg13[%c1_328, %c80_329], %308 {strides = array<i32>} : memref<2x128xf32, #tpu.memory_space<vmem>>, vector<1x4xf32>,
    %c5_330 = arith.constant 5 : index
    %c156_331 = arith.constant 156 : index
    %310 = vector.load %arg12[%c5_330, %c156_331] : memref<8x384xf32, #tpu.memory_space<vmem>>, vector<1x4xf32>
    %c1_332 = arith.constant 1 : index
    %c84_333 = arith.constant 84 : index
    %311 = vector.load %arg13[%c1_332, %c84_333] : memref<2x128xf32, #tpu.memory_space<vmem>>, vector<1x4xf32>
    tpu.vector_store %arg13[%c1_332, %c84_333], %310 {strides = array<i32>} : memref<2x128xf32, #tpu.memory_space<vmem>>, vector<1x4xf32>,
    %c5_334 = arith.constant 5 : index
    %c168_335 = arith.constant 168 : index
    %312 = vector.load %arg12[%c5_334, %c168_335] : memref<8x384xf32, #tpu.memory_space<vmem>>, vector<1x4xf32>
    %c1_336 = arith.constant 1 : index
    %c88_337 = arith.constant 88 : index
    %313 = vector.load %arg13[%c1_336, %c88_337] : memref<2x128xf32, #tpu.memory_space<vmem>>, vector<1x4xf32>
    tpu.vector_store %arg13[%c1_336, %c88_337], %312 {strides = array<i32>} : memref<2x128xf32, #tpu.memory_space<vmem>>, vector<1x4xf32>,
    %c5_338 = arith.constant 5 : index
    %c180_339 = arith.constant 180 : index
    %314 = vector.load %arg12[%c5_338, %c180_339] : memref<8x384xf32, #tpu.memory_space<vmem>>, vector<1x4xf32>
    %c1_340 = arith.constant 1 : index
    %c92_341 = arith.constant 92 : index
    %315 = vector.load %arg13[%c1_340, %c92_341] : memref<2x128xf32, #tpu.memory_space<vmem>>, vector<1x4xf32>
    tpu.vector_store %arg13[%c1_340, %c92_341], %314 {strides = array<i32>} : memref<2x128xf32, #tpu.memory_space<vmem>>, vector<1x4xf32>,
    %c6_342 = arith.constant 6 : index
    %c144_343 = arith.constant 144 : index
    %316 = vector.load %arg12[%c6_342, %c144_343] : memref<8x384xf32, #tpu.memory_space<vmem>>, vector<1x4xf32>
    %c1_344 = arith.constant 1 : index
    %c96_345 = arith.constant 96 : index
    %317 = vector.load %arg13[%c1_344, %c96_345] : memref<2x128xf32, #tpu.memory_space<vmem>>, vector<1x4xf32>
    tpu.vector_store %arg13[%c1_344, %c96_345], %316 {strides = array<i32>} : memref<2x128xf32, #tpu.memory_space<vmem>>, vector<1x4xf32>,
    %c6_346 = arith.constant 6 : index
    %c156_347 = arith.constant 156 : index
    %318 = vector.load %arg12[%c6_346, %c156_347] : memref<8x384xf32, #tpu.memory_space<vmem>>, vector<1x4xf32>
    %c1_348 = arith.constant 1 : index
    %c100_349 = arith.constant 100 : index
    %319 = vector.load %arg13[%c1_348, %c100_349] : memref<2x128xf32, #tpu.memory_space<vmem>>, vector<1x4xf32>
    tpu.vector_store %arg13[%c1_348, %c100_349], %318 {strides = array<i32>} : memref<2x128xf32, #tpu.memory_space<vmem>>, vector<1x4xf32>,
    %c6_350 = arith.constant 6 : index
    %c168_351 = arith.constant 168 : index
    %320 = vector.load %arg12[%c6_350, %c168_351] : memref<8x384xf32, #tpu.memory_space<vmem>>, vector<1x4xf32>
    %c1_352 = arith.constant 1 : index
    %c104_353 = arith.constant 104 : index
    %321 = vector.load %arg13[%c1_352, %c104_353] : memref<2x128xf32, #tpu.memory_space<vmem>>, vector<1x4xf32>
    tpu.vector_store %arg13[%c1_352, %c104_353], %320 {strides = array<i32>} : memref<2x128xf32, #tpu.memory_space<vmem>>, vector<1x4xf32>,
    %c6_354 = arith.constant 6 : index
    %c180_355 = arith.constant 180 : index
    %322 = vector.load %arg12[%c6_354, %c180_355] : memref<8x384xf32, #tpu.memory_space<vmem>>, vector<1x4xf32>
    %c1_356 = arith.constant 1 : index
    %c108_357 = arith.constant 108 : index
    %323 = vector.load %arg13[%c1_356, %c108_357] : memref<2x128xf32, #tpu.memory_space<vmem>>, vector<1x4xf32>
    tpu.vector_store %arg13[%c1_356, %c108_357], %322 {strides = array<i32>} : memref<2x128xf32, #tpu.memory_space<vmem>>, vector<1x4xf32>,
    %c7_358 = arith.constant 7 : index
    %c144_359 = arith.constant 144 : index
    %324 = vector.load %arg12[%c7_358, %c144_359] : memref<8x384xf32, #tpu.memory_space<vmem>>, vector<1x4xf32>
    %c1_360 = arith.constant 1 : index
    %c112_361 = arith.constant 112 : index
    %325 = vector.load %arg13[%c1_360, %c112_361] : memref<2x128xf32, #tpu.memory_space<vmem>>, vector<1x4xf32>
    tpu.vector_store %arg13[%c1_360, %c112_361], %324 {strides = array<i32>} : memref<2x128xf32, #tpu.memory_space<vmem>>, vector<1x4xf32>,
    %c7_362 = arith.constant 7 : index
    %c156_363 = arith.constant 156 : index
    %326 = vector.load %arg12[%c7_362, %c156_363] : memref<8x384xf32, #tpu.memory_space<vmem>>, vector<1x4xf32>
    %c1_364 = arith.constant 1 : index
    %c116_365 = arith.constant 116 : index
    %327 = vector.load %arg13[%c1_364, %c116_365] : memref<2x128xf32, #tpu.memory_space<vmem>>, vector<1x4xf32>
    tpu.vector_store %arg13[%c1_364, %c116_365], %326 {strides = array<i32>} : memref<2x128xf32, #tpu.memory_space<vmem>>, vector<1x4xf32>,
    %c7_366 = arith.constant 7 : index
    %c168_367 = arith.constant 168 : index
    %328 = vector.load %arg12[%c7_366, %c168_367] : memref<8x384xf32, #tpu.memory_space<vmem>>, vector<1x4xf32>
    %c1_368 = arith.constant 1 : index
    %c120_369 = arith.constant 120 : index
    %329 = vector.load %arg13[%c1_368, %c120_369] : memref<2x128xf32, #tpu.memory_space<vmem>>, vector<1x4xf32>
    tpu.vector_store %arg13[%c1_368, %c120_369], %328 {strides = array<i32>} : memref<2x128xf32, #tpu.memory_space<vmem>>, vector<1x4xf32>,
    %c7_370 = arith.constant 7 : index
    %c180_371 = arith.constant 180 : index
    %330 = vector.load %arg12[%c7_370, %c180_371] : memref<8x384xf32, #tpu.memory_space<vmem>>, vector<1x4xf32>
    %c1_372 = arith.constant 1 : index
    %c124_373 = arith.constant 124 : index
    %331 = vector.load %arg13[%c1_372, %c124_373] : memref<2x128xf32, #tpu.memory_space<vmem>>, vector<1x4xf32>
    tpu.vector_store %arg13[%c1_372, %c124_373], %330 {strides = array<i32>} : memref<2x128xf32, #tpu.memory_space<vmem>>, vector<1x4xf32>,
    %c0_374 = arith.constant 0 : index
    %c0_375 = arith.constant 0 : index
    %332 = vector.load %arg13[%c0_374, %c0_375] : memref<2x128xf32, #tpu.memory_space<vmem>>, vector<2x128xf32>
    %333 = arith.truncf %332 : vector<2x128xf32> to vector<2x128xbf16>
    %c0_376 = arith.constant 0 : index
    %c0_377 = arith.constant 0 : index
    %334 = vector.load %arg7[%c0_376, %c0_377] : memref<128x1024xbf16, #tpu.memory_space<vmem>>, vector<128x1024xbf16>
    %cst_378 = arith.constant dense<0.000000e+00> : vector<2x1024xf32>
    %335 = tpu.matmul %333, %334, %cst_378 {dimension_numbers = #tpu.dot_dimension_numbers<[1], [0], [0], [1], [0, 0, 1, 1], [], []>} : vector<2x128xbf16>, vector<128x1024xbf16>, vector<2x1024xf32> -> vector<2x1024xf32>
    %c0_379 = arith.constant 0 : index
    %c0_380 = arith.constant 0 : index
    %336 = vector.load %arg8[%c0_379, %c0_380] : memref<1x1024xf32, #tpu.memory_space<vmem>>, vector<1x1024xf32>
    %337 = vector.broadcast %336 : vector<1x1024xf32> to vector<2x1024xf32>
    %338 = arith.addf %335, %337 : vector<2x1024xf32>
    %cst_381 = arith.constant 0.000000e+00 : f32
    %339 = vector.broadcast %cst_381 : f32 to vector<2x1024xf32>
    %340 = arith.maximumf %338, %339 : vector<2x1024xf32>
    %c0_382 = arith.constant 0 : index
    %c0_383 = arith.constant 0 : index
    %341 = vector.load %arg9[%c0_382, %c0_383] : memref<1x1024xf32, #tpu.memory_space<vmem>>, vector<1x1024xf32>
    %342 = vector.broadcast %341 : vector<1x1024xf32> to vector<2x1024xf32>
    %343 = arith.mulf %340, %342 : vector<2x1024xf32>
    %cst_384 = arith.constant dense<0.000000e+00> : vector<2xf32>
    %344 = vector.multi_reduction <add>, %343, %cst_384 [1] : vector<2x1024xf32> to vector<2xf32>
    %345 = vector.shape_cast %344 : vector<2xf32> to vector<2x1xf32>
    %c0_385 = arith.constant 0 : index
    %c0_386 = arith.constant 0 : index
    %346 = vector.load %arg10[%c0_385, %c0_386] : memref<1x1xf32, #tpu.memory_space<vmem>>, vector<1x1xf32>
    %347 = vector.broadcast %346 : vector<1x1xf32> to vector<2x1xf32>
    %348 = arith.addf %345, %347 : vector<2x1xf32>
    %cst_387 = arith.constant 0.000000e+00 : f32
    %349 = vector.broadcast %cst_387 : f32 to vector<2x1xf32>
    %350 = arith.maximumf %348, %349 : vector<2x1xf32>
    %351 = vector.shape_cast %350 : vector<2x1xf32> to vector<2x1xf32>
    %352 = vector.broadcast %351 : vector<2x1xf32> to vector<2x128xf32>
    %c0_388 = arith.constant 0 : index
    %c0_389 = arith.constant 0 : index
    %353 = vector.load %arg11[%c0_388, %c0_389] : memref<2x128xf32, #tpu.memory_space<vmem>>, vector<2x128xf32>
    tpu.vector_store %arg11[%c0_388, %c0_389], %352 {strides = array<i32>} : memref<2x128xf32, #tpu.memory_space<vmem>>, vector<2x128xf32>,
    return
  }
}

</mosaic_0001>

<llo_original>
// kernel: net_forward.1
$region0: #{net_forward.1}
  #allocation0 [shape = 'u32[]', space=smem, size = 0x4, offset = 0x4, fixed_abs, tag = 'smem constant byte address 0x4 - core index']
  #allocation1 [shape = 'u32[144,128]{1,0:T(1,128)}', space=vmem, size = 0x12000, scoped, tag = 'internal scratch']
  #allocation2 [shape = 'f32[8,384]{1,0:T(8,128)}', space=vmem, size = 0x3000, scoped, tag = 'scratch operand']
  #allocation3 [shape = 'f32[2,128]{1,0:T(2,128)}', space=vmem, size = 0x400, scoped, tag = 'scratch operand']
  #allocation4 [shape = 'f32[1,1]{1,0:T(1,128)S(1)}', space=vmem, size = 0x200, scoped, tag = 'scoped memory for net_forward.1']
  %s0 = inlined_call_operand.vmem [shape: bf16[9,384], index: 0, kind: input, shape index: {}]
  %s1 = inlined_call_operand.vmem [shape: bf16[8,9], index: 1, kind: input, shape index: {}]
  %s2 = inlined_call_operand.vmem [shape: f32[8,1], index: 2, kind: input, shape index: {}]
  %s3 = inlined_call_operand.vmem [shape: bf16[6,8], index: 3, kind: input, shape index: {}]
  %s4 = inlined_call_operand.vmem [shape: f32[6,1], index: 4, kind: input, shape index: {}]
  %s5 = inlined_call_operand.vmem [shape: bf16[9,8,6], index: 5, kind: input, shape index: {}]
  %s6 = inlined_call_operand.vmem [shape: f32[8,1], index: 6, kind: input, shape index: {}]
  %s7 = inlined_call_operand.hbm [shape: bf16[128,1024], index: 7, kind: input, shape index: {}]
  %s8 = inlined_call_operand.vmem [shape: f32[1,1024], index: 8, kind: input, shape index: {}]
  %s9 = inlined_call_operand.vmem [shape: f32[1,1024], index: 9, kind: input, shape index: {}]
  %s10 = inlined_call_operand.<no memory space> [shape: f32[1,1], index: 10, kind: input, shape index: {}]
  %s11 = inlined_call_operand.vmem [shape: f32[2,128], index: 11, kind: output, shape index: {}]
  %s12 = sld [smem:[#allocation0]]
  $region58: #{net_forward.1} parent=0
    _
  %s14 = ssub.s32 1, %s12
  %s15 = scalar_select 0, %s14, %s12
  %v16 = vstv %s10
  %17 = vst [vmem:[#allocation4] sm:$0x1] %v16
  $region1: #{net_forward.1} parent=0
    #allocation5 [shape = 'u8[262144]{0}', space=vmem, size = 0x40000, scoped, tag = 'input window, operand 7, single buffered']
    #allocation6 [shape = 's32[1]{0}', space=sflag, size = 0x4, scoped, tag = 'scoped memory for net_forward.1']
    %18 = vsyncpa [#allocation6], 0
    // Predicated region
    $region2: #{net_forward.1} parent=1 // pred_check
      _
    $region3: #{net_forward.1} parent=1 // pred_check_branch
      %20 = sbr.rel (0) target = $region5
    $region4: #{net_forward.1} parent=1 // pred_region
      _
    $region5: #{net_forward.1} parent=1 // pred_fallthru
      _
    // Predicated region
    $region6: #{net_forward.1} parent=1 // pred_check
      _
    $region7: #{net_forward.1} parent=1 // pred_check_branch
      %22 = sbr.rel (0) target = $region9
    $region8: #{net_forward.1} parent=1 // pred_region
      _
    $region9: #{net_forward.1} parent=1 // pred_fallthru
      _
    // Predicated region
    $region10: #{net_forward.1} parent=1 // pred_check
      _
    $region11: #{net_forward.1} parent=1 // pred_check_branch
      %24 = sbr.rel (0) target = $region13
    $region12: #{net_forward.1} parent=1 // pred_region
      _
    $region13: #{net_forward.1} parent=1 // pred_fallthru
      _
    // Predicated region
    $region14: #{net_forward.1} parent=1 // pred_check
      _
    $region15: #{net_forward.1} parent=1 // pred_check_branch
      %26 = sbr.rel (0) target = $region17
    $region16: #{net_forward.1} parent=1 // pred_region
      _
    $region17: #{net_forward.1} parent=1 // pred_fallthru
      _
    // Predicated region
    $region18: #{net_forward.1} parent=1 // pred_check
      _
    $region19: #{net_forward.1} parent=1 // pred_check_branch
      %28 = sbr.rel (0) target = $region21
    $region20: #{net_forward.1} parent=1 // pred_region
      _
    $region21: #{net_forward.1} parent=1 // pred_fallthru
      _
    // Predicated region
    $region22: #{net_forward.1} parent=1 // pred_check
      _
    $region23: #{net_forward.1} parent=1 // pred_check_branch
      %30 = sbr.rel (0) target = $region25
    $region24: #{net_forward.1} parent=1 // pred_region
      _
    $region25: #{net_forward.1} parent=1 // pred_fallthru
      _
    // Predicated region
    $region26: #{net_forward.1} parent=1 // pred_check
      _
    $region27: #{net_forward.1} parent=1 // pred_check_branch
      %32 = sbr.rel (0) target = $region29
    $region28: #{net_forward.1} parent=1 // pred_region
      _
    $region29: #{net_forward.1} parent=1 // pred_fallthru
      _
    // Predicated region
    $region30: #{net_forward.1} parent=1 // pred_check
      _
    $region31: #{net_forward.1} parent=1 // pred_check_branch
      %34 = sbr.rel (0) target = $region33
    $region32: #{net_forward.1} parent=1 // pred_region
      %s36 = ssub.s32 8192, 8192
      %37 = vsyncadd [#allocation6], %s36
      %s38 = sshll.u32 [#allocation5], 4
      %s39 = int_to_ptr.vmem [resolvable:$true] %s38
      %44 = dma.hbm_to_vmem [thread:$0]  %s7, 8192, %s39, [#allocation6], 512, 512, 32
    $region33: #{net_forward.1} parent=1 // pred_fallthru
      _
    // Predicated region
    $region34: #{net_forward.1} parent=1 // pred_check
      _
    $region35: #{net_forward.1} parent=1 // pred_check_branch
      %46 = sbr.rel (0) target = $region37
    $region36: #{net_forward.1} parent=1 // pred_region
      _
    $region37: #{net_forward.1} parent=1 // pred_fallthru
      _
    // Predicated region
    $region38: #{net_forward.1} parent=1 // pred_check
      _
    $region39: #{net_forward.1} parent=1 // pred_check_branch
      %48 = sbr.rel (0) target = $region41
    $region40: #{net_forward.1} parent=1 // pred_region
      _
    $region41: #{net_forward.1} parent=1 // pred_fallthru
      _
    // Predicated region
    $region42: #{net_forward.1} parent=1 // pred_check
      _
    $region43: #{net_forward.1} parent=1 // pred_check_branch
      %50 = sbr.rel (0) target = $region45
    $region44: #{net_forward.1} parent=1 // pred_region
      _
    $region45: #{net_forward.1} parent=1 // pred_fallthru
      _
    // Predicated region
    $region46: #{net_forward.1} parent=1 // pred_check
      _
    $region47: #{net_forward.1} parent=1 // pred_check_branch
      %52 = sbr.rel (0) target = $region49
    $region48: #{net_forward.1} parent=1 // pred_region
      %53 = dma.done [#allocation6], 8192
    $region49: #{net_forward.1} parent=1 // pred_fallthru
      _
    %v55 = vld [vmem:[%s1] sm:$0xf]
    %v56 = vld [vmem:[%s0] sm:$0xff]
    %v57 = vld [vmem:[%s0 + $0x8] sm:$0xf]
    %v58 = vld [vmem:[%s0 + $0xc] sm:$0x11]
    %v59 = vld [vmem:[%s0 + $0x14] sm:$0x1]
    %v60 = vld [vmem:[%s2] sm:$0xff]
    %62 = vset.pattern.permute.xlu0 0
    %63 = vperm.xlu0 %62, %v60
    %v64 = vpop.permute.xlu0 %63
    %v70 = vunpack.c.l.b16 %v56
    %v71 = vunpack.c.h.b16 %v56
    %v72 = vunpack.c.l.b16 %v57
    %v73 = vunpack.c.l.b16 %v58
    %v74 = vunpack.c.h.b16 %v58
    %v75 = vunpack.c.l.b16 %v59
    %v76 = vpack.c.b16 %v73, %v70
    %v77 = vpack.c.b16 %v74, %v71
    %v78 = vpack.c.b16 %v75, %v72
    %vm79 = vcmask 72704
    %v81 = vsel %vm79, %v55, 0
    %vm83 = vcmask 1043456
    %vm84 = vcmask 1044480
    %v85 = vsel %vm83, 4294967295, 65535
    %v86 = vsel %vm84, %v85, 0
    %v88 = vand.u32 %v76, %v86
    %v91 = vand.u32 %v77, %v86
    %v94 = vand.u32 %v78, %v86
    %96 = vmatprep.subr.bf16.mxu0 %v91
    %97 = vmatpush1.bf16.msra.mxu0 %v88
    %98 = vmatprep.subr.bf16.mxu0 0
    %99 = vmatpush1.bf16.msra.mxu0 0
    %100 = vmatprep.subr.bf16.mxu0 0
    %101 = vmatpush1.bf16.msra.mxu0 0
    %102 = vmatprep.subr.bf16.mxu0 0
    %103 = vmatpush1.bf16.msra.mxu0 0
    %104 = vmatprep.subr.bf16.mxu0 0
    %105 = vmatpush1.bf16.msra.mxu0 0
    %106 = vmatprep.subr.bf16.mxu0 0
    %107 = vmatpush1.bf16.msra.mxu0 0
    %108 = vmatprep.subr.bf16.mxu0 0
    %109 = vmatpush1.bf16.msra.mxu0 0
    %110 = vmatprep.subr.bf16.mxu0 0
    %111 = vmatpush1.bf16.msra.mxu0 0
    %112 = vmatprep.subr.bf16.mxu0 0
    %113 = vmatpush1.bf16.msra.mxu0 0
    %114 = vmatprep.subr.bf16.mxu0 0
    %115 = vmatpush1.bf16.msra.mxu0 0
    %116 = vmatprep.subr.bf16.mxu0 0
    %117 = vmatpush1.bf16.msra.mxu0 0
    %118 = vmatprep.subr.bf16.mxu0 0
    %119 = vmatpush1.bf16.msra.mxu0 0
    %120 = vmatprep.subr.bf16.mxu0 0
    %121 = vmatpush1.bf16.msra.mxu0 0
    %122 = vmatprep.subr.bf16.mxu0 0
    %123 = vmatpush1.bf16.msra.mxu0 0
    %124 = vmatprep.subr.bf16.mxu0 0
    %125 = vmatpush1.bf16.msra.mxu0 0
    %126 = vmatprep.subr.bf16.mxu0 0
    %127 = vmatpush1.bf16.msra.mxu0 0
    %128 = vmatprep.mubr.bf16.mxu0 0
    %129 = vmatmul.mubr.bf16.gmra.mrb[0].mxu0 %v81
    %v130 = vpop.f32.mrb[0].mxu0
    %v131 = vadd.f32 %v64, %v130
    %v132 = vpop.f32.mrb[0].mxu0
    %v133 = vadd.f32 %v64, %v132
    %v134 = vpop.f32.mrb[0].mxu0
    %v135 = vpop.f32.mrb[0].mxu0
    %136 = vdwg.mxu0
    %137 = vmatprep.subr.bf16.mxu0 0
    %138 = vmatpush1.bf16.msra.mxu0 %v94
    %139 = vmatprep.subr.bf16.mxu0 0
    %140 = vmatpush1.bf16.msra.mxu0 0
    %141 = vmatprep.subr.bf16.mxu0 0
    %142 = vmatpush1.bf16.msra.mxu0 0
    %143 = vmatprep.subr.bf16.mxu0 0
    %144 = vmatpush1.bf16.msra.mxu0 0
    %145 = vmatprep.subr.bf16.mxu0 0
    %146 = vmatpush1.bf16.msra.mxu0 0
    %147 = vmatprep.subr.bf16.mxu0 0
    %148 = vmatpush1.bf16.msra.mxu0 0
    %149 = vmatprep.subr.bf16.mxu0 0
    %150 = vmatpush1.bf16.msra.mxu0 0
    %151 = vmatprep.subr.bf16.mxu0 0
    %152 = vmatpush1.bf16.msra.mxu0 0
    %153 = vmatprep.subr.bf16.mxu0 0
    %154 = vmatpush1.bf16.msra.mxu0 0
    %155 = vmatprep.subr.bf16.mxu0 0
    %156 = vmatpush1.bf16.msra.mxu0 0
    %157 = vmatprep.subr.bf16.mxu0 0
    %158 = vmatpush1.bf16.msra.mxu0 0
    %159 = vmatprep.subr.bf16.mxu0 0
    %160 = vmatpush1.bf16.msra.mxu0 0
    %161 = vmatprep.subr.bf16.mxu0 0
    %162 = vmatpush1.bf16.msra.mxu0 0
    %163 = vmatprep.subr.bf16.mxu0 0
    %164 = vmatpush1.bf16.msra.mxu0 0
    %165 = vmatprep.subr.bf16.mxu0 0
    %166 = vmatpush1.bf16.msra.mxu0 0
    %167 = vmatprep.subr.bf16.mxu0 0
    %168 = vmatpush1.bf16.msra.mxu0 0
    %169 = vmatprep.mubr.bf16.mxu0 0
    %170 = vmatmul.mubr.bf16.gmra.mrb[0].mxu0 %v81
    %v171 = vpop.f32.mrb[0].mxu0
    %v172 = vadd.f32 %v64, %v171
    %v173 = vpop.f32.mrb[0].mxu0
    %v174 = vpop.f32.mrb[0].mxu0
    %v175 = vpop.f32.mrb[0].mxu0
    %176 = vdwg.mxu0
    %v177 = vmax.f32 %v131, 0.0
    %v178 = vmax.f32 %v133, 0.0
    %v179 = vmax.f32 %v172, 0.0
    %v180 = vld [vmem:[%s3] sm:$0x7]
    %v181 = vpack.c.bf16 %v177, %v177
    %v182 = vpack.c.bf16 %v178, %v178
    %v183 = vpack.c.bf16 %v179, %v179
    %v184 = vld [vmem:[%s4] sm:$0x3f]
    %186 = vset.pattern.permute.xlu0 0
    %187 = vperm.xlu0 %186, %v184
    %v188 = vpop.permute.xlu0 %187
    %vm190 = vcmask 64512
    %v192 = vsel %vm190, %v180, 0
    %v195 = vsel %vm83, %v181, 0
    %v198 = vsel %vm83, %v182, 0
    %v201 = vsel %vm83, %v183, 0
    %203 = vmatprep.subr.bf16.mxu0 %v198
    %204 = vmatpush1.bf16.msra.mxu0 %v195
    %205 = vmatprep.subr.bf16.mxu0 0
    %206 = vmatpush1.bf16.msra.mxu0 0
    %207 = vmatprep.subr.bf16.mxu0 0
    %208 = vmatpush1.bf16.msra.mxu0 0
    %209 = vmatprep.subr.bf16.mxu0 0
    %210 = vmatpush1.bf16.msra.mxu0 0
    %211 = vmatprep.subr.bf16.mxu0 0
    %212 = vmatpush1.bf16.msra.mxu0 0
    %213 = vmatprep.subr.bf16.mxu0 0
    %214 = vmatpush1.bf16.msra.mxu0 0
    %215 = vmatprep.subr.bf16.mxu0 0
    %216 = vmatpush1.bf16.msra.mxu0 0
    %217 = vmatprep.subr.bf16.mxu0 0
    %218 = vmatpush1.bf16.msra.mxu0 0
    %219 = vmatprep.subr.bf16.mxu0 0
    %220 = vmatpush1.bf16.msra.mxu0 0
    %221 = vmatprep.subr.bf16.mxu0 0
    %222 = vmatpush1.bf16.msra.mxu0 0
    %223 = vmatprep.subr.bf16.mxu0 0
    %224 = vmatpush1.bf16.msra.mxu0 0
    %225 = vmatprep.subr.bf16.mxu0 0
    %226 = vmatpush1.bf16.msra.mxu0 0
    %227 = vmatprep.subr.bf16.mxu0 0
    %228 = vmatpush1.bf16.msra.mxu0 0
    %229 = vmatprep.subr.bf16.mxu0 0
    %230 = vmatpush1.bf16.msra.mxu0 0
    %231 = vmatprep.subr.bf16.mxu0 0
    %232 = vmatpush1.bf16.msra.mxu0 0
    %233 = vmatprep.subr.bf16.mxu0 0
    %234 = vmatpush1.bf16.msra.mxu0 0
    %235 = vmatprep.mubr.bf16.mxu0 0
    %236 = vmatmul.mubr.bf16.gmra.mrb[0].mxu0 %v192
    %v237 = vpop.f32.mrb[0].mxu0
    %v238 = vadd.f32 %v188, %v237
    %v239 = vpop.f32.mrb[0].mxu0
    %v240 = vadd.f32 %v188, %v239
    %v241 = vpop.f32.mrb[0].mxu0
    %v242 = vpop.f32.mrb[0].mxu0
    %243 = vdwg.mxu0
    %244 = vmatprep.subr.bf16.mxu0 0
    %245 = vmatpush1.bf16.msra.mxu0 %v201
    %246 = vmatprep.subr.bf16.mxu0 0
    %247 = vmatpush1.bf16.msra.mxu0 0
    %248 = vmatprep.subr.bf16.mxu0 0
    %249 = vmatpush1.bf16.msra.mxu0 0
    %250 = vmatprep.subr.bf16.mxu0 0
    %251 = vmatpush1.bf16.msra.mxu0 0
    %252 = vmatprep.subr.bf16.mxu0 0
    %253 = vmatpush1.bf16.msra.mxu0 0
    %254 = vmatprep.subr.bf16.mxu0 0
    %255 = vmatpush1.bf16.msra.mxu0 0
    %256 = vmatprep.subr.bf16.mxu0 0
    %257 = vmatpush1.bf16.msra.mxu0 0
    %258 = vmatprep.subr.bf16.mxu0 0
    %259 = vmatpush1.bf16.msra.mxu0 0
    %260 = vmatprep.subr.bf16.mxu0 0
    %261 = vmatpush1.bf16.msra.mxu0 0
    %262 = vmatprep.subr.bf16.mxu0 0
    %263 = vmatpush1.bf16.msra.mxu0 0
    %264 = vmatprep.subr.bf16.mxu0 0
    %265 = vmatpush1.bf16.msra.mxu0 0
    %266 = vmatprep.subr.bf16.mxu0 0
    %267 = vmatpush1.bf16.msra.mxu0 0
    %268 = vmatprep.subr.bf16.mxu0 0
    %269 = vmatpush1.bf16.msra.mxu0 0
    %270 = vmatprep.subr.bf16.mxu0 0
    %271 = vmatpush1.bf16.msra.mxu0 0
    %272 = vmatprep.subr.bf16.mxu0 0
    %273 = vmatpush1.bf16.msra.mxu0 0
    %274 = vmatprep.subr.bf16.mxu0 0
    %275 = vmatpush1.bf16.msra.mxu0 0
    %276 = vmatprep.mubr.bf16.mxu0 0
    %277 = vmatmul.mubr.bf16.gmra.mrb[0].mxu0 %v192
    %v278 = vpop.f32.mrb[0].mxu0
    %v279 = vadd.f32 %v188, %v278
    %v280 = vpop.f32.mrb[0].mxu0
    %v281 = vpop.f32.mrb[0].mxu0
    %v282 = vpop.f32.mrb[0].mxu0
    %283 = vdwg.mxu0
    %v284 = vmax.f32 %v238, 0.0
    %v285 = vmax.f32 %v240, 0.0
    %v286 = vmax.f32 %v279, 0.0
    %v287 = vld [vmem:[%s5] sm:$0xf]
    %v288 = vpack.c.bf16 %v284, %v284
    %v289 = vpack.c.bf16 %v285, %v285
    %v290 = vpack.c.bf16 %v286, %v286
    %291 = vrot.lane.b32.xlu0 %v284, 127
    %v292 = vpop.permute.xlu0 %291
    %293 = vrot.lane.b32.xlu0 %v285, 127
    %v294 = vpop.permute.xlu0 %293
    %295 = vrot.lane.b32.xlu0 %v286, 127
    %v296 = vpop.permute.xlu0 %295
    %v297 = vlaneseq
    %v298 = vand.u32 %v297, 127
    %vm299 = vcmp.lt.s32.totalorder %v298, 127
    %v300 = vsel %vm299, %v294, %v296
    %v301 = vsel %vm299, %v292, %v294
    %v302 = vsel %vm299, %v296, %v292
    %s303 = scalar_lea.vmem %s5, 4
    %v304 = vld [vmem:[%s303] sm:$0xf]
    %v305 = vpack.c.bf16 %v301, %v301
    %v306 = vpack.c.bf16 %v300, %v300
    %v307 = vpack.c.bf16 %v302, %v302
    %vm308 = vcmask 48128
    %v310 = vsel %vm308, %v304, 0
    %vm312 = vcmask 1042432
    %v314 = vsel %vm312, %v305, 0
    %v317 = vsel %vm312, %v306, 0
    %v320 = vsel %vm312, %v307, 0
    %322 = vmatprep.subr.bf16.mxu0 %v317
    %323 = vmatpush1.bf16.msra.mxu0 %v314
    %324 = vmatprep.subr.bf16.mxu0 0
    %325 = vmatpush1.bf16.msra.mxu0 0
    %326 = vmatprep.subr.bf16.mxu0 0
    %327 = vmatpush1.bf16.msra.mxu0 0
    %328 = vmatprep.subr.bf16.mxu0 0
    %329 = vmatpush1.bf16.msra.mxu0 0
    %330 = vmatprep.subr.bf16.mxu0 0
    %331 = vmatpush1.bf16.msra.mxu0 0
    %332 = vmatprep.subr.bf16.mxu0 0
    %333 = vmatpush1.bf16.msra.mxu0 0
    %334 = vmatprep.subr.bf16.mxu0 0
    %335 = vmatpush1.bf16.msra.mxu0 0
    %336 = vmatprep.subr.bf16.mxu0 0
    %337 = vmatpush1.bf16.msra.mxu0 0
    %338 = vmatprep.subr.bf16.mxu0 0
    %339 = vmatpush1.bf16.msra.mxu0 0
    %340 = vmatprep.subr.bf16.mxu0 0
    %341 = vmatpush1.bf16.msra.mxu0 0
    %342 = vmatprep.subr.bf16.mxu0 0
    %343 = vmatpush1.bf16.msra.mxu0 0
    %344 = vmatprep.subr.bf16.mxu0 0
    %345 = vmatpush1.bf16.msra.mxu0 0
    %346 = vmatprep.subr.bf16.mxu0 0
    %347 = vmatpush1.bf16.msra.mxu0 0
    %348 = vmatprep.subr.bf16.mxu0 0
    %349 = vmatpush1.bf16.msra.mxu0 0
    %350 = vmatprep.subr.bf16.mxu0 0
    %351 = vmatpush1.bf16.msra.mxu0 0
    %352 = vmatprep.subr.bf16.mxu0 0
    %353 = vmatpush1.bf16.msra.mxu0 0
    %354 = vmatprep.mubr.bf16.mxu0 0
    %355 = vmatmul.mubr.bf16.gmra.mrb[0].mxu0 %v310
    %v356 = vpop.f32.mrb[0].mxu0
    %v357 = vadd.f32 0.0, %v356
    %v358 = vpop.f32.mrb[0].mxu0
    %v359 = vadd.f32 0.0, %v358
    %v360 = vpop.f32.mrb[0].mxu0
    %v361 = vpop.f32.mrb[0].mxu0
    %362 = vdwg.mxu0
    %363 = vmatprep.subr.bf16.mxu0 0
    %364 = vmatpush1.bf16.msra.mxu0 %v320
    %365 = vmatprep.subr.bf16.mxu0 0
    %366 = vmatpush1.bf16.msra.mxu0 0
    %367 = vmatprep.subr.bf16.mxu0 0
    %368 = vmatpush1.bf16.msra.mxu0 0
    %369 = vmatprep.subr.bf16.mxu0 0
    %370 = vmatpush1.bf16.msra.mxu0 0
    %371 = vmatprep.subr.bf16.mxu0 0
    %372 = vmatpush1.bf16.msra.mxu0 0
    %373 = vmatprep.subr.bf16.mxu0 0
    %374 = vmatpush1.bf16.msra.mxu0 0
    %375 = vmatprep.subr.bf16.mxu0 0
    %376 = vmatpush1.bf16.msra.mxu0 0
    %377 = vmatprep.subr.bf16.mxu0 0
    %378 = vmatpush1.bf16.msra.mxu0 0
    %379 = vmatprep.subr.bf16.mxu0 0
    %380 = vmatpush1.bf16.msra.mxu0 0
    %381 = vmatprep.subr.bf16.mxu0 0
    %382 = vmatpush1.bf16.msra.mxu0 0
    %383 = vmatprep.subr.bf16.mxu0 0
    %384 = vmatpush1.bf16.msra.mxu0 0
    %385 = vmatprep.subr.bf16.mxu0 0
    %386 = vmatpush1.bf16.msra.mxu0 0
    %387 = vmatprep.subr.bf16.mxu0 0
    %388 = vmatpush1.bf16.msra.mxu0 0
    %389 = vmatprep.subr.bf16.mxu0 0
    %390 = vmatpush1.bf16.msra.mxu0 0
    %391 = vmatprep.subr.bf16.mxu0 0
    %392 = vmatpush1.bf16.msra.mxu0 0
    %393 = vmatprep.subr.bf16.mxu0 0
    %394 = vmatpush1.bf16.msra.mxu0 0
    %395 = vmatprep.mubr.bf16.mxu0 0
    %396 = vmatmul.mubr.bf16.gmra.mrb[0].mxu0 %v310
    %v397 = vpop.f32.mrb[0].mxu0
    %v398 = vadd.f32 0.0, %v397
    %v399 = vpop.f32.mrb[0].mxu0
    %v400 = vpop.f32.mrb[0].mxu0
    %v401 = vpop.f32.mrb[0].mxu0
    %402 = vdwg.mxu0
    %v404 = vsel %vm308, %v287, 0
    %v407 = vsel %vm312, %v288, 0
    %v410 = vsel %vm312, %v289, 0
    %v413 = vsel %vm312, %v290, 0
    %415 = vmatprep.subr.bf16.mxu0 %v410
    %416 = vmatpush1.bf16.msra.mxu0 %v407
    %417 = vmatprep.subr.bf16.mxu0 0
    %418 = vmatpush1.bf16.msra.mxu0 0
    %419 = vmatprep.subr.bf16.mxu0 0
    %420 = vmatpush1.bf16.msra.mxu0 0
    %421 = vmatprep.subr.bf16.mxu0 0
    %422 = vmatpush1.bf16.msra.mxu0 0
    %423 = vmatprep.subr.bf16.mxu0 0
    %424 = vmatpush1.bf16.msra.mxu0 0
    %425 = vmatprep.subr.bf16.mxu0 0
    %426 = vmatpush1.bf16.msra.mxu0 0
    %427 = vmatprep.subr.bf16.mxu0 0
    %428 = vmatpush1.bf16.msra.mxu0 0
    %429 = vmatprep.subr.bf16.mxu0 0
    %430 = vmatpush1.bf16.msra.mxu0 0
    %431 = vmatprep.subr.bf16.mxu0 0
    %432 = vmatpush1.bf16.msra.mxu0 0
    %433 = vmatprep.subr.bf16.mxu0 0
    %434 = vmatpush1.bf16.msra.mxu0 0
    %435 = vmatprep.subr.bf16.mxu0 0
    %436 = vmatpush1.bf16.msra.mxu0 0
    %437 = vmatprep.subr.bf16.mxu0 0
    %438 = vmatpush1.bf16.msra.mxu0 0
    %439 = vmatprep.subr.bf16.mxu0 0
    %440 = vmatpush1.bf16.msra.mxu0 0
    %441 = vmatprep.subr.bf16.mxu0 0
    %442 = vmatpush1.bf16.msra.mxu0 0
    %443 = vmatprep.subr.bf16.mxu0 0
    %444 = vmatpush1.bf16.msra.mxu0 0
    %445 = vmatprep.subr.bf16.mxu0 0
    %446 = vmatpush1.bf16.msra.mxu0 0
    %447 = vmatprep.mubr.bf16.mxu0 0
    %448 = vmatmul.mubr.bf16.gmra.mrb[0].mxu0 %v404
    %v449 = vpop.f32.mrb[0].mxu0
    %v450 = vadd.f32 %v357, %v449
    %v451 = vpop.f32.mrb[0].mxu0
    %v452 = vadd.f32 %v359, %v451
    %v453 = vpop.f32.mrb[0].mxu0
    %v454 = vpop.f32.mrb[0].mxu0
    %455 = vdwg.mxu0
    %456 = vmatprep.subr.bf16.mxu0 0
    %457 = vmatpush1.bf16.msra.mxu0 %v413
    %458 = vmatprep.subr.bf16.mxu0 0
    %459 = vmatpush1.bf16.msra.mxu0 0
    %460 = vmatprep.subr.bf16.mxu0 0
    %461 = vmatpush1.bf16.msra.mxu0 0
    %462 = vmatprep.subr.bf16.mxu0 0
    %463 = vmatpush1.bf16.msra.mxu0 0
    %464 = vmatprep.subr.bf16.mxu0 0
    %465 = vmatpush1.bf16.msra.mxu0 0
    %466 = vmatprep.subr.bf16.mxu0 0
    %467 = vmatpush1.bf16.msra.mxu0 0
    %468 = vmatprep.subr.bf16.mxu0 0
    %469 = vmatpush1.bf16.msra.mxu0 0
    %470 = vmatprep.subr.bf16.mxu0 0
    %471 = vmatpush1.bf16.msra.mxu0 0
    %472 = vmatprep.subr.bf16.mxu0 0
    %473 = vmatpush1.bf16.msra.mxu0 0
    %474 = vmatprep.subr.bf16.mxu0 0
    %475 = vmatpush1.bf16.msra.mxu0 0
    %476 = vmatprep.subr.bf16.mxu0 0
    %477 = vmatpush1.bf16.msra.mxu0 0
    %478 = vmatprep.subr.bf16.mxu0 0
    %479 = vmatpush1.bf16.msra.mxu0 0
    %480 = vmatprep.subr.bf16.mxu0 0
    %481 = vmatpush1.bf16.msra.mxu0 0
    %482 = vmatprep.subr.bf16.mxu0 0
    %483 = vmatpush1.bf16.msra.mxu0 0
    %484 = vmatprep.subr.bf16.mxu0 0
    %485 = vmatpush1.bf16.msra.mxu0 0
    %486 = vmatprep.subr.bf16.mxu0 0
    %487 = vmatpush1.bf16.msra.mxu0 0
    %488 = vmatprep.mubr.bf16.mxu0 0
    %489 = vmatmul.mubr.bf16.gmra.mrb[0].mxu0 %v404
    %v490 = vpop.f32.mrb[0].mxu0
    %v491 = vadd.f32 %v398, %v490
    %v492 = vpop.f32.mrb[0].mxu0
    %v493 = vpop.f32.mrb[0].mxu0
    %v494 = vpop.f32.mrb[0].mxu0
    %495 = vdwg.mxu0
    %496 = vrot.lane.b32.xlu0 %v284, 126
    %v497 = vpop.permute.xlu0 %496
    %498 = vrot.lane.b32.xlu0 %v285, 126
    %v499 = vpop.permute.xlu0 %498
    %500 = vrot.lane.b32.xlu0 %v286, 126
    %v501 = vpop.permute.xlu0 %500
    %vm502 = vcmp.lt.s32.totalorder %v298, 126
    %v503 = vsel %vm502, %v499, %v501
    %v504 = vsel %vm502, %v497, %v499
    %v505 = vsel %vm502, %v501, %v497
    %s506 = scalar_lea.vmem %s5, 8
    %v507 = vld [vmem:[%s506] sm:$0xf]
    %v508 = vpack.c.bf16 %v504, %v504
    %v509 = vpack.c.bf16 %v503, %v503
    %v510 = vpack.c.bf16 %v505, %v505
    %v512 = vsel %vm308, %v507, 0
    %v515 = vsel %vm312, %v508, 0
    %v518 = vsel %vm312, %v509, 0
    %v521 = vsel %vm312, %v510, 0
    %523 = vmatprep.subr.bf16.mxu0 %v518
    %524 = vmatpush1.bf16.msra.mxu0 %v515
    %525 = vmatprep.subr.bf16.mxu0 0
    %526 = vmatpush1.bf16.msra.mxu0 0
    %527 = vmatprep.subr.bf16.mxu0 0
    %528 = vmatpush1.bf16.msra.mxu0 0
    %529 = vmatprep.subr.bf16.mxu0 0
    %530 = vmatpush1.bf16.msra.mxu0 0
    %531 = vmatprep.subr.bf16.mxu0 0
    %532 = vmatpush1.bf16.msra.mxu0 0
    %533 = vmatprep.subr.bf16.mxu0 0
    %534 = vmatpush1.bf16.msra.mxu0 0
    %535 = vmatprep.subr.bf16.mxu0 0
    %536 = vmatpush1.bf16.msra.mxu0 0
    %537 = vmatprep.subr.bf16.mxu0 0
    %538 = vmatpush1.bf16.msra.mxu0 0
    %539 = vmatprep.subr.bf16.mxu0 0
    %540 = vmatpush1.bf16.msra.mxu0 0
    %541 = vmatprep.subr.bf16.mxu0 0
    %542 = vmatpush1.bf16.msra.mxu0 0
    %543 = vmatprep.subr.bf16.mxu0 0
    %544 = vmatpush1.bf16.msra.mxu0 0
    %545 = vmatprep.subr.bf16.mxu0 0
    %546 = vmatpush1.bf16.msra.mxu0 0
    %547 = vmatprep.subr.bf16.mxu0 0
    %548 = vmatpush1.bf16.msra.mxu0 0
    %549 = vmatprep.subr.bf16.mxu0 0
    %550 = vmatpush1.bf16.msra.mxu0 0
    %551 = vmatprep.subr.bf16.mxu0 0
    %552 = vmatpush1.bf16.msra.mxu0 0
    %553 = vmatprep.subr.bf16.mxu0 0
    %554 = vmatpush1.bf16.msra.mxu0 0
    %555 = vmatprep.mubr.bf16.mxu0 0
    %556 = vmatmul.mubr.bf16.gmra.mrb[0].mxu0 %v512
    %v557 = vpop.f32.mrb[0].mxu0
    %v558 = vadd.f32 0.0, %v557
    %v559 = vpop.f32.mrb[0].mxu0
    %v560 = vadd.f32 0.0, %v559
    %v561 = vpop.f32.mrb[0].mxu0
    %v562 = vpop.f32.mrb[0].mxu0
    %563 = vdwg.mxu0
    %564 = vmatprep.subr.bf16.mxu0 0
    %565 = vmatpush1.bf16.msra.mxu0 %v521
    %566 = vmatprep.subr.bf16.mxu0 0
    %567 = vmatpush1.bf16.msra.mxu0 0
    %568 = vmatprep.subr.bf16.mxu0 0
    %569 = vmatpush1.bf16.msra.mxu0 0
    %570 = vmatprep.subr.bf16.mxu0 0
    %571 = vmatpush1.bf16.msra.mxu0 0
    %572 = vmatprep.subr.bf16.mxu0 0
    %573 = vmatpush1.bf16.msra.mxu0 0
    %574 = vmatprep.subr.bf16.mxu0 0
    %575 = vmatpush1.bf16.msra.mxu0 0
    %576 = vmatprep.subr.bf16.mxu0 0
    %577 = vmatpush1.bf16.msra.mxu0 0
    %578 = vmatprep.subr.bf16.mxu0 0
    %579 = vmatpush1.bf16.msra.mxu0 0
    %580 = vmatprep.subr.bf16.mxu0 0
    %581 = vmatpush1.bf16.msra.mxu0 0
    %582 = vmatprep.subr.bf16.mxu0 0
    %583 = vmatpush1.bf16.msra.mxu0 0
    %584 = vmatprep.subr.bf16.mxu0 0
    %585 = vmatpush1.bf16.msra.mxu0 0
    %586 = vmatprep.subr.bf16.mxu0 0
    %587 = vmatpush1.bf16.msra.mxu0 0
    %588 = vmatprep.subr.bf16.mxu0 0
    %589 = vmatpush1.bf16.msra.mxu0 0
    %590 = vmatprep.subr.bf16.mxu0 0
    %591 = vmatpush1.bf16.msra.mxu0 0
    %592 = vmatprep.subr.bf16.mxu0 0
    %593 = vmatpush1.bf16.msra.mxu0 0
    %594 = vmatprep.subr.bf16.mxu0 0
    %595 = vmatpush1.bf16.msra.mxu0 0
    %596 = vmatprep.mubr.bf16.mxu0 0
    %597 = vmatmul.mubr.bf16.gmra.mrb[0].mxu0 %v512
    %v598 = vpop.f32.mrb[0].mxu0
    %v599 = vadd.f32 0.0, %v598
    %v600 = vpop.f32.mrb[0].mxu0
    %v601 = vpop.f32.mrb[0].mxu0
    %v602 = vpop.f32.mrb[0].mxu0
    %603 = vdwg.mxu0
    %v604 = vadd.f32 %v450, %v558
    %v605 = vadd.f32 %v452, %v560
    %v606 = vadd.f32 %v491, %v599
    %607 = vrot.lane.b32.xlu0 %v284, 116
    %v608 = vpop.permute.xlu0 %607
    %609 = vrot.lane.b32.xlu0 %v285, 116
    %v610 = vpop.permute.xlu0 %609
    %611 = vrot.lane.b32.xlu0 %v286, 116
    %v612 = vpop.permute.xlu0 %611
    %vm613 = vcmp.lt.s32.totalorder %v298, 116
    %v614 = vsel %vm613, %v610, %v612
    %v615 = vsel %vm613, %v608, %v610
    %v616 = vsel %vm613, %v612, %v608
    %s617 = scalar_lea.vmem %s5, 12
    %v618 = vld [vmem:[%s617] sm:$0xf]
    %v619 = vpack.c.bf16 %v615, %v615
    %v620 = vpack.c.bf16 %v614, %v614
    %v621 = vpack.c.bf16 %v616, %v616
    %v623 = vsel %vm308, %v618, 0
    %v626 = vsel %vm312, %v619, 0
    %v629 = vsel %vm312, %v620, 0
    %v632 = vsel %vm312, %v621, 0
    %634 = vmatprep.subr.bf16.mxu0 %v629
    %635 = vmatpush1.bf16.msra.mxu0 %v626
    %636 = vmatprep.subr.bf16.mxu0 0
    %637 = vmatpush1.bf16.msra.mxu0 0
    %638 = vmatprep.subr.bf16.mxu0 0
    %639 = vmatpush1.bf16.msra.mxu0 0
    %640 = vmatprep.subr.bf16.mxu0 0
    %641 = vmatpush1.bf16.msra.mxu0 0
    %642 = vmatprep.subr.bf16.mxu0 0
    %643 = vmatpush1.bf16.msra.mxu0 0
    %644 = vmatprep.subr.bf16.mxu0 0
    %645 = vmatpush1.bf16.msra.mxu0 0
    %646 = vmatprep.subr.bf16.mxu0 0
    %647 = vmatpush1.bf16.msra.mxu0 0
    %648 = vmatprep.subr.bf16.mxu0 0
    %649 = vmatpush1.bf16.msra.mxu0 0
    %650 = vmatprep.subr.bf16.mxu0 0
    %651 = vmatpush1.bf16.msra.mxu0 0
    %652 = vmatprep.subr.bf16.mxu0 0
    %653 = vmatpush1.bf16.msra.mxu0 0
    %654 = vmatprep.subr.bf16.mxu0 0
    %655 = vmatpush1.bf16.msra.mxu0 0
    %656 = vmatprep.subr.bf16.mxu0 0
    %657 = vmatpush1.bf16.msra.mxu0 0
    %658 = vmatprep.subr.bf16.mxu0 0
    %659 = vmatpush1.bf16.msra.mxu0 0
    %660 = vmatprep.subr.bf16.mxu0 0
    %661 = vmatpush1.bf16.msra.mxu0 0
    %662 = vmatprep.subr.bf16.mxu0 0
    %663 = vmatpush1.bf16.msra.mxu0 0
    %664 = vmatprep.subr.bf16.mxu0 0
    %665 = vmatpush1.bf16.msra.mxu0 0
    %666 = vmatprep.mubr.bf16.mxu0 0
    %667 = vmatmul.mubr.bf16.gmra.mrb[0].mxu0 %v623
    %v668 = vpop.f32.mrb[0].mxu0
    %v669 = vadd.f32 0.0, %v668
    %v670 = vpop.f32.mrb[0].mxu0
    %v671 = vadd.f32 0.0, %v670
    %v672 = vpop.f32.mrb[0].mxu0
    %v673 = vpop.f32.mrb[0].mxu0
    %674 = vdwg.mxu0
    %675 = vmatprep.subr.bf16.mxu0 0
    %676 = vmatpush1.bf16.msra.mxu0 %v632
    %677 = vmatprep.subr.bf16.mxu0 0
    %678 = vmatpush1.bf16.msra.mxu0 0
    %679 = vmatprep.subr.bf16.mxu0 0
    %680 = vmatpush1.bf16.msra.mxu0 0
    %681 = vmatprep.subr.bf16.mxu0 0
    %682 = vmatpush1.bf16.msra.mxu0 0
    %683 = vmatprep.subr.bf16.mxu0 0
    %684 = vmatpush1.bf16.msra.mxu0 0
    %685 = vmatprep.subr.bf16.mxu0 0
    %686 = vmatpush1.bf16.msra.mxu0 0
    %687 = vmatprep.subr.bf16.mxu0 0
    %688 = vmatpush1.bf16.msra.mxu0 0
    %689 = vmatprep.subr.bf16.mxu0 0
    %690 = vmatpush1.bf16.msra.mxu0 0
    %691 = vmatprep.subr.bf16.mxu0 0
    %692 = vmatpush1.bf16.msra.mxu0 0
    %693 = vmatprep.subr.bf16.mxu0 0
    %694 = vmatpush1.bf16.msra.mxu0 0
    %695 = vmatprep.subr.bf16.mxu0 0
    %696 = vmatpush1.bf16.msra.mxu0 0
    %697 = vmatprep.subr.bf16.mxu0 0
    %698 = vmatpush1.bf16.msra.mxu0 0
    %699 = vmatprep.subr.bf16.mxu0 0
    %700 = vmatpush1.bf16.msra.mxu0 0
    %701 = vmatprep.subr.bf16.mxu0 0
    %702 = vmatpush1.bf16.msra.mxu0 0
    %703 = vmatprep.subr.bf16.mxu0 0
    %704 = vmatpush1.bf16.msra.mxu0 0
    %705 = vmatprep.subr.bf16.mxu0 0
    %706 = vmatpush1.bf16.msra.mxu0 0
    %707 = vmatprep.mubr.bf16.mxu0 0
    %708 = vmatmul.mubr.bf16.gmra.mrb[0].mxu0 %v623
    %v709 = vpop.f32.mrb[0].mxu0
    %v710 = vadd.f32 0.0, %v709
    %v711 = vpop.f32.mrb[0].mxu0
    %v712 = vpop.f32.mrb[0].mxu0
    %v713 = vpop.f32.mrb[0].mxu0
    %714 = vdwg.mxu0
    %v715 = vadd.f32 %v604, %v669
    %v716 = vadd.f32 %v605, %v671
    %v717 = vadd.f32 %v606, %v710
    %718 = vrot.lane.b32.xlu0 %v284, 115
    %v719 = vpop.permute.xlu0 %718
    %720 = vrot.lane.b32.xlu0 %v285, 115
    %v721 = vpop.permute.xlu0 %720
    %722 = vrot.lane.b32.xlu0 %v286, 115
    %v723 = vpop.permute.xlu0 %722
    %vm724 = vcmp.lt.s32.totalorder %v298, 115
    %v725 = vsel %vm724, %v721, %v723
    %v726 = vsel %vm724, %v719, %v721
    %v727 = vsel %vm724, %v723, %v719
    %s728 = scalar_lea.vmem %s5, 16
    %v729 = vld [vmem:[%s728] sm:$0xf]
    %v730 = vpack.c.bf16 %v726, %v726
    %v731 = vpack.c.bf16 %v725, %v725
    %v732 = vpack.c.bf16 %v727, %v727
    %v734 = vsel %vm308, %v729, 0
    %v737 = vsel %vm312, %v730, 0
    %v740 = vsel %vm312, %v731, 0
    %v743 = vsel %vm312, %v732, 0
    %745 = vmatprep.subr.bf16.mxu0 %v740
    %746 = vmatpush1.bf16.msra.mxu0 %v737
    %747 = vmatprep.subr.bf16.mxu0 0
    %748 = vmatpush1.bf16.msra.mxu0 0
    %749 = vmatprep.subr.bf16.mxu0 0
    %750 = vmatpush1.bf16.msra.mxu0 0
    %751 = vmatprep.subr.bf16.mxu0 0
    %752 = vmatpush1.bf16.msra.mxu0 0
    %753 = vmatprep.subr.bf16.mxu0 0
    %754 = vmatpush1.bf16.msra.mxu0 0
    %755 = vmatprep.subr.bf16.mxu0 0
    %756 = vmatpush1.bf16.msra.mxu0 0
    %757 = vmatprep.subr.bf16.mxu0 0
    %758 = vmatpush1.bf16.msra.mxu0 0
    %759 = vmatprep.subr.bf16.mxu0 0
    %760 = vmatpush1.bf16.msra.mxu0 0
    %761 = vmatprep.subr.bf16.mxu0 0
    %762 = vmatpush1.bf16.msra.mxu0 0
    %763 = vmatprep.subr.bf16.mxu0 0
    %764 = vmatpush1.bf16.msra.mxu0 0
    %765 = vmatprep.subr.bf16.mxu0 0
    %766 = vmatpush1.bf16.msra.mxu0 0
    %767 = vmatprep.subr.bf16.mxu0 0
    %768 = vmatpush1.bf16.msra.mxu0 0
    %769 = vmatprep.subr.bf16.mxu0 0
    %770 = vmatpush1.bf16.msra.mxu0 0
    %771 = vmatprep.subr.bf16.mxu0 0
    %772 = vmatpush1.bf16.msra.mxu0 0
    %773 = vmatprep.subr.bf16.mxu0 0
    %774 = vmatpush1.bf16.msra.mxu0 0
    %775 = vmatprep.subr.bf16.mxu0 0
    %776 = vmatpush1.bf16.msra.mxu0 0
    %777 = vmatprep.mubr.bf16.mxu0 0
    %778 = vmatmul.mubr.bf16.gmra.mrb[0].mxu0 %v734
    %v779 = vpop.f32.mrb[0].mxu0
    %v780 = vadd.f32 0.0, %v779
    %v781 = vpop.f32.mrb[0].mxu0
    %v782 = vadd.f32 0.0, %v781
    %v783 = vpop.f32.mrb[0].mxu0
    %v784 = vpop.f32.mrb[0].mxu0
    %785 = vdwg.mxu0
    %786 = vmatprep.subr.bf16.mxu0 0
    %787 = vmatpush1.bf16.msra.mxu0 %v743
    %788 = vmatprep.subr.bf16.mxu0 0
    %789 = vmatpush1.bf16.msra.mxu0 0
    %790 = vmatprep.subr.bf16.mxu0 0
    %791 = vmatpush1.bf16.msra.mxu0 0
    %792 = vmatprep.subr.bf16.mxu0 0
    %793 = vmatpush1.bf16.msra.mxu0 0
    %794 = vmatprep.subr.bf16.mxu0 0
    %795 = vmatpush1.bf16.msra.mxu0 0
    %796 = vmatprep.subr.bf16.mxu0 0
    %797 = vmatpush1.bf16.msra.mxu0 0
    %798 = vmatprep.subr.bf16.mxu0 0
    %799 = vmatpush1.bf16.msra.mxu0 0
    %800 = vmatprep.subr.bf16.mxu0 0
    %801 = vmatpush1.bf16.msra.mxu0 0
    %802 = vmatprep.subr.bf16.mxu0 0
    %803 = vmatpush1.bf16.msra.mxu0 0
    %804 = vmatprep.subr.bf16.mxu0 0
    %805 = vmatpush1.bf16.msra.mxu0 0
    %806 = vmatprep.subr.bf16.mxu0 0
    %807 = vmatpush1.bf16.msra.mxu0 0
    %808 = vmatprep.subr.bf16.mxu0 0
    %809 = vmatpush1.bf16.msra.mxu0 0
    %810 = vmatprep.subr.bf16.mxu0 0
    %811 = vmatpush1.bf16.msra.mxu0 0
    %812 = vmatprep.subr.bf16.mxu0 0
    %813 = vmatpush1.bf16.msra.mxu0 0
    %814 = vmatprep.subr.bf16.mxu0 0
    %815 = vmatpush1.bf16.msra.mxu0 0
    %816 = vmatprep.subr.bf16.mxu0 0
    %817 = vmatpush1.bf16.msra.mxu0 0
    %818 = vmatprep.mubr.bf16.mxu0 0
    %819 = vmatmul.mubr.bf16.gmra.mrb[0].mxu0 %v734
    %v820 = vpop.f32.mrb[0].mxu0
    %v821 = vadd.f32 0.0, %v820
    %v822 = vpop.f32.mrb[0].mxu0
    %v823 = vpop.f32.mrb[0].mxu0
    %v824 = vpop.f32.mrb[0].mxu0
    %825 = vdwg.mxu0
    %v826 = vadd.f32 %v715, %v780
    %v827 = vadd.f32 %v716, %v782
    %v828 = vadd.f32 %v717, %v821
    %829 = vrot.lane.b32.xlu0 %v284, 114
    %v830 = vpop.permute.xlu0 %829
    %831 = vrot.lane.b32.xlu0 %v285, 114
    %v832 = vpop.permute.xlu0 %831
    %833 = vrot.lane.b32.xlu0 %v286, 114
    %v834 = vpop.permute.xlu0 %833
    %vm835 = vcmp.lt.s32.totalorder %v298, 114
    %v836 = vsel %vm835, %v832, %v834
    %v837 = vsel %vm835, %v830, %v832
    %v838 = vsel %vm835, %v834, %v830
    %s839 = scalar_lea.vmem %s5, 20
    %v840 = vld [vmem:[%s839] sm:$0xf]
    %v841 = vpack.c.bf16 %v837, %v837
    %v842 = vpack.c.bf16 %v836, %v836
    %v843 = vpack.c.bf16 %v838, %v838
    %v845 = vsel %vm308, %v840, 0
    %v848 = vsel %vm312, %v841, 0
    %v851 = vsel %vm312, %v842, 0
    %v854 = vsel %vm312, %v843, 0
    %856 = vmatprep.subr.bf16.mxu0 %v851
    %857 = vmatpush1.bf16.msra.mxu0 %v848
    %858 = vmatprep.subr.bf16.mxu0 0
    %859 = vmatpush1.bf16.msra.mxu0 0
    %860 = vmatprep.subr.bf16.mxu0 0
    %861 = vmatpush1.bf16.msra.mxu0 0
    %862 = vmatprep.subr.bf16.mxu0 0
    %863 = vmatpush1.bf16.msra.mxu0 0
    %864 = vmatprep.subr.bf16.mxu0 0
    %865 = vmatpush1.bf16.msra.mxu0 0
    %866 = vmatprep.subr.bf16.mxu0 0
    %867 = vmatpush1.bf16.msra.mxu0 0
    %868 = vmatprep.subr.bf16.mxu0 0
    %869 = vmatpush1.bf16.msra.mxu0 0
    %870 = vmatprep.subr.bf16.mxu0 0
    %871 = vmatpush1.bf16.msra.mxu0 0
    %872 = vmatprep.subr.bf16.mxu0 0
    %873 = vmatpush1.bf16.msra.mxu0 0
    %874 = vmatprep.subr.bf16.mxu0 0
    %875 = vmatpush1.bf16.msra.mxu0 0
    %876 = vmatprep.subr.bf16.mxu0 0
    %877 = vmatpush1.bf16.msra.mxu0 0
    %878 = vmatprep.subr.bf16.mxu0 0
    %879 = vmatpush1.bf16.msra.mxu0 0
    %880 = vmatprep.subr.bf16.mxu0 0
    %881 = vmatpush1.bf16.msra.mxu0 0
    %882 = vmatprep.subr.bf16.mxu0 0
    %883 = vmatpush1.bf16.msra.mxu0 0
    %884 = vmatprep.subr.bf16.mxu0 0
    %885 = vmatpush1.bf16.msra.mxu0 0
    %886 = vmatprep.subr.bf16.mxu0 0
    %887 = vmatpush1.bf16.msra.mxu0 0
    %888 = vmatprep.mubr.bf16.mxu0 0
    %889 = vmatmul.mubr.bf16.gmra.mrb[0].mxu0 %v845
    %v890 = vpop.f32.mrb[0].mxu0
    %v891 = vadd.f32 0.0, %v890
    %v892 = vpop.f32.mrb[0].mxu0
    %v893 = vadd.f32 0.0, %v892
    %v894 = vpop.f32.mrb[0].mxu0
    %v895 = vpop.f32.mrb[0].mxu0
    %896 = vdwg.mxu0
    %897 = vmatprep.subr.bf16.mxu0 0
    %898 = vmatpush1.bf16.msra.mxu0 %v854
    %899 = vmatprep.subr.bf16.mxu0 0
    %900 = vmatpush1.bf16.msra.mxu0 0
    %901 = vmatprep.subr.bf16.mxu0 0
    %902 = vmatpush1.bf16.msra.mxu0 0
    %903 = vmatprep.subr.bf16.mxu0 0
    %904 = vmatpush1.bf16.msra.mxu0 0
    %905 = vmatprep.subr.bf16.mxu0 0
    %906 = vmatpush1.bf16.msra.mxu0 0
    %907 = vmatprep.subr.bf16.mxu0 0
    %908 = vmatpush1.bf16.msra.mxu0 0
    %909 = vmatprep.subr.bf16.mxu0 0
    %910 = vmatpush1.bf16.msra.mxu0 0
    %911 = vmatprep.subr.bf16.mxu0 0
    %912 = vmatpush1.bf16.msra.mxu0 0
    %913 = vmatprep.subr.bf16.mxu0 0
    %914 = vmatpush1.bf16.msra.mxu0 0
    %915 = vmatprep.subr.bf16.mxu0 0
    %916 = vmatpush1.bf16.msra.mxu0 0
    %917 = vmatprep.subr.bf16.mxu0 0
    %918 = vmatpush1.bf16.msra.mxu0 0
    %919 = vmatprep.subr.bf16.mxu0 0
    %920 = vmatpush1.bf16.msra.mxu0 0
    %921 = vmatprep.subr.bf16.mxu0 0
    %922 = vmatpush1.bf16.msra.mxu0 0
    %923 = vmatprep.subr.bf16.mxu0 0
    %924 = vmatpush1.bf16.msra.mxu0 0
    %925 = vmatprep.subr.bf16.mxu0 0
    %926 = vmatpush1.bf16.msra.mxu0 0
    %927 = vmatprep.subr.bf16.mxu0 0
    %928 = vmatpush1.bf16.msra.mxu0 0
    %929 = vmatprep.mubr.bf16.mxu0 0
    %930 = vmatmul.mubr.bf16.gmra.mrb[0].mxu0 %v845
    %v931 = vpop.f32.mrb[0].mxu0
    %v932 = vadd.f32 0.0, %v931
    %v933 = vpop.f32.mrb[0].mxu0
    %v934 = vpop.f32.mrb[0].mxu0
    %v935 = vpop.f32.mrb[0].mxu0
    %936 = vdwg.mxu0
    %v937 = vadd.f32 %v826, %v891
    %v938 = vadd.f32 %v827, %v893
    %v939 = vadd.f32 %v828, %v932
    %940 = vrot.lane.b32.xlu0 %v284, 104
    %v941 = vpop.permute.xlu0 %940
    %942 = vrot.lane.b32.xlu0 %v285, 104
    %v943 = vpop.permute.xlu0 %942
    %944 = vrot.lane.b32.xlu0 %v286, 104
    %v945 = vpop.permute.xlu0 %944
    %vm946 = vcmp.lt.s32.totalorder %v298, 104
    %v947 = vsel %vm946, %v943, %v945
    %v948 = vsel %vm946, %v941, %v943
    %v949 = vsel %vm946, %v945, %v941
    %s950 = scalar_lea.vmem %s5, 24
    %v951 = vld [vmem:[%s950] sm:$0xf]
    %v952 = vpack.c.bf16 %v948, %v948
    %v953 = vpack.c.bf16 %v947, %v947
    %v954 = vpack.c.bf16 %v949, %v949
    %v956 = vsel %vm308, %v951, 0
    %v959 = vsel %vm312, %v952, 0
    %v962 = vsel %vm312, %v953, 0
    %v965 = vsel %vm312, %v954, 0
    %967 = vmatprep.subr.bf16.mxu0 %v962
    %968 = vmatpush1.bf16.msra.mxu0 %v959
    %969 = vmatprep.subr.bf16.mxu0 0
    %970 = vmatpush1.bf16.msra.mxu0 0
    %971 = vmatprep.subr.bf16.mxu0 0
    %972 = vmatpush1.bf16.msra.mxu0 0
    %973 = vmatprep.subr.bf16.mxu0 0
    %974 = vmatpush1.bf16.msra.mxu0 0
    %975 = vmatprep.subr.bf16.mxu0 0
    %976 = vmatpush1.bf16.msra.mxu0 0
    %977 = vmatprep.subr.bf16.mxu0 0
    %978 = vmatpush1.bf16.msra.mxu0 0
    %979 = vmatprep.subr.bf16.mxu0 0
    %980 = vmatpush1.bf16.msra.mxu0 0
    %981 = vmatprep.subr.bf16.mxu0 0
    %982 = vmatpush1.bf16.msra.mxu0 0
    %983 = vmatprep.subr.bf16.mxu0 0
    %984 = vmatpush1.bf16.msra.mxu0 0
    %985 = vmatprep.subr.bf16.mxu0 0
    %986 = vmatpush1.bf16.msra.mxu0 0
    %987 = vmatprep.subr.bf16.mxu0 0
    %988 = vmatpush1.bf16.msra.mxu0 0
    %989 = vmatprep.subr.bf16.mxu0 0
    %990 = vmatpush1.bf16.msra.mxu0 0
    %991 = vmatprep.subr.bf16.mxu0 0
    %992 = vmatpush1.bf16.msra.mxu0 0
    %993 = vmatprep.subr.bf16.mxu0 0
    %994 = vmatpush1.bf16.msra.mxu0 0
    %995 = vmatprep.subr.bf16.mxu0 0
    %996 = vmatpush1.bf16.msra.mxu0 0
    %997 = vmatprep.subr.bf16.mxu0 0
    %998 = vmatpush1.bf16.msra.mxu0 0
    %999 = vmatprep.mubr.bf16.mxu0 0
    %1000 = vmatmul.mubr.bf16.gmra.mrb[0].mxu0 %v956
    %v1001 = vpop.f32.mrb[0].mxu0
    %v1002 = vadd.f32 0.0, %v1001
    %v1003 = vpop.f32.mrb[0].mxu0
    %v1004 = vadd.f32 0.0, %v1003
    %v1005 = vpop.f32.mrb[0].mxu0
    %v1006 = vpop.f32.mrb[0].mxu0
    %1007 = vdwg.mxu0
    %1008 = vmatprep.subr.bf16.mxu0 0
    %1009 = vmatpush1.bf16.msra.mxu0 %v965
    %1010 = vmatprep.subr.bf16.mxu0 0
    %1011 = vmatpush1.bf16.msra.mxu0 0
    %1012 = vmatprep.subr.bf16.mxu0 0
    %1013 = vmatpush1.bf16.msra.mxu0 0
    %1014 = vmatprep.subr.bf16.mxu0 0
    %1015 = vmatpush1.bf16.msra.mxu0 0
    %1016 = vmatprep.subr.bf16.mxu0 0
    %1017 = vmatpush1.bf16.msra.mxu0 0
    %1018 = vmatprep.subr.bf16.mxu0 0
    %1019 = vmatpush1.bf16.msra.mxu0 0
    %1020 = vmatprep.subr.bf16.mxu0 0
    %1021 = vmatpush1.bf16.msra.mxu0 0
    %1022 = vmatprep.subr.bf16.mxu0 0
    %1023 = vmatpush1.bf16.msra.mxu0 0
    %1024 = vmatprep.subr.bf16.mxu0 0
    %1025 = vmatpush1.bf16.msra.mxu0 0
    %1026 = vmatprep.subr.bf16.mxu0 0
    %1027 = vmatpush1.bf16.msra.mxu0 0
    %1028 = vmatprep.subr.bf16.mxu0 0
    %1029 = vmatpush1.bf16.msra.mxu0 0
    %1030 = vmatprep.subr.bf16.mxu0 0
    %1031 = vmatpush1.bf16.msra.mxu0 0
    %1032 = vmatprep.subr.bf16.mxu0 0
    %1033 = vmatpush1.bf16.msra.mxu0 0
    %1034 = vmatprep.subr.bf16.mxu0 0
    %1035 = vmatpush1.bf16.msra.mxu0 0
    %1036 = vmatprep.subr.bf16.mxu0 0
    %1037 = vmatpush1.bf16.msra.mxu0 0
    %1038 = vmatprep.subr.bf16.mxu0 0
    %1039 = vmatpush1.bf16.msra.mxu0 0
    %1040 = vmatprep.mubr.bf16.mxu0 0
    %1041 = vmatmul.mubr.bf16.gmra.mrb[0].mxu0 %v956
    %v1042 = vpop.f32.mrb[0].mxu0
    %v1043 = vadd.f32 0.0, %v1042
    %v1044 = vpop.f32.mrb[0].mxu0
    %v1045 = vpop.f32.mrb[0].mxu0
    %v1046 = vpop.f32.mrb[0].mxu0
    %1047 = vdwg.mxu0
    %v1048 = vadd.f32 %v937, %v1002
    %v1049 = vadd.f32 %v938, %v1004
    %v1050 = vadd.f32 %v939, %v1043
    %1051 = vrot.lane.b32.xlu0 %v284, 103
    %v1052 = vpop.permute.xlu0 %1051
    %1053 = vrot.lane.b32.xlu0 %v285, 103
    %v1054 = vpop.permute.xlu0 %1053
    %1055 = vrot.lane.b32.xlu0 %v286, 103
    %v1056 = vpop.permute.xlu0 %1055
    %vm1057 = vcmp.lt.s32.totalorder %v298, 103
    %v1058 = vsel %vm1057, %v1054, %v1056
    %v1059 = vsel %vm1057, %v1052, %v1054
    %v1060 = vsel %vm1057, %v1056, %v1052
    %s1061 = scalar_lea.vmem %s5, 28
    %v1062 = vld [vmem:[%s1061] sm:$0xf]
    %v1063 = vpack.c.bf16 %v1059, %v1059
    %v1064 = vpack.c.bf16 %v1058, %v1058
    %v1065 = vpack.c.bf16 %v1060, %v1060
    %v1067 = vsel %vm308, %v1062, 0
    %v1070 = vsel %vm312, %v1063, 0
    %v1073 = vsel %vm312, %v1064, 0
    %v1076 = vsel %vm312, %v1065, 0
    %1078 = vmatprep.subr.bf16.mxu0 %v1073
    %1079 = vmatpush1.bf16.msra.mxu0 %v1070
    %1080 = vmatprep.subr.bf16.mxu0 0
    %1081 = vmatpush1.bf16.msra.mxu0 0
    %1082 = vmatprep.subr.bf16.mxu0 0
    %1083 = vmatpush1.bf16.msra.mxu0 0
    %1084 = vmatprep.subr.bf16.mxu0 0
    %1085 = vmatpush1.bf16.msra.mxu0 0
    %1086 = vmatprep.subr.bf16.mxu0 0
    %1087 = vmatpush1.bf16.msra.mxu0 0
    %1088 = vmatprep.subr.bf16.mxu0 0
    %1089 = vmatpush1.bf16.msra.mxu0 0
    %1090 = vmatprep.subr.bf16.mxu0 0
    %1091 = vmatpush1.bf16.msra.mxu0 0
    %1092 = vmatprep.subr.bf16.mxu0 0
    %1093 = vmatpush1.bf16.msra.mxu0 0
    %1094 = vmatprep.subr.bf16.mxu0 0
    %1095 = vmatpush1.bf16.msra.mxu0 0
    %1096 = vmatprep.subr.bf16.mxu0 0
    %1097 = vmatpush1.bf16.msra.mxu0 0
    %1098 = vmatprep.subr.bf16.mxu0 0
    %1099 = vmatpush1.bf16.msra.mxu0 0
    %1100 = vmatprep.subr.bf16.mxu0 0
    %1101 = vmatpush1.bf16.msra.mxu0 0
    %1102 = vmatprep.subr.bf16.mxu0 0
    %1103 = vmatpush1.bf16.msra.mxu0 0
    %1104 = vmatprep.subr.bf16.mxu0 0
    %1105 = vmatpush1.bf16.msra.mxu0 0
    %1106 = vmatprep.subr.bf16.mxu0 0
    %1107 = vmatpush1.bf16.msra.mxu0 0
    %1108 = vmatprep.subr.bf16.mxu0 0
    %1109 = vmatpush1.bf16.msra.mxu0 0
    %1110 = vmatprep.mubr.bf16.mxu0 0
    %1111 = vmatmul.mubr.bf16.gmra.mrb[0].mxu0 %v1067
    %v1112 = vpop.f32.mrb[0].mxu0
    %v1113 = vadd.f32 0.0, %v1112
    %v1114 = vpop.f32.mrb[0].mxu0
    %v1115 = vadd.f32 0.0, %v1114
    %v1116 = vpop.f32.mrb[0].mxu0
    %v1117 = vpop.f32.mrb[0].mxu0
    %1118 = vdwg.mxu0
    %1119 = vmatprep.subr.bf16.mxu0 0
    %1120 = vmatpush1.bf16.msra.mxu0 %v1076
    %1121 = vmatprep.subr.bf16.mxu0 0
    %1122 = vmatpush1.bf16.msra.mxu0 0
    %1123 = vmatprep.subr.bf16.mxu0 0
    %1124 = vmatpush1.bf16.msra.mxu0 0
    %1125 = vmatprep.subr.bf16.mxu0 0
    %1126 = vmatpush1.bf16.msra.mxu0 0
    %1127 = vmatprep.subr.bf16.mxu0 0
    %1128 = vmatpush1.bf16.msra.mxu0 0
    %1129 = vmatprep.subr.bf16.mxu0 0
    %1130 = vmatpush1.bf16.msra.mxu0 0
    %1131 = vmatprep.subr.bf16.mxu0 0
    %1132 = vmatpush1.bf16.msra.mxu0 0
    %1133 = vmatprep.subr.bf16.mxu0 0
    %1134 = vmatpush1.bf16.msra.mxu0 0
    %1135 = vmatprep.subr.bf16.mxu0 0
    %1136 = vmatpush1.bf16.msra.mxu0 0
    %1137 = vmatprep.subr.bf16.mxu0 0
    %1138 = vmatpush1.bf16.msra.mxu0 0
    %1139 = vmatprep.subr.bf16.mxu0 0
    %1140 = vmatpush1.bf16.msra.mxu0 0
    %1141 = vmatprep.subr.bf16.mxu0 0
    %1142 = vmatpush1.bf16.msra.mxu0 0
    %1143 = vmatprep.subr.bf16.mxu0 0
    %1144 = vmatpush1.bf16.msra.mxu0 0
    %1145 = vmatprep.subr.bf16.mxu0 0
    %1146 = vmatpush1.bf16.msra.mxu0 0
    %1147 = vmatprep.subr.bf16.mxu0 0
    %1148 = vmatpush1.bf16.msra.mxu0 0
    %1149 = vmatprep.subr.bf16.mxu0 0
    %1150 = vmatpush1.bf16.msra.mxu0 0
    %1151 = vmatprep.mubr.bf16.mxu0 0
    %1152 = vmatmul.mubr.bf16.gmra.mrb[0].mxu0 %v1067
    %v1153 = vpop.f32.mrb[0].mxu0
    %v1154 = vadd.f32 0.0, %v1153
    %v1155 = vpop.f32.mrb[0].mxu0
    %v1156 = vpop.f32.mrb[0].mxu0
    %v1157 = vpop.f32.mrb[0].mxu0
    %1158 = vdwg.mxu0
    %v1159 = vadd.f32 %v1048, %v1113
    %v1160 = vadd.f32 %v1049, %v1115
    %v1161 = vadd.f32 %v1050, %v1154
    %1162 = vrot.lane.b32.xlu0 %v284, 102
    %v1163 = vpop.permute.xlu0 %1162
    %1164 = vrot.lane.b32.xlu0 %v285, 102
    %v1165 = vpop.permute.xlu0 %1164
    %1166 = vrot.lane.b32.xlu0 %v286, 102
    %v1167 = vpop.permute.xlu0 %1166
    %vm1168 = vcmp.lt.s32.totalorder %v298, 102
    %v1169 = vsel %vm1168, %v1165, %v1167
    %v1170 = vsel %vm1168, %v1163, %v1165
    %v1171 = vsel %vm1168, %v1167, %v1163
    %s1172 = scalar_lea.vmem %s5, 32
    %v1173 = vld [vmem:[%s1172] sm:$0xf]
    %v1174 = vpack.c.bf16 %v1170, %v1170
    %v1175 = vpack.c.bf16 %v1169, %v1169
    %v1176 = vpack.c.bf16 %v1171, %v1171
    %v1178 = vsel %vm308, %v1173, 0
    %v1181 = vsel %vm312, %v1174, 0
    %v1184 = vsel %vm312, %v1175, 0
    %v1187 = vsel %vm312, %v1176, 0
    %1189 = vmatprep.subr.bf16.mxu0 %v1184
    %1190 = vmatpush1.bf16.msra.mxu0 %v1181
    %1191 = vmatprep.subr.bf16.mxu0 0
    %1192 = vmatpush1.bf16.msra.mxu0 0
    %1193 = vmatprep.subr.bf16.mxu0 0
    %1194 = vmatpush1.bf16.msra.mxu0 0
    %1195 = vmatprep.subr.bf16.mxu0 0
    %1196 = vmatpush1.bf16.msra.mxu0 0
    %1197 = vmatprep.subr.bf16.mxu0 0
    %1198 = vmatpush1.bf16.msra.mxu0 0
    %1199 = vmatprep.subr.bf16.mxu0 0
    %1200 = vmatpush1.bf16.msra.mxu0 0
    %1201 = vmatprep.subr.bf16.mxu0 0
    %1202 = vmatpush1.bf16.msra.mxu0 0
    %1203 = vmatprep.subr.bf16.mxu0 0
    %1204 = vmatpush1.bf16.msra.mxu0 0
    %1205 = vmatprep.subr.bf16.mxu0 0
    %1206 = vmatpush1.bf16.msra.mxu0 0
    %1207 = vmatprep.subr.bf16.mxu0 0
    %1208 = vmatpush1.bf16.msra.mxu0 0
    %1209 = vmatprep.subr.bf16.mxu0 0
    %1210 = vmatpush1.bf16.msra.mxu0 0
    %1211 = vmatprep.subr.bf16.mxu0 0
    %1212 = vmatpush1.bf16.msra.mxu0 0
    %1213 = vmatprep.subr.bf16.mxu0 0
    %1214 = vmatpush1.bf16.msra.mxu0 0
    %1215 = vmatprep.subr.bf16.mxu0 0
    %1216 = vmatpush1.bf16.msra.mxu0 0
    %1217 = vmatprep.subr.bf16.mxu0 0
    %1218 = vmatpush1.bf16.msra.mxu0 0
    %1219 = vmatprep.subr.bf16.mxu0 0
    %1220 = vmatpush1.bf16.msra.mxu0 0
    %1221 = vmatprep.mubr.bf16.mxu0 0
    %1222 = vmatmul.mubr.bf16.gmra.mrb[0].mxu0 %v1178
    %v1223 = vpop.f32.mrb[0].mxu0
    %v1224 = vadd.f32 0.0, %v1223
    %v1225 = vpop.f32.mrb[0].mxu0
    %v1226 = vadd.f32 0.0, %v1225
    %v1227 = vpop.f32.mrb[0].mxu0
    %v1228 = vpop.f32.mrb[0].mxu0
    %1229 = vdwg.mxu0
    %1230 = vmatprep.subr.bf16.mxu0 0
    %1231 = vmatpush1.bf16.msra.mxu0 %v1187
    %1232 = vmatprep.subr.bf16.mxu0 0
    %1233 = vmatpush1.bf16.msra.mxu0 0
    %1234 = vmatprep.subr.bf16.mxu0 0
    %1235 = vmatpush1.bf16.msra.mxu0 0
    %1236 = vmatprep.subr.bf16.mxu0 0
    %1237 = vmatpush1.bf16.msra.mxu0 0
    %1238 = vmatprep.subr.bf16.mxu0 0
    %1239 = vmatpush1.bf16.msra.mxu0 0
    %1240 = vmatprep.subr.bf16.mxu0 0
    %1241 = vmatpush1.bf16.msra.mxu0 0
    %1242 = vmatprep.subr.bf16.mxu0 0
    %1243 = vmatpush1.bf16.msra.mxu0 0
    %1244 = vmatprep.subr.bf16.mxu0 0
    %1245 = vmatpush1.bf16.msra.mxu0 0
    %1246 = vmatprep.subr.bf16.mxu0 0
    %1247 = vmatpush1.bf16.msra.mxu0 0
    %1248 = vmatprep.subr.bf16.mxu0 0
    %1249 = vmatpush1.bf16.msra.mxu0 0
    %1250 = vmatprep.subr.bf16.mxu0 0
    %1251 = vmatpush1.bf16.msra.mxu0 0
    %1252 = vmatprep.subr.bf16.mxu0 0
    %1253 = vmatpush1.bf16.msra.mxu0 0
    %1254 = vmatprep.subr.bf16.mxu0 0
    %1255 = vmatpush1.bf16.msra.mxu0 0
    %1256 = vmatprep.subr.bf16.mxu0 0
    %1257 = vmatpush1.bf16.msra.mxu0 0
    %1258 = vmatprep.subr.bf16.mxu0 0
    %1259 = vmatpush1.bf16.msra.mxu0 0
    %1260 = vmatprep.subr.bf16.mxu0 0
    %1261 = vmatpush1.bf16.msra.mxu0 0
    %1262 = vmatprep.mubr.bf16.mxu0 0
    %1263 = vmatmul.mubr.bf16.gmra.mrb[0].mxu0 %v1178
    %v1264 = vpop.f32.mrb[0].mxu0
    %v1265 = vadd.f32 0.0, %v1264
    %v1266 = vpop.f32.mrb[0].mxu0
    %v1267 = vpop.f32.mrb[0].mxu0
    %v1268 = vpop.f32.mrb[0].mxu0
    %1269 = vdwg.mxu0
    %v1270 = vadd.f32 %v1159, %v1224
    %v1271 = vadd.f32 %v1160, %v1226
    %v1272 = vadd.f32 %v1161, %v1265
    %v1273 = vld [vmem:[%s6] sm:$0xff]
    %1275 = vset.pattern.permute.xlu0 0
    %1276 = vperm.xlu0 %1275, %v1273
    %v1277 = vpop.permute.xlu0 %1276
    %v1279 = vadd.f32 %v1270, %v1277
    %v1280 = vadd.f32 %v1271, %v1277
    %v1281 = vadd.f32 %v1272, %v1277
    %v1282 = vmax.f32 %v1279, 0.0
    %v1283 = vmax.f32 %v1280, 0.0
    %v1284 = vmax.f32 %v1281, 0.0
    %v1285 = vpack.c.bf16 %v1282, %v1282
    %v1286 = vpack.c.bf16 %v1283, %v1283
    %v1287 = vpack.c.bf16 %v1284, %v1284
    %v1289 = vsel %vm83, %v1285, 0
    %v1292 = vsel %vm83, %v1286, 0
    %v1295 = vsel %vm83, %v1287, 0
    %1297 = vmatprep.subr.bf16.mxu0 %v1292
    %1298 = vmatpush1.bf16.msra.mxu0 %v1289
    %1299 = vmatprep.subr.bf16.mxu0 0
    %1300 = vmatpush1.bf16.msra.mxu0 0
    %1301 = vmatprep.subr.bf16.mxu0 0
    %1302 = vmatpush1.bf16.msra.mxu0 0
    %1303 = vmatprep.subr.bf16.mxu0 0
    %1304 = vmatpush1.bf16.msra.mxu0 0
    %1305 = vmatprep.subr.bf16.mxu0 0
    %1306 = vmatpush1.bf16.msra.mxu0 0
    %1307 = vmatprep.subr.bf16.mxu0 0
    %1308 = vmatpush1.bf16.msra.mxu0 0
    %1309 = vmatprep.subr.bf16.mxu0 0
    %1310 = vmatpush1.bf16.msra.mxu0 0
    %1311 = vmatprep.subr.bf16.mxu0 0
    %1312 = vmatpush1.bf16.msra.mxu0 0
    %1313 = vmatprep.subr.bf16.mxu0 0
    %1314 = vmatpush1.bf16.msra.mxu0 0
    %1315 = vmatprep.subr.bf16.mxu0 0
    %1316 = vmatpush1.bf16.msra.mxu0 0
    %1317 = vmatprep.subr.bf16.mxu0 0
    %1318 = vmatpush1.bf16.msra.mxu0 0
    %1319 = vmatprep.subr.bf16.mxu0 0
    %1320 = vmatpush1.bf16.msra.mxu0 0
    %1321 = vmatprep.subr.bf16.mxu0 0
    %1322 = vmatpush1.bf16.msra.mxu0 0
    %1323 = vmatprep.subr.bf16.mxu0 0
    %1324 = vmatpush1.bf16.msra.mxu0 0
    %1325 = vmatprep.subr.bf16.mxu0 0
    %1326 = vmatpush1.bf16.msra.mxu0 0
    %1327 = vmatprep.subr.bf16.mxu0 0
    %1328 = vmatpush1.bf16.msra.mxu0 0
    %1329 = vmatprep.mubr.bf16.mxu0 0
    %1330 = vmatmul.mubr.bf16.gmra.mrb[0].mxu0 %v192
    %v1331 = vpop.f32.mrb[0].mxu0
    %v1332 = vadd.f32 %v188, %v1331
    %v1333 = vpop.f32.mrb[0].mxu0
    %v1334 = vadd.f32 %v188, %v1333
    %v1335 = vpop.f32.mrb[0].mxu0
    %v1336 = vpop.f32.mrb[0].mxu0
    %1337 = vdwg.mxu0
    %1338 = vmatprep.subr.bf16.mxu0 0
    %1339 = vmatpush1.bf16.msra.mxu0 %v1295
    %1340 = vmatprep.subr.bf16.mxu0 0
    %1341 = vmatpush1.bf16.msra.mxu0 0
    %1342 = vmatprep.subr.bf16.mxu0 0
    %1343 = vmatpush1.bf16.msra.mxu0 0
    %1344 = vmatprep.subr.bf16.mxu0 0
    %1345 = vmatpush1.bf16.msra.mxu0 0
    %1346 = vmatprep.subr.bf16.mxu0 0
    %1347 = vmatpush1.bf16.msra.mxu0 0
    %1348 = vmatprep.subr.bf16.mxu0 0
    %1349 = vmatpush1.bf16.msra.mxu0 0
    %1350 = vmatprep.subr.bf16.mxu0 0
    %1351 = vmatpush1.bf16.msra.mxu0 0
    %1352 = vmatprep.subr.bf16.mxu0 0
    %1353 = vmatpush1.bf16.msra.mxu0 0
    %1354 = vmatprep.subr.bf16.mxu0 0
    %1355 = vmatpush1.bf16.msra.mxu0 0
    %1356 = vmatprep.subr.bf16.mxu0 0
    %1357 = vmatpush1.bf16.msra.mxu0 0
    %1358 = vmatprep.subr.bf16.mxu0 0
    %1359 = vmatpush1.bf16.msra.mxu0 0
    %1360 = vmatprep.subr.bf16.mxu0 0
    %1361 = vmatpush1.bf16.msra.mxu0 0
    %1362 = vmatprep.subr.bf16.mxu0 0
    %1363 = vmatpush1.bf16.msra.mxu0 0
    %1364 = vmatprep.subr.bf16.mxu0 0
    %1365 = vmatpush1.bf16.msra.mxu0 0
    %1366 = vmatprep.subr.bf16.mxu0 0
    %1367 = vmatpush1.bf16.msra.mxu0 0
    %1368 = vmatprep.subr.bf16.mxu0 0
    %1369 = vmatpush1.bf16.msra.mxu0 0
    %1370 = vmatprep.mubr.bf16.mxu0 0
    %1371 = vmatmul.mubr.bf16.gmra.mrb[0].mxu0 %v192
    %v1372 = vpop.f32.mrb[0].mxu0
    %v1373 = vadd.f32 %v188, %v1372
    %v1374 = vpop.f32.mrb[0].mxu0
    %v1375 = vpop.f32.mrb[0].mxu0
    %v1376 = vpop.f32.mrb[0].mxu0
    %1377 = vdwg.mxu0
    %v1378 = vmax.f32 %v1332, 0.0
    %v1379 = vmax.f32 %v1334, 0.0
    %v1380 = vmax.f32 %v1373, 0.0
    %v1381 = vpack.c.bf16 %v1378, %v1378
    %v1382 = vpack.c.bf16 %v1379, %v1379
    %v1383 = vpack.c.bf16 %v1380, %v1380
    %1384 = vrot.lane.b32.xlu0 %v1378, 127
    %v1385 = vpop.permute.xlu0 %1384
    %1386 = vrot.lane.b32.xlu0 %v1379, 127
    %v1387 = vpop.permute.xlu0 %1386
    %1388 = vrot.lane.b32.xlu0 %v1380, 127
    %v1389 = vpop.permute.xlu0 %1388
    %v1390 = vsel %vm299, %v1387, %v1389
    %v1391 = vsel %vm299, %v1385, %v1387
    %v1392 = vsel %vm299, %v1389, %v1385
    %v1393 = vpack.c.bf16 %v1391, %v1391
    %v1394 = vpack.c.bf16 %v1390, %v1390
    %v1395 = vpack.c.bf16 %v1392, %v1392
    %v1397 = vsel %vm312, %v1393, 0
    %v1400 = vsel %vm312, %v1394, 0
    %v1403 = vsel %vm312, %v1395, 0
    %1405 = vmatprep.subr.bf16.mxu0 %v1400
    %1406 = vmatpush1.bf16.msra.mxu0 %v1397
    %1407 = vmatprep.subr.bf16.mxu0 0
    %1408 = vmatpush1.bf16.msra.mxu0 0
    %1409 = vmatprep.subr.bf16.mxu0 0
    %1410 = vmatpush1.bf16.msra.mxu0 0
    %1411 = vmatprep.subr.bf16.mxu0 0
    %1412 = vmatpush1.bf16.msra.mxu0 0
    %1413 = vmatprep.subr.bf16.mxu0 0
    %1414 = vmatpush1.bf16.msra.mxu0 0
    %1415 = vmatprep.subr.bf16.mxu0 0
    %1416 = vmatpush1.bf16.msra.mxu0 0
    %1417 = vmatprep.subr.bf16.mxu0 0
    %1418 = vmatpush1.bf16.msra.mxu0 0
    %1419 = vmatprep.subr.bf16.mxu0 0
    %1420 = vmatpush1.bf16.msra.mxu0 0
    %1421 = vmatprep.subr.bf16.mxu0 0
    %1422 = vmatpush1.bf16.msra.mxu0 0
    %1423 = vmatprep.subr.bf16.mxu0 0
    %1424 = vmatpush1.bf16.msra.mxu0 0
    %1425 = vmatprep.subr.bf16.mxu0 0
    %1426 = vmatpush1.bf16.msra.mxu0 0
    %1427 = vmatprep.subr.bf16.mxu0 0
    %1428 = vmatpush1.bf16.msra.mxu0 0
    %1429 = vmatprep.subr.bf16.mxu0 0
    %1430 = vmatpush1.bf16.msra.mxu0 0
    %1431 = vmatprep.subr.bf16.mxu0 0
    %1432 = vmatpush1.bf16.msra.mxu0 0
    %1433 = vmatprep.subr.bf16.mxu0 0
    %1434 = vmatpush1.bf16.msra.mxu0 0
    %1435 = vmatprep.subr.bf16.mxu0 0
    %1436 = vmatpush1.bf16.msra.mxu0 0
    %1437 = vmatprep.mubr.bf16.mxu0 0
    %1438 = vmatmul.mubr.bf16.gmra.mrb[0].mxu0 %v310
    %v1439 = vpop.f32.mrb[0].mxu0
    %v1440 = vadd.f32 0.0, %v1439
    %v1441 = vpop.f32.mrb[0].mxu0
    %v1442 = vadd.f32 0.0, %v1441
    %v1443 = vpop.f32.mrb[0].mxu0
    %v1444 = vpop.f32.mrb[0].mxu0
    %1445 = vdwg.mxu0
    %1446 = vmatprep.subr.bf16.mxu0 0
    %1447 = vmatpush1.bf16.msra.mxu0 %v1403
    %1448 = vmatprep.subr.bf16.mxu0 0
    %1449 = vmatpush1.bf16.msra.mxu0 0
    %1450 = vmatprep.subr.bf16.mxu0 0
    %1451 = vmatpush1.bf16.msra.mxu0 0
    %1452 = vmatprep.subr.bf16.mxu0 0
    %1453 = vmatpush1.bf16.msra.mxu0 0
    %1454 = vmatprep.subr.bf16.mxu0 0
    %1455 = vmatpush1.bf16.msra.mxu0 0
    %1456 = vmatprep.subr.bf16.mxu0 0
    %1457 = vmatpush1.bf16.msra.mxu0 0
    %1458 = vmatprep.subr.bf16.mxu0 0
    %1459 = vmatpush1.bf16.msra.mxu0 0
    %1460 = vmatprep.subr.bf16.mxu0 0
    %1461 = vmatpush1.bf16.msra.mxu0 0
    %1462 = vmatprep.subr.bf16.mxu0 0
    %1463 = vmatpush1.bf16.msra.mxu0 0
    %1464 = vmatprep.subr.bf16.mxu0 0
    %1465 = vmatpush1.bf16.msra.mxu0 0
    %1466 = vmatprep.subr.bf16.mxu0 0
    %1467 = vmatpush1.bf16.msra.mxu0 0
    %1468 = vmatprep.subr.bf16.mxu0 0
    %1469 = vmatpush1.bf16.msra.mxu0 0
    %1470 = vmatprep.subr.bf16.mxu0 0
    %1471 = vmatpush1.bf16.msra.mxu0 0
    %1472 = vmatprep.subr.bf16.mxu0 0
    %1473 = vmatpush1.bf16.msra.mxu0 0
    %1474 = vmatprep.subr.bf16.mxu0 0
    %1475 = vmatpush1.bf16.msra.mxu0 0
    %1476 = vmatprep.subr.bf16.mxu0 0
    %1477 = vmatpush1.bf16.msra.mxu0 0
    %1478 = vmatprep.mubr.bf16.mxu0 0
    %1479 = vmatmul.mubr.bf16.gmra.mrb[0].mxu0 %v310
    %v1480 = vpop.f32.mrb[0].mxu0
    %v1481 = vadd.f32 0.0, %v1480
    %v1482 = vpop.f32.mrb[0].mxu0
    %v1483 = vpop.f32.mrb[0].mxu0
    %v1484 = vpop.f32.mrb[0].mxu0
    %1485 = vdwg.mxu0
    %v1487 = vsel %vm312, %v1381, 0
    %v1490 = vsel %vm312, %v1382, 0
    %v1493 = vsel %vm312, %v1383, 0
    %1495 = vmatprep.subr.bf16.mxu0 %v1490
    %1496 = vmatpush1.bf16.msra.mxu0 %v1487
    %1497 = vmatprep.subr.bf16.mxu0 0
    %1498 = vmatpush1.bf16.msra.mxu0 0
    %1499 = vmatprep.subr.bf16.mxu0 0
    %1500 = vmatpush1.bf16.msra.mxu0 0
    %1501 = vmatprep.subr.bf16.mxu0 0
    %1502 = vmatpush1.bf16.msra.mxu0 0
    %1503 = vmatprep.subr.bf16.mxu0 0
    %1504 = vmatpush1.bf16.msra.mxu0 0
    %1505 = vmatprep.subr.bf16.mxu0 0
    %1506 = vmatpush1.bf16.msra.mxu0 0
    %1507 = vmatprep.subr.bf16.mxu0 0
    %1508 = vmatpush1.bf16.msra.mxu0 0
    %1509 = vmatprep.subr.bf16.mxu0 0
    %1510 = vmatpush1.bf16.msra.mxu0 0
    %1511 = vmatprep.subr.bf16.mxu0 0
    %1512 = vmatpush1.bf16.msra.mxu0 0
    %1513 = vmatprep.subr.bf16.mxu0 0
    %1514 = vmatpush1.bf16.msra.mxu0 0
    %1515 = vmatprep.subr.bf16.mxu0 0
    %1516 = vmatpush1.bf16.msra.mxu0 0
    %1517 = vmatprep.subr.bf16.mxu0 0
    %1518 = vmatpush1.bf16.msra.mxu0 0
    %1519 = vmatprep.subr.bf16.mxu0 0
    %1520 = vmatpush1.bf16.msra.mxu0 0
    %1521 = vmatprep.subr.bf16.mxu0 0
    %1522 = vmatpush1.bf16.msra.mxu0 0
    %1523 = vmatprep.subr.bf16.mxu0 0
    %1524 = vmatpush1.bf16.msra.mxu0 0
    %1525 = vmatprep.subr.bf16.mxu0 0
    %1526 = vmatpush1.bf16.msra.mxu0 0
    %1527 = vmatprep.mubr.bf16.mxu0 0
    %1528 = vmatmul.mubr.bf16.gmra.mrb[0].mxu0 %v404
    %v1529 = vpop.f32.mrb[0].mxu0
    %v1530 = vadd.f32 %v1440, %v1529
    %v1531 = vpop.f32.mrb[0].mxu0
    %v1532 = vadd.f32 %v1442, %v1531
    %v1533 = vpop.f32.mrb[0].mxu0
    %v1534 = vpop.f32.mrb[0].mxu0
    %1535 = vdwg.mxu0
    %1536 = vmatprep.subr.bf16.mxu0 0
    %1537 = vmatpush1.bf16.msra.mxu0 %v1493
    %1538 = vmatprep.subr.bf16.mxu0 0
    %1539 = vmatpush1.bf16.msra.mxu0 0
    %1540 = vmatprep.subr.bf16.mxu0 0
    %1541 = vmatpush1.bf16.msra.mxu0 0
    %1542 = vmatprep.subr.bf16.mxu0 0
    %1543 = vmatpush1.bf16.msra.mxu0 0
    %1544 = vmatprep.subr.bf16.mxu0 0
    %1545 = vmatpush1.bf16.msra.mxu0 0
    %1546 = vmatprep.subr.bf16.mxu0 0
    %1547 = vmatpush1.bf16.msra.mxu0 0
    %1548 = vmatprep.subr.bf16.mxu0 0
    %1549 = vmatpush1.bf16.msra.mxu0 0
    %1550 = vmatprep.subr.bf16.mxu0 0
    %1551 = vmatpush1.bf16.msra.mxu0 0
    %1552 = vmatprep.subr.bf16.mxu0 0
    %1553 = vmatpush1.bf16.msra.mxu0 0
    %1554 = vmatprep.subr.bf16.mxu0 0
    %1555 = vmatpush1.bf16.msra.mxu0 0
    %1556 = vmatprep.subr.bf16.mxu0 0
    %1557 = vmatpush1.bf16.msra.mxu0 0
    %1558 = vmatprep.subr.bf16.mxu0 0
    %1559 = vmatpush1.bf16.msra.mxu0 0
    %1560 = vmatprep.subr.bf16.mxu0 0
    %1561 = vmatpush1.bf16.msra.mxu0 0
    %1562 = vmatprep.subr.bf16.mxu0 0
    %1563 = vmatpush1.bf16.msra.mxu0 0
    %1564 = vmatprep.subr.bf16.mxu0 0
    %1565 = vmatpush1.bf16.msra.mxu0 0
    %1566 = vmatprep.subr.bf16.mxu0 0
    %1567 = vmatpush1.bf16.msra.mxu0 0
    %1568 = vmatprep.mubr.bf16.mxu0 0
    %1569 = vmatmul.mubr.bf16.gmra.mrb[0].mxu0 %v404
    %v1570 = vpop.f32.mrb[0].mxu0
    %v1571 = vadd.f32 %v1481, %v1570
    %v1572 = vpop.f32.mrb[0].mxu0
    %v1573 = vpop.f32.mrb[0].mxu0
    %v1574 = vpop.f32.mrb[0].mxu0
    %1575 = vdwg.mxu0
    %1576 = vrot.lane.b32.xlu0 %v1378, 126
    %v1577 = vpop.permute.xlu0 %1576
    %1578 = vrot.lane.b32.xlu0 %v1379, 126
    %v1579 = vpop.permute.xlu0 %1578
    %1580 = vrot.lane.b32.xlu0 %v1380, 126
    %v1581 = vpop.permute.xlu0 %1580
    %v1582 = vsel %vm502, %v1579, %v1581
    %v1583 = vsel %vm502, %v1577, %v1579
    %v1584 = vsel %vm502, %v1581, %v1577
    %v1585 = vpack.c.bf16 %v1583, %v1583
    %v1586 = vpack.c.bf16 %v1582, %v1582
    %v1587 = vpack.c.bf16 %v1584, %v1584
    %v1589 = vsel %vm312, %v1585, 0
    %v1592 = vsel %vm312, %v1586, 0
    %v1595 = vsel %vm312, %v1587, 0
    %1597 = vmatprep.subr.bf16.mxu0 %v1592
    %1598 = vmatpush1.bf16.msra.mxu0 %v1589
    %1599 = vmatprep.subr.bf16.mxu0 0
    %1600 = vmatpush1.bf16.msra.mxu0 0
    %1601 = vmatprep.subr.bf16.mxu0 0
    %1602 = vmatpush1.bf16.msra.mxu0 0
    %1603 = vmatprep.subr.bf16.mxu0 0
    %1604 = vmatpush1.bf16.msra.mxu0 0
    %1605 = vmatprep.subr.bf16.mxu0 0
    %1606 = vmatpush1.bf16.msra.mxu0 0
    %1607 = vmatprep.subr.bf16.mxu0 0
    %1608 = vmatpush1.bf16.msra.mxu0 0
    %1609 = vmatprep.subr.bf16.mxu0 0
    %1610 = vmatpush1.bf16.msra.mxu0 0
    %1611 = vmatprep.subr.bf16.mxu0 0
    %1612 = vmatpush1.bf16.msra.mxu0 0
    %1613 = vmatprep.subr.bf16.mxu0 0
    %1614 = vmatpush1.bf16.msra.mxu0 0
    %1615 = vmatprep.subr.bf16.mxu0 0
    %1616 = vmatpush1.bf16.msra.mxu0 0
    %1617 = vmatprep.subr.bf16.mxu0 0
    %1618 = vmatpush1.bf16.msra.mxu0 0
    %1619 = vmatprep.subr.bf16.mxu0 0
    %1620 = vmatpush1.bf16.msra.mxu0 0
    %1621 = vmatprep.subr.bf16.mxu0 0
    %1622 = vmatpush1.bf16.msra.mxu0 0
    %1623 = vmatprep.subr.bf16.mxu0 0
    %1624 = vmatpush1.bf16.msra.mxu0 0
    %1625 = vmatprep.subr.bf16.mxu0 0
    %1626 = vmatpush1.bf16.msra.mxu0 0
    %1627 = vmatprep.subr.bf16.mxu0 0
    %1628 = vmatpush1.bf16.msra.mxu0 0
    %1629 = vmatprep.mubr.bf16.mxu0 0
    %1630 = vmatmul.mubr.bf16.gmra.mrb[0].mxu0 %v512
    %v1631 = vpop.f32.mrb[0].mxu0
    %v1632 = vadd.f32 0.0, %v1631
    %v1633 = vpop.f32.mrb[0].mxu0
    %v1634 = vadd.f32 0.0, %v1633
    %v1635 = vpop.f32.mrb[0].mxu0
    %v1636 = vpop.f32.mrb[0].mxu0
    %1637 = vdwg.mxu0
    %1638 = vmatprep.subr.bf16.mxu0 0
    %1639 = vmatpush1.bf16.msra.mxu0 %v1595
    %1640 = vmatprep.subr.bf16.mxu0 0
    %1641 = vmatpush1.bf16.msra.mxu0 0
    %1642 = vmatprep.subr.bf16.mxu0 0
    %1643 = vmatpush1.bf16.msra.mxu0 0
    %1644 = vmatprep.subr.bf16.mxu0 0
    %1645 = vmatpush1.bf16.msra.mxu0 0
    %1646 = vmatprep.subr.bf16.mxu0 0
    %1647 = vmatpush1.bf16.msra.mxu0 0
    %1648 = vmatprep.subr.bf16.mxu0 0
    %1649 = vmatpush1.bf16.msra.mxu0 0
    %1650 = vmatprep.subr.bf16.mxu0 0
    %1651 = vmatpush1.bf16.msra.mxu0 0
    %1652 = vmatprep.subr.bf16.mxu0 0
    %1653 = vmatpush1.bf16.msra.mxu0 0
    %1654 = vmatprep.subr.bf16.mxu0 0
    %1655 = vmatpush1.bf16.msra.mxu0 0
    %1656 = vmatprep.subr.bf16.mxu0 0
    %1657 = vmatpush1.bf16.msra.mxu0 0
    %1658 = vmatprep.subr.bf16.mxu0 0
    %1659 = vmatpush1.bf16.msra.mxu0 0
    %1660 = vmatprep.subr.bf16.mxu0 0
    %1661 = vmatpush1.bf16.msra.mxu0 0
    %1662 = vmatprep.subr.bf16.mxu0 0
    %1663 = vmatpush1.bf16.msra.mxu0 0
    %1664 = vmatprep.subr.bf16.mxu0 0
    %1665 = vmatpush1.bf16.msra.mxu0 0
    %1666 = vmatprep.subr.bf16.mxu0 0
    %1667 = vmatpush1.bf16.msra.mxu0 0
    %1668 = vmatprep.subr.bf16.mxu0 0
    %1669 = vmatpush1.bf16.msra.mxu0 0
    %1670 = vmatprep.mubr.bf16.mxu0 0
    %1671 = vmatmul.mubr.bf16.gmra.mrb[0].mxu0 %v512
    %v1672 = vpop.f32.mrb[0].mxu0
    %v1673 = vadd.f32 0.0, %v1672
    %v1674 = vpop.f32.mrb[0].mxu0
    %v1675 = vpop.f32.mrb[0].mxu0
    %v1676 = vpop.f32.mrb[0].mxu0
    %1677 = vdwg.mxu0
    %v1678 = vadd.f32 %v1530, %v1632
    %v1679 = vadd.f32 %v1532, %v1634
    %v1680 = vadd.f32 %v1571, %v1673
    %1681 = vrot.lane.b32.xlu0 %v1378, 116
    %v1682 = vpop.permute.xlu0 %1681
    %1683 = vrot.lane.b32.xlu0 %v1379, 116
    %v1684 = vpop.permute.xlu0 %1683
    %1685 = vrot.lane.b32.xlu0 %v1380, 116
    %v1686 = vpop.permute.xlu0 %1685
    %v1687 = vsel %vm613, %v1684, %v1686
    %v1688 = vsel %vm613, %v1682, %v1684
    %v1689 = vsel %vm613, %v1686, %v1682
    %v1690 = vpack.c.bf16 %v1688, %v1688
    %v1691 = vpack.c.bf16 %v1687, %v1687
    %v1692 = vpack.c.bf16 %v1689, %v1689
    %v1694 = vsel %vm312, %v1690, 0
    %v1697 = vsel %vm312, %v1691, 0
    %v1700 = vsel %vm312, %v1692, 0
    %1702 = vmatprep.subr.bf16.mxu0 %v1697
    %1703 = vmatpush1.bf16.msra.mxu0 %v1694
    %1704 = vmatprep.subr.bf16.mxu0 0
    %1705 = vmatpush1.bf16.msra.mxu0 0
    %1706 = vmatprep.subr.bf16.mxu0 0
    %1707 = vmatpush1.bf16.msra.mxu0 0
    %1708 = vmatprep.subr.bf16.mxu0 0
    %1709 = vmatpush1.bf16.msra.mxu0 0
    %1710 = vmatprep.subr.bf16.mxu0 0
    %1711 = vmatpush1.bf16.msra.mxu0 0
    %1712 = vmatprep.subr.bf16.mxu0 0
    %1713 = vmatpush1.bf16.msra.mxu0 0
    %1714 = vmatprep.subr.bf16.mxu0 0
    %1715 = vmatpush1.bf16.msra.mxu0 0
    %1716 = vmatprep.subr.bf16.mxu0 0
    %1717 = vmatpush1.bf16.msra.mxu0 0
    %1718 = vmatprep.subr.bf16.mxu0 0
    %1719 = vmatpush1.bf16.msra.mxu0 0
    %1720 = vmatprep.subr.bf16.mxu0 0
    %1721 = vmatpush1.bf16.msra.mxu0 0
    %1722 = vmatprep.subr.bf16.mxu0 0
    %1723 = vmatpush1.bf16.msra.mxu0 0
    %1724 = vmatprep.subr.bf16.mxu0 0
    %1725 = vmatpush1.bf16.msra.mxu0 0
    %1726 = vmatprep.subr.bf16.mxu0 0
    %1727 = vmatpush1.bf16.msra.mxu0 0
    %1728 = vmatprep.subr.bf16.mxu0 0
    %1729 = vmatpush1.bf16.msra.mxu0 0
    %1730 = vmatprep.subr.bf16.mxu0 0
    %1731 = vmatpush1.bf16.msra.mxu0 0
    %1732 = vmatprep.subr.bf16.mxu0 0
    %1733 = vmatpush1.bf16.msra.mxu0 0
    %1734 = vmatprep.mubr.bf16.mxu0 0
    %1735 = vmatmul.mubr.bf16.gmra.mrb[0].mxu0 %v623
    %v1736 = vpop.f32.mrb[0].mxu0
    %v1737 = vadd.f32 0.0, %v1736
    %v1738 = vpop.f32.mrb[0].mxu0
    %v1739 = vadd.f32 0.0, %v1738
    %v1740 = vpop.f32.mrb[0].mxu0
    %v1741 = vpop.f32.mrb[0].mxu0
    %1742 = vdwg.mxu0
    %1743 = vmatprep.subr.bf16.mxu0 0
    %1744 = vmatpush1.bf16.msra.mxu0 %v1700
    %1745 = vmatprep.subr.bf16.mxu0 0
    %1746 = vmatpush1.bf16.msra.mxu0 0
    %1747 = vmatprep.subr.bf16.mxu0 0
    %1748 = vmatpush1.bf16.msra.mxu0 0
    %1749 = vmatprep.subr.bf16.mxu0 0
    %1750 = vmatpush1.bf16.msra.mxu0 0
    %1751 = vmatprep.subr.bf16.mxu0 0
    %1752 = vmatpush1.bf16.msra.mxu0 0
    %1753 = vmatprep.subr.bf16.mxu0 0
    %1754 = vmatpush1.bf16.msra.mxu0 0
    %1755 = vmatprep.subr.bf16.mxu0 0
    %1756 = vmatpush1.bf16.msra.mxu0 0
    %1757 = vmatprep.subr.bf16.mxu0 0
    %1758 = vmatpush1.bf16.msra.mxu0 0
    %1759 = vmatprep.subr.bf16.mxu0 0
    %1760 = vmatpush1.bf16.msra.mxu0 0
    %1761 = vmatprep.subr.bf16.mxu0 0
    %1762 = vmatpush1.bf16.msra.mxu0 0
    %1763 = vmatprep.subr.bf16.mxu0 0
    %1764 = vmatpush1.bf16.msra.mxu0 0
    %1765 = vmatprep.subr.bf16.mxu0 0
    %1766 = vmatpush1.bf16.msra.mxu0 0
    %1767 = vmatprep.subr.bf16.mxu0 0
    %1768 = vmatpush1.bf16.msra.mxu0 0
    %1769 = vmatprep.subr.bf16.mxu0 0
    %1770 = vmatpush1.bf16.msra.mxu0 0
    %1771 = vmatprep.subr.bf16.mxu0 0
    %1772 = vmatpush1.bf16.msra.mxu0 0
    %1773 = vmatprep.subr.bf16.mxu0 0
    %1774 = vmatpush1.bf16.msra.mxu0 0
    %1775 = vmatprep.mubr.bf16.mxu0 0
    %1776 = vmatmul.mubr.bf16.gmra.mrb[0].mxu0 %v623
    %v1777 = vpop.f32.mrb[0].mxu0
    %v1778 = vadd.f32 0.0, %v1777
    %v1779 = vpop.f32.mrb[0].mxu0
    %v1780 = vpop.f32.mrb[0].mxu0
    %v1781 = vpop.f32.mrb[0].mxu0
    %1782 = vdwg.mxu0
    %v1783 = vadd.f32 %v1678, %v1737
    %v1784 = vadd.f32 %v1679, %v1739
    %v1785 = vadd.f32 %v1680, %v1778
    %1786 = vrot.lane.b32.xlu0 %v1378, 115
    %v1787 = vpop.permute.xlu0 %1786
    %1788 = vrot.lane.b32.xlu0 %v1379, 115
    %v1789 = vpop.permute.xlu0 %1788
    %1790 = vrot.lane.b32.xlu0 %v1380, 115
    %v1791 = vpop.permute.xlu0 %1790
    %v1792 = vsel %vm724, %v1789, %v1791
    %v1793 = vsel %vm724, %v1787, %v1789
    %v1794 = vsel %vm724, %v1791, %v1787
    %v1795 = vpack.c.bf16 %v1793, %v1793
    %v1796 = vpack.c.bf16 %v1792, %v1792
    %v1797 = vpack.c.bf16 %v1794, %v1794
    %v1799 = vsel %vm312, %v1795, 0
    %v1802 = vsel %vm312, %v1796, 0
    %v1805 = vsel %vm312, %v1797, 0
    %1807 = vmatprep.subr.bf16.mxu0 %v1802
    %1808 = vmatpush1.bf16.msra.mxu0 %v1799
    %1809 = vmatprep.subr.bf16.mxu0 0
    %1810 = vmatpush1.bf16.msra.mxu0 0
    %1811 = vmatprep.subr.bf16.mxu0 0
    %1812 = vmatpush1.bf16.msra.mxu0 0
    %1813 = vmatprep.subr.bf16.mxu0 0
    %1814 = vmatpush1.bf16.msra.mxu0 0
    %1815 = vmatprep.subr.bf16.mxu0 0
    %1816 = vmatpush1.bf16.msra.mxu0 0
    %1817 = vmatprep.subr.bf16.mxu0 0
    %1818 = vmatpush1.bf16.msra.mxu0 0
    %1819 = vmatprep.subr.bf16.mxu0 0
    %1820 = vmatpush1.bf16.msra.mxu0 0
    %1821 = vmatprep.subr.bf16.mxu0 0
    %1822 = vmatpush1.bf16.msra.mxu0 0
    %1823 = vmatprep.subr.bf16.mxu0 0
    %1824 = vmatpush1.bf16.msra.mxu0 0
    %1825 = vmatprep.subr.bf16.mxu0 0
    %1826 = vmatpush1.bf16.msra.mxu0 0
    %1827 = vmatprep.subr.bf16.mxu0 0
    %1828 = vmatpush1.bf16.msra.mxu0 0
    %1829 = vmatprep.subr.bf16.mxu0 0
    %1830 = vmatpush1.bf16.msra.mxu0 0
    %1831 = vmatprep.subr.bf16.mxu0 0
    %1832 = vmatpush1.bf16.msra.mxu0 0
    %1833 = vmatprep.subr.bf16.mxu0 0
    %1834 = vmatpush1.bf16.msra.mxu0 0
    %1835 = vmatprep.subr.bf16.mxu0 0
    %1836 = vmatpush1.bf16.msra.mxu0 0
    %1837 = vmatprep.subr.bf16.mxu0 0
    %1838 = vmatpush1.bf16.msra.mxu0 0
    %1839 = vmatprep.mubr.bf16.mxu0 0
    %1840 = vmatmul.mubr.bf16.gmra.mrb[0].mxu0 %v734
    %v1841 = vpop.f32.mrb[0].mxu0
    %v1842 = vadd.f32 0.0, %v1841
    %v1843 = vpop.f32.mrb[0].mxu0
    %v1844 = vadd.f32 0.0, %v1843
    %v1845 = vpop.f32.mrb[0].mxu0
    %v1846 = vpop.f32.mrb[0].mxu0
    %1847 = vdwg.mxu0
    %1848 = vmatprep.subr.bf16.mxu0 0
    %1849 = vmatpush1.bf16.msra.mxu0 %v1805
    %1850 = vmatprep.subr.bf16.mxu0 0
    %1851 = vmatpush1.bf16.msra.mxu0 0
    %1852 = vmatprep.subr.bf16.mxu0 0
    %1853 = vmatpush1.bf16.msra.mxu0 0
    %1854 = vmatprep.subr.bf16.mxu0 0
    %1855 = vmatpush1.bf16.msra.mxu0 0
    %1856 = vmatprep.subr.bf16.mxu0 0
    %1857 = vmatpush1.bf16.msra.mxu0 0
    %1858 = vmatprep.subr.bf16.mxu0 0
    %1859 = vmatpush1.bf16.msra.mxu0 0
    %1860 = vmatprep.subr.bf16.mxu0 0
    %1861 = vmatpush1.bf16.msra.mxu0 0
    %1862 = vmatprep.subr.bf16.mxu0 0
    %1863 = vmatpush1.bf16.msra.mxu0 0
    %1864 = vmatprep.subr.bf16.mxu0 0
    %1865 = vmatpush1.bf16.msra.mxu0 0
    %1866 = vmatprep.subr.bf16.mxu0 0
    %1867 = vmatpush1.bf16.msra.mxu0 0
    %1868 = vmatprep.subr.bf16.mxu0 0
    %1869 = vmatpush1.bf16.msra.mxu0 0
    %1870 = vmatprep.subr.bf16.mxu0 0
    %1871 = vmatpush1.bf16.msra.mxu0 0
    %1872 = vmatprep.subr.bf16.mxu0 0
    %1873 = vmatpush1.bf16.msra.mxu0 0
    %1874 = vmatprep.subr.bf16.mxu0 0
    %1875 = vmatpush1.bf16.msra.mxu0 0
    %1876 = vmatprep.subr.bf16.mxu0 0
    %1877 = vmatpush1.bf16.msra.mxu0 0
    %1878 = vmatprep.subr.bf16.mxu0 0
    %1879 = vmatpush1.bf16.msra.mxu0 0
    %1880 = vmatprep.mubr.bf16.mxu0 0
    %1881 = vmatmul.mubr.bf16.gmra.mrb[0].mxu0 %v734
    %v1882 = vpop.f32.mrb[0].mxu0
    %v1883 = vadd.f32 0.0, %v1882
    %v1884 = vpop.f32.mrb[0].mxu0
    %v1885 = vpop.f32.mrb[0].mxu0
    %v1886 = vpop.f32.mrb[0].mxu0
    %1887 = vdwg.mxu0
    %v1888 = vadd.f32 %v1783, %v1842
    %v1889 = vadd.f32 %v1784, %v1844
    %v1890 = vadd.f32 %v1785, %v1883
    %1891 = vrot.lane.b32.xlu0 %v1378, 114
    %v1892 = vpop.permute.xlu0 %1891
    %1893 = vrot.lane.b32.xlu0 %v1379, 114
    %v1894 = vpop.permute.xlu0 %1893
    %1895 = vrot.lane.b32.xlu0 %v1380, 114
    %v1896 = vpop.permute.xlu0 %1895
    %v1897 = vsel %vm835, %v1894, %v1896
    %v1898 = vsel %vm835, %v1892, %v1894
    %v1899 = vsel %vm835, %v1896, %v1892
    %v1900 = vpack.c.bf16 %v1898, %v1898
    %v1901 = vpack.c.bf16 %v1897, %v1897
    %v1902 = vpack.c.bf16 %v1899, %v1899
    %v1904 = vsel %vm312, %v1900, 0
    %v1907 = vsel %vm312, %v1901, 0
    %v1910 = vsel %vm312, %v1902, 0
    %1912 = vmatprep.subr.bf16.mxu0 %v1907
    %1913 = vmatpush1.bf16.msra.mxu0 %v1904
    %1914 = vmatprep.subr.bf16.mxu0 0
    %1915 = vmatpush1.bf16.msra.mxu0 0
    %1916 = vmatprep.subr.bf16.mxu0 0
    %1917 = vmatpush1.bf16.msra.mxu0 0
    %1918 = vmatprep.subr.bf16.mxu0 0
    %1919 = vmatpush1.bf16.msra.mxu0 0
    %1920 = vmatprep.subr.bf16.mxu0 0
    %1921 = vmatpush1.bf16.msra.mxu0 0
    %1922 = vmatprep.subr.bf16.mxu0 0
    %1923 = vmatpush1.bf16.msra.mxu0 0
    %1924 = vmatprep.subr.bf16.mxu0 0
    %1925 = vmatpush1.bf16.msra.mxu0 0
    %1926 = vmatprep.subr.bf16.mxu0 0
    %1927 = vmatpush1.bf16.msra.mxu0 0
    %1928 = vmatprep.subr.bf16.mxu0 0
    %1929 = vmatpush1.bf16.msra.mxu0 0
    %1930 = vmatprep.subr.bf16.mxu0 0
    %1931 = vmatpush1.bf16.msra.mxu0 0
    %1932 = vmatprep.subr.bf16.mxu0 0
    %1933 = vmatpush1.bf16.msra.mxu0 0
    %1934 = vmatprep.subr.bf16.mxu0 0
    %1935 = vmatpush1.bf16.msra.mxu0 0
    %1936 = vmatprep.subr.bf16.mxu0 0
    %1937 = vmatpush1.bf16.msra.mxu0 0
    %1938 = vmatprep.subr.bf16.mxu0 0
    %1939 = vmatpush1.bf16.msra.mxu0 0
    %1940 = vmatprep.subr.bf16.mxu0 0
    %1941 = vmatpush1.bf16.msra.mxu0 0
    %1942 = vmatprep.subr.bf16.mxu0 0
    %1943 = vmatpush1.bf16.msra.mxu0 0
    %1944 = vmatprep.mubr.bf16.mxu0 0
    %1945 = vmatmul.mubr.bf16.gmra.mrb[0].mxu0 %v845
    %v1946 = vpop.f32.mrb[0].mxu0
    %v1947 = vadd.f32 0.0, %v1946
    %v1948 = vpop.f32.mrb[0].mxu0
    %v1949 = vadd.f32 0.0, %v1948
    %v1950 = vpop.f32.mrb[0].mxu0
    %v1951 = vpop.f32.mrb[0].mxu0
    %1952 = vdwg.mxu0
    %1953 = vmatprep.subr.bf16.mxu0 0
    %1954 = vmatpush1.bf16.msra.mxu0 %v1910
    %1955 = vmatprep.subr.bf16.mxu0 0
    %1956 = vmatpush1.bf16.msra.mxu0 0
    %1957 = vmatprep.subr.bf16.mxu0 0
    %1958 = vmatpush1.bf16.msra.mxu0 0
    %1959 = vmatprep.subr.bf16.mxu0 0
    %1960 = vmatpush1.bf16.msra.mxu0 0
    %1961 = vmatprep.subr.bf16.mxu0 0
    %1962 = vmatpush1.bf16.msra.mxu0 0
    %1963 = vmatprep.subr.bf16.mxu0 0
    %1964 = vmatpush1.bf16.msra.mxu0 0
    %1965 = vmatprep.subr.bf16.mxu0 0
    %1966 = vmatpush1.bf16.msra.mxu0 0
    %1967 = vmatprep.subr.bf16.mxu0 0
    %1968 = vmatpush1.bf16.msra.mxu0 0
    %1969 = vmatprep.subr.bf16.mxu0 0
    %1970 = vmatpush1.bf16.msra.mxu0 0
    %1971 = vmatprep.subr.bf16.mxu0 0
    %1972 = vmatpush1.bf16.msra.mxu0 0
    %1973 = vmatprep.subr.bf16.mxu0 0
    %1974 = vmatpush1.bf16.msra.mxu0 0
    %1975 = vmatprep.subr.bf16.mxu0 0
    %1976 = vmatpush1.bf16.msra.mxu0 0
    %1977 = vmatprep.subr.bf16.mxu0 0
    %1978 = vmatpush1.bf16.msra.mxu0 0
    %1979 = vmatprep.subr.bf16.mxu0 0
    %1980 = vmatpush1.bf16.msra.mxu0 0
    %1981 = vmatprep.subr.bf16.mxu0 0
    %1982 = vmatpush1.bf16.msra.mxu0 0
    %1983 = vmatprep.subr.bf16.mxu0 0
    %1984 = vmatpush1.bf16.msra.mxu0 0
    %1985 = vmatprep.mubr.bf16.mxu0 0
    %1986 = vmatmul.mubr.bf16.gmra.mrb[0].mxu0 %v845
    %v1987 = vpop.f32.mrb[0].mxu0
    %v1988 = vadd.f32 0.0, %v1987
    %v1989 = vpop.f32.mrb[0].mxu0
    %v1990 = vpop.f32.mrb[0].mxu0
    %v1991 = vpop.f32.mrb[0].mxu0
    %1992 = vdwg.mxu0
    %v1993 = vadd.f32 %v1888, %v1947
    %v1994 = vadd.f32 %v1889, %v1949
    %v1995 = vadd.f32 %v1890, %v1988
    %1996 = vrot.lane.b32.xlu0 %v1378, 104
    %v1997 = vpop.permute.xlu0 %1996
    %1998 = vrot.lane.b32.xlu0 %v1379, 104
    %v1999 = vpop.permute.xlu0 %1998
    %2000 = vrot.lane.b32.xlu0 %v1380, 104
    %v2001 = vpop.permute.xlu0 %2000
    %v2002 = vsel %vm946, %v1999, %v2001
    %v2003 = vsel %vm946, %v1997, %v1999
    %v2004 = vsel %vm946, %v2001, %v1997
    %v2005 = vpack.c.bf16 %v2003, %v2003
    %v2006 = vpack.c.bf16 %v2002, %v2002
    %v2007 = vpack.c.bf16 %v2004, %v2004
    %v2009 = vsel %vm312, %v2005, 0
    %v2012 = vsel %vm312, %v2006, 0
    %v2015 = vsel %vm312, %v2007, 0
    %2017 = vmatprep.subr.bf16.mxu0 %v2012
    %2018 = vmatpush1.bf16.msra.mxu0 %v2009
    %2019 = vmatprep.subr.bf16.mxu0 0
    %2020 = vmatpush1.bf16.msra.mxu0 0
    %2021 = vmatprep.subr.bf16.mxu0 0
    %2022 = vmatpush1.bf16.msra.mxu0 0
    %2023 = vmatprep.subr.bf16.mxu0 0
    %2024 = vmatpush1.bf16.msra.mxu0 0
    %2025 = vmatprep.subr.bf16.mxu0 0
    %2026 = vmatpush1.bf16.msra.mxu0 0
    %2027 = vmatprep.subr.bf16.mxu0 0
    %2028 = vmatpush1.bf16.msra.mxu0 0
    %2029 = vmatprep.subr.bf16.mxu0 0
    %2030 = vmatpush1.bf16.msra.mxu0 0
    %2031 = vmatprep.subr.bf16.mxu0 0
    %2032 = vmatpush1.bf16.msra.mxu0 0
    %2033 = vmatprep.subr.bf16.mxu0 0
    %2034 = vmatpush1.bf16.msra.mxu0 0
    %2035 = vmatprep.subr.bf16.mxu0 0
    %2036 = vmatpush1.bf16.msra.mxu0 0
    %2037 = vmatprep.subr.bf16.mxu0 0
    %2038 = vmatpush1.bf16.msra.mxu0 0
    %2039 = vmatprep.subr.bf16.mxu0 0
    %2040 = vmatpush1.bf16.msra.mxu0 0
    %2041 = vmatprep.subr.bf16.mxu0 0
    %2042 = vmatpush1.bf16.msra.mxu0 0
    %2043 = vmatprep.subr.bf16.mxu0 0
    %2044 = vmatpush1.bf16.msra.mxu0 0
    %2045 = vmatprep.subr.bf16.mxu0 0
    %2046 = vmatpush1.bf16.msra.mxu0 0
    %2047 = vmatprep.subr.bf16.mxu0 0
    %2048 = vmatpush1.bf16.msra.mxu0 0
    %2049 = vmatprep.mubr.bf16.mxu0 0
    %2050 = vmatmul.mubr.bf16.gmra.mrb[0].mxu0 %v956
    %v2051 = vpop.f32.mrb[0].mxu0
    %v2052 = vadd.f32 0.0, %v2051
    %v2053 = vpop.f32.mrb[0].mxu0
    %v2054 = vadd.f32 0.0, %v2053
    %v2055 = vpop.f32.mrb[0].mxu0
    %v2056 = vpop.f32.mrb[0].mxu0
    %2057 = vdwg.mxu0
    %2058 = vmatprep.subr.bf16.mxu0 0
    %2059 = vmatpush1.bf16.msra.mxu0 %v2015
    %2060 = vmatprep.subr.bf16.mxu0 0
    %2061 = vmatpush1.bf16.msra.mxu0 0
    %2062 = vmatprep.subr.bf16.mxu0 0
    %2063 = vmatpush1.bf16.msra.mxu0 0
    %2064 = vmatprep.subr.bf16.mxu0 0
    %2065 = vmatpush1.bf16.msra.mxu0 0
    %2066 = vmatprep.subr.bf16.mxu0 0
    %2067 = vmatpush1.bf16.msra.mxu0 0
    %2068 = vmatprep.subr.bf16.mxu0 0
    %2069 = vmatpush1.bf16.msra.mxu0 0
    %2070 = vmatprep.subr.bf16.mxu0 0
    %2071 = vmatpush1.bf16.msra.mxu0 0
    %2072 = vmatprep.subr.bf16.mxu0 0
    %2073 = vmatpush1.bf16.msra.mxu0 0
    %2074 = vmatprep.subr.bf16.mxu0 0
    %2075 = vmatpush1.bf16.msra.mxu0 0
    %2076 = vmatprep.subr.bf16.mxu0 0
    %2077 = vmatpush1.bf16.msra.mxu0 0
    %2078 = vmatprep.subr.bf16.mxu0 0
    %2079 = vmatpush1.bf16.msra.mxu0 0
    %2080 = vmatprep.subr.bf16.mxu0 0
    %2081 = vmatpush1.bf16.msra.mxu0 0
    %2082 = vmatprep.subr.bf16.mxu0 0
    %2083 = vmatpush1.bf16.msra.mxu0 0
    %2084 = vmatprep.subr.bf16.mxu0 0
    %2085 = vmatpush1.bf16.msra.mxu0 0
    %2086 = vmatprep.subr.bf16.mxu0 0
    %2087 = vmatpush1.bf16.msra.mxu0 0
    %2088 = vmatprep.subr.bf16.mxu0 0
    %2089 = vmatpush1.bf16.msra.mxu0 0
    %2090 = vmatprep.mubr.bf16.mxu0 0
    %2091 = vmatmul.mubr.bf16.gmra.mrb[0].mxu0 %v956
    %v2092 = vpop.f32.mrb[0].mxu0
    %v2093 = vadd.f32 0.0, %v2092
    %v2094 = vpop.f32.mrb[0].mxu0
    %v2095 = vpop.f32.mrb[0].mxu0
    %v2096 = vpop.f32.mrb[0].mxu0
    %2097 = vdwg.mxu0
    %v2098 = vadd.f32 %v1993, %v2052
    %v2099 = vadd.f32 %v1994, %v2054
    %v2100 = vadd.f32 %v1995, %v2093
    %2101 = vrot.lane.b32.xlu0 %v1378, 103
    %v2102 = vpop.permute.xlu0 %2101
    %2103 = vrot.lane.b32.xlu0 %v1379, 103
    %v2104 = vpop.permute.xlu0 %2103
    %2105 = vrot.lane.b32.xlu0 %v1380, 103
    %v2106 = vpop.permute.xlu0 %2105
    %v2107 = vsel %vm1057, %v2104, %v2106
    %v2108 = vsel %vm1057, %v2102, %v2104
    %v2109 = vsel %vm1057, %v2106, %v2102
    %v2110 = vpack.c.bf16 %v2108, %v2108
    %v2111 = vpack.c.bf16 %v2107, %v2107
    %v2112 = vpack.c.bf16 %v2109, %v2109
    %v2114 = vsel %vm312, %v2110, 0
    %v2117 = vsel %vm312, %v2111, 0
    %v2120 = vsel %vm312, %v2112, 0
    %2122 = vmatprep.subr.bf16.mxu0 %v2117
    %2123 = vmatpush1.bf16.msra.mxu0 %v2114
    %2124 = vmatprep.subr.bf16.mxu0 0
    %2125 = vmatpush1.bf16.msra.mxu0 0
    %2126 = vmatprep.subr.bf16.mxu0 0
    %2127 = vmatpush1.bf16.msra.mxu0 0
    %2128 = vmatprep.subr.bf16.mxu0 0
    %2129 = vmatpush1.bf16.msra.mxu0 0
    %2130 = vmatprep.subr.bf16.mxu0 0
    %2131 = vmatpush1.bf16.msra.mxu0 0
    %2132 = vmatprep.subr.bf16.mxu0 0
    %2133 = vmatpush1.bf16.msra.mxu0 0
    %2134 = vmatprep.subr.bf16.mxu0 0
    %2135 = vmatpush1.bf16.msra.mxu0 0
    %2136 = vmatprep.subr.bf16.mxu0 0
    %2137 = vmatpush1.bf16.msra.mxu0 0
    %2138 = vmatprep.subr.bf16.mxu0 0
    %2139 = vmatpush1.bf16.msra.mxu0 0
    %2140 = vmatprep.subr.bf16.mxu0 0
    %2141 = vmatpush1.bf16.msra.mxu0 0
    %2142 = vmatprep.subr.bf16.mxu0 0
    %2143 = vmatpush1.bf16.msra.mxu0 0
    %2144 = vmatprep.subr.bf16.mxu0 0
    %2145 = vmatpush1.bf16.msra.mxu0 0
    %2146 = vmatprep.subr.bf16.mxu0 0
    %2147 = vmatpush1.bf16.msra.mxu0 0
    %2148 = vmatprep.subr.bf16.mxu0 0
    %2149 = vmatpush1.bf16.msra.mxu0 0
    %2150 = vmatprep.subr.bf16.mxu0 0
    %2151 = vmatpush1.bf16.msra.mxu0 0
    %2152 = vmatprep.subr.bf16.mxu0 0
    %2153 = vmatpush1.bf16.msra.mxu0 0
    %2154 = vmatprep.mubr.bf16.mxu0 0
    %2155 = vmatmul.mubr.bf16.gmra.mrb[0].mxu0 %v1067
    %v2156 = vpop.f32.mrb[0].mxu0
    %v2157 = vadd.f32 0.0, %v2156
    %v2158 = vpop.f32.mrb[0].mxu0
    %v2159 = vadd.f32 0.0, %v2158
    %v2160 = vpop.f32.mrb[0].mxu0
    %v2161 = vpop.f32.mrb[0].mxu0
    %2162 = vdwg.mxu0
    %2163 = vmatprep.subr.bf16.mxu0 0
    %2164 = vmatpush1.bf16.msra.mxu0 %v2120
    %2165 = vmatprep.subr.bf16.mxu0 0
    %2166 = vmatpush1.bf16.msra.mxu0 0
    %2167 = vmatprep.subr.bf16.mxu0 0
    %2168 = vmatpush1.bf16.msra.mxu0 0
    %2169 = vmatprep.subr.bf16.mxu0 0
    %2170 = vmatpush1.bf16.msra.mxu0 0
    %2171 = vmatprep.subr.bf16.mxu0 0
    %2172 = vmatpush1.bf16.msra.mxu0 0
    %2173 = vmatprep.subr.bf16.mxu0 0
    %2174 = vmatpush1.bf16.msra.mxu0 0
    %2175 = vmatprep.subr.bf16.mxu0 0
    %2176 = vmatpush1.bf16.msra.mxu0 0
    %2177 = vmatprep.subr.bf16.mxu0 0
    %2178 = vmatpush1.bf16.msra.mxu0 0
    %2179 = vmatprep.subr.bf16.mxu0 0
    %2180 = vmatpush1.bf16.msra.mxu0 0
    %2181 = vmatprep.subr.bf16.mxu0 0
    %2182 = vmatpush1.bf16.msra.mxu0 0
    %2183 = vmatprep.subr.bf16.mxu0 0
    %2184 = vmatpush1.bf16.msra.mxu0 0
    %2185 = vmatprep.subr.bf16.mxu0 0
    %2186 = vmatpush1.bf16.msra.mxu0 0
    %2187 = vmatprep.subr.bf16.mxu0 0
    %2188 = vmatpush1.bf16.msra.mxu0 0
    %2189 = vmatprep.subr.bf16.mxu0 0
    %2190 = vmatpush1.bf16.msra.mxu0 0
    %2191 = vmatprep.subr.bf16.mxu0 0
    %2192 = vmatpush1.bf16.msra.mxu0 0
    %2193 = vmatprep.subr.bf16.mxu0 0
    %2194 = vmatpush1.bf16.msra.mxu0 0
    %2195 = vmatprep.mubr.bf16.mxu0 0
    %2196 = vmatmul.mubr.bf16.gmra.mrb[0].mxu0 %v1067
    %v2197 = vpop.f32.mrb[0].mxu0
    %v2198 = vadd.f32 0.0, %v2197
    %v2199 = vpop.f32.mrb[0].mxu0
    %v2200 = vpop.f32.mrb[0].mxu0
    %v2201 = vpop.f32.mrb[0].mxu0
    %2202 = vdwg.mxu0
    %v2203 = vadd.f32 %v2098, %v2157
    %v2204 = vadd.f32 %v2099, %v2159
    %v2205 = vadd.f32 %v2100, %v2198
    %2206 = vrot.lane.b32.xlu0 %v1378, 102
    %v2207 = vpop.permute.xlu0 %2206
    %2208 = vrot.lane.b32.xlu0 %v1379, 102
    %v2209 = vpop.permute.xlu0 %2208
    %2210 = vrot.lane.b32.xlu0 %v1380, 102
    %v2211 = vpop.permute.xlu0 %2210
    %v2212 = vsel %vm1168, %v2209, %v2211
    %v2213 = vsel %vm1168, %v2207, %v2209
    %v2214 = vsel %vm1168, %v2211, %v2207
    %v2215 = vpack.c.bf16 %v2213, %v2213
    %v2216 = vpack.c.bf16 %v2212, %v2212
    %v2217 = vpack.c.bf16 %v2214, %v2214
    %v2219 = vsel %vm312, %v2215, 0
    %v2222 = vsel %vm312, %v2216, 0
    %v2225 = vsel %vm312, %v2217, 0
    %2227 = vmatprep.subr.bf16.mxu0 %v2222
    %2228 = vmatpush1.bf16.msra.mxu0 %v2219
    %2229 = vmatprep.subr.bf16.mxu0 0
    %2230 = vmatpush1.bf16.msra.mxu0 0
    %2231 = vmatprep.subr.bf16.mxu0 0
    %2232 = vmatpush1.bf16.msra.mxu0 0
    %2233 = vmatprep.subr.bf16.mxu0 0
    %2234 = vmatpush1.bf16.msra.mxu0 0
    %2235 = vmatprep.subr.bf16.mxu0 0
    %2236 = vmatpush1.bf16.msra.mxu0 0
    %2237 = vmatprep.subr.bf16.mxu0 0
    %2238 = vmatpush1.bf16.msra.mxu0 0
    %2239 = vmatprep.subr.bf16.mxu0 0
    %2240 = vmatpush1.bf16.msra.mxu0 0
    %2241 = vmatprep.subr.bf16.mxu0 0
    %2242 = vmatpush1.bf16.msra.mxu0 0
    %2243 = vmatprep.subr.bf16.mxu0 0
    %2244 = vmatpush1.bf16.msra.mxu0 0
    %2245 = vmatprep.subr.bf16.mxu0 0
    %2246 = vmatpush1.bf16.msra.mxu0 0
    %2247 = vmatprep.subr.bf16.mxu0 0
    %2248 = vmatpush1.bf16.msra.mxu0 0
    %2249 = vmatprep.subr.bf16.mxu0 0
    %2250 = vmatpush1.bf16.msra.mxu0 0
    %2251 = vmatprep.subr.bf16.mxu0 0
    %2252 = vmatpush1.bf16.msra.mxu0 0
    %2253 = vmatprep.subr.bf16.mxu0 0
    %2254 = vmatpush1.bf16.msra.mxu0 0
    %2255 = vmatprep.subr.bf16.mxu0 0
    %2256 = vmatpush1.bf16.msra.mxu0 0
    %2257 = vmatprep.subr.bf16.mxu0 0
    %2258 = vmatpush1.bf16.msra.mxu0 0
    %2259 = vmatprep.mubr.bf16.mxu0 0
    %2260 = vmatmul.mubr.bf16.gmra.mrb[0].mxu0 %v1178
    %v2261 = vpop.f32.mrb[0].mxu0
    %v2262 = vadd.f32 0.0, %v2261
    %v2263 = vpop.f32.mrb[0].mxu0
    %v2264 = vadd.f32 0.0, %v2263
    %v2265 = vpop.f32.mrb[0].mxu0
    %v2266 = vpop.f32.mrb[0].mxu0
    %2267 = vdwg.mxu0
    %2268 = vmatprep.subr.bf16.mxu0 0
    %2269 = vmatpush1.bf16.msra.mxu0 %v2225
    %2270 = vmatprep.subr.bf16.mxu0 0
    %2271 = vmatpush1.bf16.msra.mxu0 0
    %2272 = vmatprep.subr.bf16.mxu0 0
    %2273 = vmatpush1.bf16.msra.mxu0 0
    %2274 = vmatprep.subr.bf16.mxu0 0
    %2275 = vmatpush1.bf16.msra.mxu0 0
    %2276 = vmatprep.subr.bf16.mxu0 0
    %2277 = vmatpush1.bf16.msra.mxu0 0
    %2278 = vmatprep.subr.bf16.mxu0 0
    %2279 = vmatpush1.bf16.msra.mxu0 0
    %2280 = vmatprep.subr.bf16.mxu0 0
    %2281 = vmatpush1.bf16.msra.mxu0 0
    %2282 = vmatprep.subr.bf16.mxu0 0
    %2283 = vmatpush1.bf16.msra.mxu0 0
    %2284 = vmatprep.subr.bf16.mxu0 0
    %2285 = vmatpush1.bf16.msra.mxu0 0
    %2286 = vmatprep.subr.bf16.mxu0 0
    %2287 = vmatpush1.bf16.msra.mxu0 0
    %2288 = vmatprep.subr.bf16.mxu0 0
    %2289 = vmatpush1.bf16.msra.mxu0 0
    %2290 = vmatprep.subr.bf16.mxu0 0
    %2291 = vmatpush1.bf16.msra.mxu0 0
    %2292 = vmatprep.subr.bf16.mxu0 0
    %2293 = vmatpush1.bf16.msra.mxu0 0
    %2294 = vmatprep.subr.bf16.mxu0 0
    %2295 = vmatpush1.bf16.msra.mxu0 0
    %2296 = vmatprep.subr.bf16.mxu0 0
    %2297 = vmatpush1.bf16.msra.mxu0 0
    %2298 = vmatprep.subr.bf16.mxu0 0
    %2299 = vmatpush1.bf16.msra.mxu0 0
    %2300 = vmatprep.mubr.bf16.mxu0 0
    %2301 = vmatmul.mubr.bf16.gmra.mrb[0].mxu0 %v1178
    %v2302 = vpop.f32.mrb[0].mxu0
    %v2303 = vadd.f32 0.0, %v2302
    %v2304 = vpop.f32.mrb[0].mxu0
    %v2305 = vpop.f32.mrb[0].mxu0
    %v2306 = vpop.f32.mrb[0].mxu0
    %2307 = vdwg.mxu0
    %v2308 = vadd.f32 %v2203, %v2262
    %v2309 = vadd.f32 %v2204, %v2264
    %v2310 = vadd.f32 %v2205, %v2303
    %v2311 = vadd.f32 %v2308, %v1277
    %v2312 = vadd.f32 %v2309, %v1277
    %v2313 = vadd.f32 %v2310, %v1277
    %v2314 = vmax.f32 %v2311, 0.0
    %v2315 = vmax.f32 %v2312, 0.0
    %v2316 = vmax.f32 %v2313, 0.0
    %v2317 = vpack.c.bf16 %v2314, %v2314
    %v2318 = vpack.c.bf16 %v2315, %v2315
    %v2319 = vpack.c.bf16 %v2316, %v2316
    %v2321 = vsel %vm83, %v2317, 0
    %v2324 = vsel %vm83, %v2318, 0
    %v2327 = vsel %vm83, %v2319, 0
    %2329 = vmatprep.subr.bf16.mxu0 %v2324
    %2330 = vmatpush1.bf16.msra.mxu0 %v2321
    %2331 = vmatprep.subr.bf16.mxu0 0
    %2332 = vmatpush1.bf16.msra.mxu0 0
    %2333 = vmatprep.subr.bf16.mxu0 0
    %2334 = vmatpush1.bf16.msra.mxu0 0
    %2335 = vmatprep.subr.bf16.mxu0 0
    %2336 = vmatpush1.bf16.msra.mxu0 0
    %2337 = vmatprep.subr.bf16.mxu0 0
    %2338 = vmatpush1.bf16.msra.mxu0 0
    %2339 = vmatprep.subr.bf16.mxu0 0
    %2340 = vmatpush1.bf16.msra.mxu0 0
    %2341 = vmatprep.subr.bf16.mxu0 0
    %2342 = vmatpush1.bf16.msra.mxu0 0
    %2343 = vmatprep.subr.bf16.mxu0 0
    %2344 = vmatpush1.bf16.msra.mxu0 0
    %2345 = vmatprep.subr.bf16.mxu0 0
    %2346 = vmatpush1.bf16.msra.mxu0 0
    %2347 = vmatprep.subr.bf16.mxu0 0
    %2348 = vmatpush1.bf16.msra.mxu0 0
    %2349 = vmatprep.subr.bf16.mxu0 0
    %2350 = vmatpush1.bf16.msra.mxu0 0
    %2351 = vmatprep.subr.bf16.mxu0 0
    %2352 = vmatpush1.bf16.msra.mxu0 0
    %2353 = vmatprep.subr.bf16.mxu0 0
    %2354 = vmatpush1.bf16.msra.mxu0 0
    %2355 = vmatprep.subr.bf16.mxu0 0
    %2356 = vmatpush1.bf16.msra.mxu0 0
    %2357 = vmatprep.subr.bf16.mxu0 0
    %2358 = vmatpush1.bf16.msra.mxu0 0
    %2359 = vmatprep.subr.bf16.mxu0 0
    %2360 = vmatpush1.bf16.msra.mxu0 0
    %2361 = vmatprep.mubr.bf16.mxu0 0
    %2362 = vmatmul.mubr.bf16.gmra.mrb[0].mxu0 %v192
    %v2363 = vpop.f32.mrb[0].mxu0
    %v2364 = vadd.f32 %v188, %v2363
    %v2365 = vpop.f32.mrb[0].mxu0
    %v2366 = vadd.f32 %v188, %v2365
    %v2367 = vpop.f32.mrb[0].mxu0
    %v2368 = vpop.f32.mrb[0].mxu0
    %2369 = vdwg.mxu0
    %2370 = vmatprep.subr.bf16.mxu0 0
    %2371 = vmatpush1.bf16.msra.mxu0 %v2327
    %2372 = vmatprep.subr.bf16.mxu0 0
    %2373 = vmatpush1.bf16.msra.mxu0 0
    %2374 = vmatprep.subr.bf16.mxu0 0
    %2375 = vmatpush1.bf16.msra.mxu0 0
    %2376 = vmatprep.subr.bf16.mxu0 0
    %2377 = vmatpush1.bf16.msra.mxu0 0
    %2378 = vmatprep.subr.bf16.mxu0 0
    %2379 = vmatpush1.bf16.msra.mxu0 0
    %2380 = vmatprep.subr.bf16.mxu0 0
    %2381 = vmatpush1.bf16.msra.mxu0 0
    %2382 = vmatprep.subr.bf16.mxu0 0
    %2383 = vmatpush1.bf16.msra.mxu0 0
    %2384 = vmatprep.subr.bf16.mxu0 0
    %2385 = vmatpush1.bf16.msra.mxu0 0
    %2386 = vmatprep.subr.bf16.mxu0 0
    %2387 = vmatpush1.bf16.msra.mxu0 0
    %2388 = vmatprep.subr.bf16.mxu0 0
    %2389 = vmatpush1.bf16.msra.mxu0 0
    %2390 = vmatprep.subr.bf16.mxu0 0
    %2391 = vmatpush1.bf16.msra.mxu0 0
    %2392 = vmatprep.subr.bf16.mxu0 0
    %2393 = vmatpush1.bf16.msra.mxu0 0
    %2394 = vmatprep.subr.bf16.mxu0 0
    %2395 = vmatpush1.bf16.msra.mxu0 0
    %2396 = vmatprep.subr.bf16.mxu0 0
    %2397 = vmatpush1.bf16.msra.mxu0 0
    %2398 = vmatprep.subr.bf16.mxu0 0
    %2399 = vmatpush1.bf16.msra.mxu0 0
    %2400 = vmatprep.subr.bf16.mxu0 0
    %2401 = vmatpush1.bf16.msra.mxu0 0
    %2402 = vmatprep.mubr.bf16.mxu0 0
    %2403 = vmatmul.mubr.bf16.gmra.mrb[0].mxu0 %v192
    %v2404 = vpop.f32.mrb[0].mxu0
    %v2405 = vadd.f32 %v188, %v2404
    %v2406 = vpop.f32.mrb[0].mxu0
    %v2407 = vpop.f32.mrb[0].mxu0
    %v2408 = vpop.f32.mrb[0].mxu0
    %2409 = vdwg.mxu0
    %v2410 = vmax.f32 %v2364, 0.0
    %v2411 = vmax.f32 %v2366, 0.0
    %v2412 = vmax.f32 %v2405, 0.0
    %v2413 = vpack.c.bf16 %v2410, %v2410
    %v2414 = vpack.c.bf16 %v2411, %v2411
    %v2415 = vpack.c.bf16 %v2412, %v2412
    %2416 = vrot.lane.b32.xlu0 %v2410, 127
    %v2417 = vpop.permute.xlu0 %2416
    %2418 = vrot.lane.b32.xlu0 %v2411, 127
    %v2419 = vpop.permute.xlu0 %2418
    %2420 = vrot.lane.b32.xlu0 %v2412, 127
    %v2421 = vpop.permute.xlu0 %2420
    %v2422 = vsel %vm299, %v2419, %v2421
    %v2423 = vsel %vm299, %v2417, %v2419
    %v2424 = vsel %vm299, %v2421, %v2417
    %v2425 = vpack.c.bf16 %v2423, %v2423
    %v2426 = vpack.c.bf16 %v2422, %v2422
    %v2427 = vpack.c.bf16 %v2424, %v2424
    %v2429 = vsel %vm312, %v2425, 0
    %v2432 = vsel %vm312, %v2426, 0
    %v2435 = vsel %vm312, %v2427, 0
    %2437 = vmatprep.subr.bf16.mxu0 %v2432
    %2438 = vmatpush1.bf16.msra.mxu0 %v2429
    %2439 = vmatprep.subr.bf16.mxu0 0
    %2440 = vmatpush1.bf16.msra.mxu0 0
    %2441 = vmatprep.subr.bf16.mxu0 0
    %2442 = vmatpush1.bf16.msra.mxu0 0
    %2443 = vmatprep.subr.bf16.mxu0 0
    %2444 = vmatpush1.bf16.msra.mxu0 0
    %2445 = vmatprep.subr.bf16.mxu0 0
    %2446 = vmatpush1.bf16.msra.mxu0 0
    %2447 = vmatprep.subr.bf16.mxu0 0
    %2448 = vmatpush1.bf16.msra.mxu0 0
    %2449 = vmatprep.subr.bf16.mxu0 0
    %2450 = vmatpush1.bf16.msra.mxu0 0
    %2451 = vmatprep.subr.bf16.mxu0 0
    %2452 = vmatpush1.bf16.msra.mxu0 0
    %2453 = vmatprep.subr.bf16.mxu0 0
    %2454 = vmatpush1.bf16.msra.mxu0 0
    %2455 = vmatprep.subr.bf16.mxu0 0
    %2456 = vmatpush1.bf16.msra.mxu0 0
    %2457 = vmatprep.subr.bf16.mxu0 0
    %2458 = vmatpush1.bf16.msra.mxu0 0
    %2459 = vmatprep.subr.bf16.mxu0 0
    %2460 = vmatpush1.bf16.msra.mxu0 0
    %2461 = vmatprep.subr.bf16.mxu0 0
    %2462 = vmatpush1.bf16.msra.mxu0 0
    %2463 = vmatprep.subr.bf16.mxu0 0
    %2464 = vmatpush1.bf16.msra.mxu0 0
    %2465 = vmatprep.subr.bf16.mxu0 0
    %2466 = vmatpush1.bf16.msra.mxu0 0
    %2467 = vmatprep.subr.bf16.mxu0 0
    %2468 = vmatpush1.bf16.msra.mxu0 0
    %2469 = vmatprep.mubr.bf16.mxu0 0
    %2470 = vmatmul.mubr.bf16.gmra.mrb[0].mxu0 %v310
    %v2471 = vpop.f32.mrb[0].mxu0
    %v2472 = vadd.f32 0.0, %v2471
    %v2473 = vpop.f32.mrb[0].mxu0
    %v2474 = vadd.f32 0.0, %v2473
    %v2475 = vpop.f32.mrb[0].mxu0
    %v2476 = vpop.f32.mrb[0].mxu0
    %2477 = vdwg.mxu0
    %2478 = vmatprep.subr.bf16.mxu0 0
    %2479 = vmatpush1.bf16.msra.mxu0 %v2435
    %2480 = vmatprep.subr.bf16.mxu0 0
    %2481 = vmatpush1.bf16.msra.mxu0 0
    %2482 = vmatprep.subr.bf16.mxu0 0
    %2483 = vmatpush1.bf16.msra.mxu0 0
    %2484 = vmatprep.subr.bf16.mxu0 0
    %2485 = vmatpush1.bf16.msra.mxu0 0
    %2486 = vmatprep.subr.bf16.mxu0 0
    %2487 = vmatpush1.bf16.msra.mxu0 0
    %2488 = vmatprep.subr.bf16.mxu0 0
    %2489 = vmatpush1.bf16.msra.mxu0 0
    %2490 = vmatprep.subr.bf16.mxu0 0
    %2491 = vmatpush1.bf16.msra.mxu0 0
    %2492 = vmatprep.subr.bf16.mxu0 0
    %2493 = vmatpush1.bf16.msra.mxu0 0
    %2494 = vmatprep.subr.bf16.mxu0 0
    %2495 = vmatpush1.bf16.msra.mxu0 0
    %2496 = vmatprep.subr.bf16.mxu0 0
    %2497 = vmatpush1.bf16.msra.mxu0 0
    %2498 = vmatprep.subr.bf16.mxu0 0
    %2499 = vmatpush1.bf16.msra.mxu0 0
    %2500 = vmatprep.subr.bf16.mxu0 0
    %2501 = vmatpush1.bf16.msra.mxu0 0
    %2502 = vmatprep.subr.bf16.mxu0 0
    %2503 = vmatpush1.bf16.msra.mxu0 0
    %2504 = vmatprep.subr.bf16.mxu0 0
    %2505 = vmatpush1.bf16.msra.mxu0 0
    %2506 = vmatprep.subr.bf16.mxu0 0
    %2507 = vmatpush1.bf16.msra.mxu0 0
    %2508 = vmatprep.subr.bf16.mxu0 0
    %2509 = vmatpush1.bf16.msra.mxu0 0
    %2510 = vmatprep.mubr.bf16.mxu0 0
    %2511 = vmatmul.mubr.bf16.gmra.mrb[0].mxu0 %v310
    %v2512 = vpop.f32.mrb[0].mxu0
    %v2513 = vadd.f32 0.0, %v2512
    %v2514 = vpop.f32.mrb[0].mxu0
    %v2515 = vpop.f32.mrb[0].mxu0
    %v2516 = vpop.f32.mrb[0].mxu0
    %2517 = vdwg.mxu0
    %v2519 = vsel %vm312, %v2413, 0
    %v2522 = vsel %vm312, %v2414, 0
    %v2525 = vsel %vm312, %v2415, 0
    %2527 = vmatprep.subr.bf16.mxu0 %v2522
    %2528 = vmatpush1.bf16.msra.mxu0 %v2519
    %2529 = vmatprep.subr.bf16.mxu0 0
    %2530 = vmatpush1.bf16.msra.mxu0 0
    %2531 = vmatprep.subr.bf16.mxu0 0
    %2532 = vmatpush1.bf16.msra.mxu0 0
    %2533 = vmatprep.subr.bf16.mxu0 0
    %2534 = vmatpush1.bf16.msra.mxu0 0
    %2535 = vmatprep.subr.bf16.mxu0 0
    %2536 = vmatpush1.bf16.msra.mxu0 0
    %2537 = vmatprep.subr.bf16.mxu0 0
    %2538 = vmatpush1.bf16.msra.mxu0 0
    %2539 = vmatprep.subr.bf16.mxu0 0
    %2540 = vmatpush1.bf16.msra.mxu0 0
    %2541 = vmatprep.subr.bf16.mxu0 0
    %2542 = vmatpush1.bf16.msra.mxu0 0
    %2543 = vmatprep.subr.bf16.mxu0 0
    %2544 = vmatpush1.bf16.msra.mxu0 0
    %2545 = vmatprep.subr.bf16.mxu0 0
    %2546 = vmatpush1.bf16.msra.mxu0 0
    %2547 = vmatprep.subr.bf16.mxu0 0
    %2548 = vmatpush1.bf16.msra.mxu0 0
    %2549 = vmatprep.subr.bf16.mxu0 0
    %2550 = vmatpush1.bf16.msra.mxu0 0
    %2551 = vmatprep.subr.bf16.mxu0 0
    %2552 = vmatpush1.bf16.msra.mxu0 0
    %2553 = vmatprep.subr.bf16.mxu0 0
    %2554 = vmatpush1.bf16.msra.mxu0 0
    %2555 = vmatprep.subr.bf16.mxu0 0
    %2556 = vmatpush1.bf16.msra.mxu0 0
    %2557 = vmatprep.subr.bf16.mxu0 0
    %2558 = vmatpush1.bf16.msra.mxu0 0
    %2559 = vmatprep.mubr.bf16.mxu0 0
    %2560 = vmatmul.mubr.bf16.gmra.mrb[0].mxu0 %v404
    %v2561 = vpop.f32.mrb[0].mxu0
    %v2562 = vadd.f32 %v2472, %v2561
    %v2563 = vpop.f32.mrb[0].mxu0
    %v2564 = vadd.f32 %v2474, %v2563
    %v2565 = vpop.f32.mrb[0].mxu0
    %v2566 = vpop.f32.mrb[0].mxu0
    %2567 = vdwg.mxu0
    %2568 = vmatprep.subr.bf16.mxu0 0
    %2569 = vmatpush1.bf16.msra.mxu0 %v2525
    %2570 = vmatprep.subr.bf16.mxu0 0
    %2571 = vmatpush1.bf16.msra.mxu0 0
    %2572 = vmatprep.subr.bf16.mxu0 0
    %2573 = vmatpush1.bf16.msra.mxu0 0
    %2574 = vmatprep.subr.bf16.mxu0 0
    %2575 = vmatpush1.bf16.msra.mxu0 0
    %2576 = vmatprep.subr.bf16.mxu0 0
    %2577 = vmatpush1.bf16.msra.mxu0 0
    %2578 = vmatprep.subr.bf16.mxu0 0
    %2579 = vmatpush1.bf16.msra.mxu0 0
    %2580 = vmatprep.subr.bf16.mxu0 0
    %2581 = vmatpush1.bf16.msra.mxu0 0
    %2582 = vmatprep.subr.bf16.mxu0 0
    %2583 = vmatpush1.bf16.msra.mxu0 0
    %2584 = vmatprep.subr.bf16.mxu0 0
    %2585 = vmatpush1.bf16.msra.mxu0 0
    %2586 = vmatprep.subr.bf16.mxu0 0
    %2587 = vmatpush1.bf16.msra.mxu0 0
    %2588 = vmatprep.subr.bf16.mxu0 0
    %2589 = vmatpush1.bf16.msra.mxu0 0
    %2590 = vmatprep.subr.bf16.mxu0 0
    %2591 = vmatpush1.bf16.msra.mxu0 0
    %2592 = vmatprep.subr.bf16.mxu0 0
    %2593 = vmatpush1.bf16.msra.mxu0 0
    %2594 = vmatprep.subr.bf16.mxu0 0
    %2595 = vmatpush1.bf16.msra.mxu0 0
    %2596 = vmatprep.subr.bf16.mxu0 0
    %2597 = vmatpush1.bf16.msra.mxu0 0
    %2598 = vmatprep.subr.bf16.mxu0 0
    %2599 = vmatpush1.bf16.msra.mxu0 0
    %2600 = vmatprep.mubr.bf16.mxu0 0
    %2601 = vmatmul.mubr.bf16.gmra.mrb[0].mxu0 %v404
    %v2602 = vpop.f32.mrb[0].mxu0
    %v2603 = vadd.f32 %v2513, %v2602
    %v2604 = vpop.f32.mrb[0].mxu0
    %v2605 = vpop.f32.mrb[0].mxu0
    %v2606 = vpop.f32.mrb[0].mxu0
    %2607 = vdwg.mxu0
    %2608 = vrot.lane.b32.xlu0 %v2410, 126
    %v2609 = vpop.permute.xlu0 %2608
    %2610 = vrot.lane.b32.xlu0 %v2411, 126
    %v2611 = vpop.permute.xlu0 %2610
    %2612 = vrot.lane.b32.xlu0 %v2412, 126
    %v2613 = vpop.permute.xlu0 %2612
    %v2614 = vsel %vm502, %v2611, %v2613
    %v2615 = vsel %vm502, %v2609, %v2611
    %v2616 = vsel %vm502, %v2613, %v2609
    %v2617 = vpack.c.bf16 %v2615, %v2615
    %v2618 = vpack.c.bf16 %v2614, %v2614
    %v2619 = vpack.c.bf16 %v2616, %v2616
    %v2621 = vsel %vm312, %v2617, 0
    %v2624 = vsel %vm312, %v2618, 0
    %v2627 = vsel %vm312, %v2619, 0
    %2629 = vmatprep.subr.bf16.mxu0 %v2624
    %2630 = vmatpush1.bf16.msra.mxu0 %v2621
    %2631 = vmatprep.subr.bf16.mxu0 0
    %2632 = vmatpush1.bf16.msra.mxu0 0
    %2633 = vmatprep.subr.bf16.mxu0 0
    %2634 = vmatpush1.bf16.msra.mxu0 0
    %2635 = vmatprep.subr.bf16.mxu0 0
    %2636 = vmatpush1.bf16.msra.mxu0 0
    %2637 = vmatprep.subr.bf16.mxu0 0
    %2638 = vmatpush1.bf16.msra.mxu0 0
    %2639 = vmatprep.subr.bf16.mxu0 0
    %2640 = vmatpush1.bf16.msra.mxu0 0
    %2641 = vmatprep.subr.bf16.mxu0 0
    %2642 = vmatpush1.bf16.msra.mxu0 0
    %2643 = vmatprep.subr.bf16.mxu0 0
    %2644 = vmatpush1.bf16.msra.mxu0 0
    %2645 = vmatprep.subr.bf16.mxu0 0
    %2646 = vmatpush1.bf16.msra.mxu0 0
    %2647 = vmatprep.subr.bf16.mxu0 0
    %2648 = vmatpush1.bf16.msra.mxu0 0
    %2649 = vmatprep.subr.bf16.mxu0 0
    %2650 = vmatpush1.bf16.msra.mxu0 0
    %2651 = vmatprep.subr.bf16.mxu0 0
    %2652 = vmatpush1.bf16.msra.mxu0 0
    %2653 = vmatprep.subr.bf16.mxu0 0
    %2654 = vmatpush1.bf16.msra.mxu0 0
    %2655 = vmatprep.subr.bf16.mxu0 0
    %2656 = vmatpush1.bf16.msra.mxu0 0
    %2657 = vmatprep.subr.bf16.mxu0 0
    %2658 = vmatpush1.bf16.msra.mxu0 0
    %2659 = vmatprep.subr.bf16.mxu0 0
    %2660 = vmatpush1.bf16.msra.mxu0 0
    %2661 = vmatprep.mubr.bf16.mxu0 0
    %2662 = vmatmul.mubr.bf16.gmra.mrb[0].mxu0 %v512
    %v2663 = vpop.f32.mrb[0].mxu0
    %v2664 = vadd.f32 0.0, %v2663
    %v2665 = vpop.f32.mrb[0].mxu0
    %v2666 = vadd.f32 0.0, %v2665
    %v2667 = vpop.f32.mrb[0].mxu0
    %v2668 = vpop.f32.mrb[0].mxu0
    %2669 = vdwg.mxu0
    %2670 = vmatprep.subr.bf16.mxu0 0
    %2671 = vmatpush1.bf16.msra.mxu0 %v2627
    %2672 = vmatprep.subr.bf16.mxu0 0
    %2673 = vmatpush1.bf16.msra.mxu0 0
    %2674 = vmatprep.subr.bf16.mxu0 0
    %2675 = vmatpush1.bf16.msra.mxu0 0
    %2676 = vmatprep.subr.bf16.mxu0 0
    %2677 = vmatpush1.bf16.msra.mxu0 0
    %2678 = vmatprep.subr.bf16.mxu0 0
    %2679 = vmatpush1.bf16.msra.mxu0 0
    %2680 = vmatprep.subr.bf16.mxu0 0
    %2681 = vmatpush1.bf16.msra.mxu0 0
    %2682 = vmatprep.subr.bf16.mxu0 0
    %2683 = vmatpush1.bf16.msra.mxu0 0
    %2684 = vmatprep.subr.bf16.mxu0 0
    %2685 = vmatpush1.bf16.msra.mxu0 0
    %2686 = vmatprep.subr.bf16.mxu0 0
    %2687 = vmatpush1.bf16.msra.mxu0 0
    %2688 = vmatprep.subr.bf16.mxu0 0
    %2689 = vmatpush1.bf16.msra.mxu0 0
    %2690 = vmatprep.subr.bf16.mxu0 0
    %2691 = vmatpush1.bf16.msra.mxu0 0
    %2692 = vmatprep.subr.bf16.mxu0 0
    %2693 = vmatpush1.bf16.msra.mxu0 0
    %2694 = vmatprep.subr.bf16.mxu0 0
    %2695 = vmatpush1.bf16.msra.mxu0 0
    %2696 = vmatprep.subr.bf16.mxu0 0
    %2697 = vmatpush1.bf16.msra.mxu0 0
    %2698 = vmatprep.subr.bf16.mxu0 0
    %2699 = vmatpush1.bf16.msra.mxu0 0
    %2700 = vmatprep.subr.bf16.mxu0 0
    %2701 = vmatpush1.bf16.msra.mxu0 0
    %2702 = vmatprep.mubr.bf16.mxu0 0
    %2703 = vmatmul.mubr.bf16.gmra.mrb[0].mxu0 %v512
    %v2704 = vpop.f32.mrb[0].mxu0
    %v2705 = vadd.f32 0.0, %v2704
    %v2706 = vpop.f32.mrb[0].mxu0
    %v2707 = vpop.f32.mrb[0].mxu0
    %v2708 = vpop.f32.mrb[0].mxu0
    %2709 = vdwg.mxu0
    %v2710 = vadd.f32 %v2562, %v2664
    %v2711 = vadd.f32 %v2564, %v2666
    %v2712 = vadd.f32 %v2603, %v2705
    %2713 = vrot.lane.b32.xlu0 %v2410, 116
    %v2714 = vpop.permute.xlu0 %2713
    %2715 = vrot.lane.b32.xlu0 %v2411, 116
    %v2716 = vpop.permute.xlu0 %2715
    %2717 = vrot.lane.b32.xlu0 %v2412, 116
    %v2718 = vpop.permute.xlu0 %2717
    %v2719 = vsel %vm613, %v2716, %v2718
    %v2720 = vsel %vm613, %v2714, %v2716
    %v2721 = vsel %vm613, %v2718, %v2714
    %v2722 = vpack.c.bf16 %v2720, %v2720
    %v2723 = vpack.c.bf16 %v2719, %v2719
    %v2724 = vpack.c.bf16 %v2721, %v2721
    %v2726 = vsel %vm312, %v2722, 0
    %v2729 = vsel %vm312, %v2723, 0
    %v2732 = vsel %vm312, %v2724, 0
    %2734 = vmatprep.subr.bf16.mxu0 %v2729
    %2735 = vmatpush1.bf16.msra.mxu0 %v2726
    %2736 = vmatprep.subr.bf16.mxu0 0
    %2737 = vmatpush1.bf16.msra.mxu0 0
    %2738 = vmatprep.subr.bf16.mxu0 0
    %2739 = vmatpush1.bf16.msra.mxu0 0
    %2740 = vmatprep.subr.bf16.mxu0 0
    %2741 = vmatpush1.bf16.msra.mxu0 0
    %2742 = vmatprep.subr.bf16.mxu0 0
    %2743 = vmatpush1.bf16.msra.mxu0 0
    %2744 = vmatprep.subr.bf16.mxu0 0
    %2745 = vmatpush1.bf16.msra.mxu0 0
    %2746 = vmatprep.subr.bf16.mxu0 0
    %2747 = vmatpush1.bf16.msra.mxu0 0
    %2748 = vmatprep.subr.bf16.mxu0 0
    %2749 = vmatpush1.bf16.msra.mxu0 0
    %2750 = vmatprep.subr.bf16.mxu0 0
    %2751 = vmatpush1.bf16.msra.mxu0 0
    %2752 = vmatprep.subr.bf16.mxu0 0
    %2753 = vmatpush1.bf16.msra.mxu0 0
    %2754 = vmatprep.subr.bf16.mxu0 0
    %2755 = vmatpush1.bf16.msra.mxu0 0
    %2756 = vmatprep.subr.bf16.mxu0 0
    %2757 = vmatpush1.bf16.msra.mxu0 0
    %2758 = vmatprep.subr.bf16.mxu0 0
    %2759 = vmatpush1.bf16.msra.mxu0 0
    %2760 = vmatprep.subr.bf16.mxu0 0
    %2761 = vmatpush1.bf16.msra.mxu0 0
    %2762 = vmatprep.subr.bf16.mxu0 0
    %2763 = vmatpush1.bf16.msra.mxu0 0
    %2764 = vmatprep.subr.bf16.mxu0 0
    %2765 = vmatpush1.bf16.msra.mxu0 0
    %2766 = vmatprep.mubr.bf16.mxu0 0
    %2767 = vmatmul.mubr.bf16.gmra.mrb[0].mxu0 %v623
    %v2768 = vpop.f32.mrb[0].mxu0
    %v2769 = vadd.f32 0.0, %v2768
    %v2770 = vpop.f32.mrb[0].mxu0
    %v2771 = vadd.f32 0.0, %v2770
    %v2772 = vpop.f32.mrb[0].mxu0
    %v2773 = vpop.f32.mrb[0].mxu0
    %2774 = vdwg.mxu0
    %2775 = vmatprep.subr.bf16.mxu0 0
    %2776 = vmatpush1.bf16.msra.mxu0 %v2732
    %2777 = vmatprep.subr.bf16.mxu0 0
    %2778 = vmatpush1.bf16.msra.mxu0 0
    %2779 = vmatprep.subr.bf16.mxu0 0
    %2780 = vmatpush1.bf16.msra.mxu0 0
    %2781 = vmatprep.subr.bf16.mxu0 0
    %2782 = vmatpush1.bf16.msra.mxu0 0
    %2783 = vmatprep.subr.bf16.mxu0 0
    %2784 = vmatpush1.bf16.msra.mxu0 0
    %2785 = vmatprep.subr.bf16.mxu0 0
    %2786 = vmatpush1.bf16.msra.mxu0 0
    %2787 = vmatprep.subr.bf16.mxu0 0
    %2788 = vmatpush1.bf16.msra.mxu0 0
    %2789 = vmatprep.subr.bf16.mxu0 0
    %2790 = vmatpush1.bf16.msra.mxu0 0
    %2791 = vmatprep.subr.bf16.mxu0 0
    %2792 = vmatpush1.bf16.msra.mxu0 0
    %2793 = vmatprep.subr.bf16.mxu0 0
    %2794 = vmatpush1.bf16.msra.mxu0 0
    %2795 = vmatprep.subr.bf16.mxu0 0
    %2796 = vmatpush1.bf16.msra.mxu0 0
    %2797 = vmatprep.subr.bf16.mxu0 0
    %2798 = vmatpush1.bf16.msra.mxu0 0
    %2799 = vmatprep.subr.bf16.mxu0 0
    %2800 = vmatpush1.bf16.msra.mxu0 0
    %2801 = vmatprep.subr.bf16.mxu0 0
    %2802 = vmatpush1.bf16.msra.mxu0 0
    %2803 = vmatprep.subr.bf16.mxu0 0
    %2804 = vmatpush1.bf16.msra.mxu0 0
    %2805 = vmatprep.subr.bf16.mxu0 0
    %2806 = vmatpush1.bf16.msra.mxu0 0
    %2807 = vmatprep.mubr.bf16.mxu0 0
    %2808 = vmatmul.mubr.bf16.gmra.mrb[0].mxu0 %v623
    %v2809 = vpop.f32.mrb[0].mxu0
    %v2810 = vadd.f32 0.0, %v2809
    %v2811 = vpop.f32.mrb[0].mxu0
    %v2812 = vpop.f32.mrb[0].mxu0
    %v2813 = vpop.f32.mrb[0].mxu0
    %2814 = vdwg.mxu0
    %v2815 = vadd.f32 %v2710, %v2769
    %v2816 = vadd.f32 %v2711, %v2771
    %v2817 = vadd.f32 %v2712, %v2810
    %2818 = vrot.lane.b32.xlu0 %v2410, 115
    %v2819 = vpop.permute.xlu0 %2818
    %2820 = vrot.lane.b32.xlu0 %v2411, 115
    %v2821 = vpop.permute.xlu0 %2820
    %2822 = vrot.lane.b32.xlu0 %v2412, 115
    %v2823 = vpop.permute.xlu0 %2822
    %v2824 = vsel %vm724, %v2821, %v2823
    %v2825 = vsel %vm724, %v2819, %v2821
    %v2826 = vsel %vm724, %v2823, %v2819
    %v2827 = vpack.c.bf16 %v2825, %v2825
    %v2828 = vpack.c.bf16 %v2824, %v2824
    %v2829 = vpack.c.bf16 %v2826, %v2826
    %v2831 = vsel %vm312, %v2827, 0
    %v2834 = vsel %vm312, %v2828, 0
    %v2837 = vsel %vm312, %v2829, 0
    %2839 = vmatprep.subr.bf16.mxu0 %v2834
    %2840 = vmatpush1.bf16.msra.mxu0 %v2831
    %2841 = vmatprep.subr.bf16.mxu0 0
    %2842 = vmatpush1.bf16.msra.mxu0 0
    %2843 = vmatprep.subr.bf16.mxu0 0
    %2844 = vmatpush1.bf16.msra.mxu0 0
    %2845 = vmatprep.subr.bf16.mxu0 0
    %2846 = vmatpush1.bf16.msra.mxu0 0
    %2847 = vmatprep.subr.bf16.mxu0 0
    %2848 = vmatpush1.bf16.msra.mxu0 0
    %2849 = vmatprep.subr.bf16.mxu0 0
    %2850 = vmatpush1.bf16.msra.mxu0 0
    %2851 = vmatprep.subr.bf16.mxu0 0
    %2852 = vmatpush1.bf16.msra.mxu0 0
    %2853 = vmatprep.subr.bf16.mxu0 0
    %2854 = vmatpush1.bf16.msra.mxu0 0
    %2855 = vmatprep.subr.bf16.mxu0 0
    %2856 = vmatpush1.bf16.msra.mxu0 0
    %2857 = vmatprep.subr.bf16.mxu0 0
    %2858 = vmatpush1.bf16.msra.mxu0 0
    %2859 = vmatprep.subr.bf16.mxu0 0
    %2860 = vmatpush1.bf16.msra.mxu0 0
    %2861 = vmatprep.subr.bf16.mxu0 0
    %2862 = vmatpush1.bf16.msra.mxu0 0
    %2863 = vmatprep.subr.bf16.mxu0 0
    %2864 = vmatpush1.bf16.msra.mxu0 0
    %2865 = vmatprep.subr.bf16.mxu0 0
    %2866 = vmatpush1.bf16.msra.mxu0 0
    %2867 = vmatprep.subr.bf16.mxu0 0
    %2868 = vmatpush1.bf16.msra.mxu0 0
    %2869 = vmatprep.subr.bf16.mxu0 0
    %2870 = vmatpush1.bf16.msra.mxu0 0
    %2871 = vmatprep.mubr.bf16.mxu0 0
    %2872 = vmatmul.mubr.bf16.gmra.mrb[0].mxu0 %v734
    %v2873 = vpop.f32.mrb[0].mxu0
    %v2874 = vadd.f32 0.0, %v2873
    %v2875 = vpop.f32.mrb[0].mxu0
    %v2876 = vadd.f32 0.0, %v2875
    %v2877 = vpop.f32.mrb[0].mxu0
    %v2878 = vpop.f32.mrb[0].mxu0
    %2879 = vdwg.mxu0
    %2880 = vmatprep.subr.bf16.mxu0 0
    %2881 = vmatpush1.bf16.msra.mxu0 %v2837
    %2882 = vmatprep.subr.bf16.mxu0 0
    %2883 = vmatpush1.bf16.msra.mxu0 0
    %2884 = vmatprep.subr.bf16.mxu0 0
    %2885 = vmatpush1.bf16.msra.mxu0 0
    %2886 = vmatprep.subr.bf16.mxu0 0
    %2887 = vmatpush1.bf16.msra.mxu0 0
    %2888 = vmatprep.subr.bf16.mxu0 0
    %2889 = vmatpush1.bf16.msra.mxu0 0
    %2890 = vmatprep.subr.bf16.mxu0 0
    %2891 = vmatpush1.bf16.msra.mxu0 0
    %2892 = vmatprep.subr.bf16.mxu0 0
    %2893 = vmatpush1.bf16.msra.mxu0 0
    %2894 = vmatprep.subr.bf16.mxu0 0
    %2895 = vmatpush1.bf16.msra.mxu0 0
    %2896 = vmatprep.subr.bf16.mxu0 0
    %2897 = vmatpush1.bf16.msra.mxu0 0
    %2898 = vmatprep.subr.bf16.mxu0 0
    %2899 = vmatpush1.bf16.msra.mxu0 0
    %2900 = vmatprep.subr.bf16.mxu0 0
    %2901 = vmatpush1.bf16.msra.mxu0 0
    %2902 = vmatprep.subr.bf16.mxu0 0
    %2903 = vmatpush1.bf16.msra.mxu0 0
    %2904 = vmatprep.subr.bf16.mxu0 0
    %2905 = vmatpush1.bf16.msra.mxu0 0
    %2906 = vmatprep.subr.bf16.mxu0 0
    %2907 = vmatpush1.bf16.msra.mxu0 0
    %2908 = vmatprep.subr.bf16.mxu0 0
    %2909 = vmatpush1.bf16.msra.mxu0 0
    %2910 = vmatprep.subr.bf16.mxu0 0
    %2911 = vmatpush1.bf16.msra.mxu0 0
    %2912 = vmatprep.mubr.bf16.mxu0 0
    %2913 = vmatmul.mubr.bf16.gmra.mrb[0].mxu0 %v734
    %v2914 = vpop.f32.mrb[0].mxu0
    %v2915 = vadd.f32 0.0, %v2914
    %v2916 = vpop.f32.mrb[0].mxu0
    %v2917 = vpop.f32.mrb[0].mxu0
    %v2918 = vpop.f32.mrb[0].mxu0
    %2919 = vdwg.mxu0
    %v2920 = vadd.f32 %v2815, %v2874
    %v2921 = vadd.f32 %v2816, %v2876
    %v2922 = vadd.f32 %v2817, %v2915
    %2923 = vrot.lane.b32.xlu0 %v2410, 114
    %v2924 = vpop.permute.xlu0 %2923
    %2925 = vrot.lane.b32.xlu0 %v2411, 114
    %v2926 = vpop.permute.xlu0 %2925
    %2927 = vrot.lane.b32.xlu0 %v2412, 114
    %v2928 = vpop.permute.xlu0 %2927
    %v2929 = vsel %vm835, %v2926, %v2928
    %v2930 = vsel %vm835, %v2924, %v2926
    %v2931 = vsel %vm835, %v2928, %v2924
    %v2932 = vpack.c.bf16 %v2930, %v2930
    %v2933 = vpack.c.bf16 %v2929, %v2929
    %v2934 = vpack.c.bf16 %v2931, %v2931
    %v2936 = vsel %vm312, %v2932, 0
    %v2939 = vsel %vm312, %v2933, 0
    %v2942 = vsel %vm312, %v2934, 0
    %2944 = vmatprep.subr.bf16.mxu0 %v2939
    %2945 = vmatpush1.bf16.msra.mxu0 %v2936
    %2946 = vmatprep.subr.bf16.mxu0 0
    %2947 = vmatpush1.bf16.msra.mxu0 0
    %2948 = vmatprep.subr.bf16.mxu0 0
    %2949 = vmatpush1.bf16.msra.mxu0 0
    %2950 = vmatprep.subr.bf16.mxu0 0
    %2951 = vmatpush1.bf16.msra.mxu0 0
    %2952 = vmatprep.subr.bf16.mxu0 0
    %2953 = vmatpush1.bf16.msra.mxu0 0
    %2954 = vmatprep.subr.bf16.mxu0 0
    %2955 = vmatpush1.bf16.msra.mxu0 0
    %2956 = vmatprep.subr.bf16.mxu0 0
    %2957 = vmatpush1.bf16.msra.mxu0 0
    %2958 = vmatprep.subr.bf16.mxu0 0
    %2959 = vmatpush1.bf16.msra.mxu0 0
    %2960 = vmatprep.subr.bf16.mxu0 0
    %2961 = vmatpush1.bf16.msra.mxu0 0
    %2962 = vmatprep.subr.bf16.mxu0 0
    %2963 = vmatpush1.bf16.msra.mxu0 0
    %2964 = vmatprep.subr.bf16.mxu0 0
    %2965 = vmatpush1.bf16.msra.mxu0 0
    %2966 = vmatprep.subr.bf16.mxu0 0
    %2967 = vmatpush1.bf16.msra.mxu0 0
    %2968 = vmatprep.subr.bf16.mxu0 0
    %2969 = vmatpush1.bf16.msra.mxu0 0
    %2970 = vmatprep.subr.bf16.mxu0 0
    %2971 = vmatpush1.bf16.msra.mxu0 0
    %2972 = vmatprep.subr.bf16.mxu0 0
    %2973 = vmatpush1.bf16.msra.mxu0 0
    %2974 = vmatprep.subr.bf16.mxu0 0
    %2975 = vmatpush1.bf16.msra.mxu0 0
    %2976 = vmatprep.mubr.bf16.mxu0 0
    %2977 = vmatmul.mubr.bf16.gmra.mrb[0].mxu0 %v845
    %v2978 = vpop.f32.mrb[0].mxu0
    %v2979 = vadd.f32 0.0, %v2978
    %v2980 = vpop.f32.mrb[0].mxu0
    %v2981 = vadd.f32 0.0, %v2980
    %v2982 = vpop.f32.mrb[0].mxu0
    %v2983 = vpop.f32.mrb[0].mxu0
    %2984 = vdwg.mxu0
    %2985 = vmatprep.subr.bf16.mxu0 0
    %2986 = vmatpush1.bf16.msra.mxu0 %v2942
    %2987 = vmatprep.subr.bf16.mxu0 0
    %2988 = vmatpush1.bf16.msra.mxu0 0
    %2989 = vmatprep.subr.bf16.mxu0 0
    %2990 = vmatpush1.bf16.msra.mxu0 0
    %2991 = vmatprep.subr.bf16.mxu0 0
    %2992 = vmatpush1.bf16.msra.mxu0 0
    %2993 = vmatprep.subr.bf16.mxu0 0
    %2994 = vmatpush1.bf16.msra.mxu0 0
    %2995 = vmatprep.subr.bf16.mxu0 0
    %2996 = vmatpush1.bf16.msra.mxu0 0
    %2997 = vmatprep.subr.bf16.mxu0 0
    %2998 = vmatpush1.bf16.msra.mxu0 0
    %2999 = vmatprep.subr.bf16.mxu0 0
    %3000 = vmatpush1.bf16.msra.mxu0 0
    %3001 = vmatprep.subr.bf16.mxu0 0
    %3002 = vmatpush1.bf16.msra.mxu0 0
    %3003 = vmatprep.subr.bf16.mxu0 0
    %3004 = vmatpush1.bf16.msra.mxu0 0
    %3005 = vmatprep.subr.bf16.mxu0 0
    %3006 = vmatpush1.bf16.msra.mxu0 0
    %3007 = vmatprep.subr.bf16.mxu0 0
    %3008 = vmatpush1.bf16.msra.mxu0 0
    %3009 = vmatprep.subr.bf16.mxu0 0
    %3010 = vmatpush1.bf16.msra.mxu0 0
    %3011 = vmatprep.subr.bf16.mxu0 0
    %3012 = vmatpush1.bf16.msra.mxu0 0
    %3013 = vmatprep.subr.bf16.mxu0 0
    %3014 = vmatpush1.bf16.msra.mxu0 0
    %3015 = vmatprep.subr.bf16.mxu0 0
    %3016 = vmatpush1.bf16.msra.mxu0 0
    %3017 = vmatprep.mubr.bf16.mxu0 0
    %3018 = vmatmul.mubr.bf16.gmra.mrb[0].mxu0 %v845
    %v3019 = vpop.f32.mrb[0].mxu0
    %v3020 = vadd.f32 0.0, %v3019
    %v3021 = vpop.f32.mrb[0].mxu0
    %v3022 = vpop.f32.mrb[0].mxu0
    %v3023 = vpop.f32.mrb[0].mxu0
    %3024 = vdwg.mxu0
    %v3025 = vadd.f32 %v2920, %v2979
    %v3026 = vadd.f32 %v2921, %v2981
    %v3027 = vadd.f32 %v2922, %v3020
    %3028 = vrot.lane.b32.xlu0 %v2410, 104
    %v3029 = vpop.permute.xlu0 %3028
    %3030 = vrot.lane.b32.xlu0 %v2411, 104
    %v3031 = vpop.permute.xlu0 %3030
    %3032 = vrot.lane.b32.xlu0 %v2412, 104
    %v3033 = vpop.permute.xlu0 %3032
    %v3034 = vsel %vm946, %v3031, %v3033
    %v3035 = vsel %vm946, %v3029, %v3031
    %v3036 = vsel %vm946, %v3033, %v3029
    %v3037 = vpack.c.bf16 %v3035, %v3035
    %v3038 = vpack.c.bf16 %v3034, %v3034
    %v3039 = vpack.c.bf16 %v3036, %v3036
    %v3041 = vsel %vm312, %v3037, 0
    %v3044 = vsel %vm312, %v3038, 0
    %v3047 = vsel %vm312, %v3039, 0
    %3049 = vmatprep.subr.bf16.mxu0 %v3044
    %3050 = vmatpush1.bf16.msra.mxu0 %v3041
    %3051 = vmatprep.subr.bf16.mxu0 0
    %3052 = vmatpush1.bf16.msra.mxu0 0
    %3053 = vmatprep.subr.bf16.mxu0 0
    %3054 = vmatpush1.bf16.msra.mxu0 0
    %3055 = vmatprep.subr.bf16.mxu0 0
    %3056 = vmatpush1.bf16.msra.mxu0 0
    %3057 = vmatprep.subr.bf16.mxu0 0
    %3058 = vmatpush1.bf16.msra.mxu0 0
    %3059 = vmatprep.subr.bf16.mxu0 0
    %3060 = vmatpush1.bf16.msra.mxu0 0
    %3061 = vmatprep.subr.bf16.mxu0 0
    %3062 = vmatpush1.bf16.msra.mxu0 0
    %3063 = vmatprep.subr.bf16.mxu0 0
    %3064 = vmatpush1.bf16.msra.mxu0 0
    %3065 = vmatprep.subr.bf16.mxu0 0
    %3066 = vmatpush1.bf16.msra.mxu0 0
    %3067 = vmatprep.subr.bf16.mxu0 0
    %3068 = vmatpush1.bf16.msra.mxu0 0
    %3069 = vmatprep.subr.bf16.mxu0 0
    %3070 = vmatpush1.bf16.msra.mxu0 0
    %3071 = vmatprep.subr.bf16.mxu0 0
    %3072 = vmatpush1.bf16.msra.mxu0 0
    %3073 = vmatprep.subr.bf16.mxu0 0
    %3074 = vmatpush1.bf16.msra.mxu0 0
    %3075 = vmatprep.subr.bf16.mxu0 0
    %3076 = vmatpush1.bf16.msra.mxu0 0
    %3077 = vmatprep.subr.bf16.mxu0 0
    %3078 = vmatpush1.bf16.msra.mxu0 0
    %3079 = vmatprep.subr.bf16.mxu0 0
    %3080 = vmatpush1.bf16.msra.mxu0 0
    %3081 = vmatprep.mubr.bf16.mxu0 0
    %3082 = vmatmul.mubr.bf16.gmra.mrb[0].mxu0 %v956
    %v3083 = vpop.f32.mrb[0].mxu0
    %v3084 = vadd.f32 0.0, %v3083
    %v3085 = vpop.f32.mrb[0].mxu0
    %v3086 = vadd.f32 0.0, %v3085
    %v3087 = vpop.f32.mrb[0].mxu0
    %v3088 = vpop.f32.mrb[0].mxu0
    %3089 = vdwg.mxu0
    %3090 = vmatprep.subr.bf16.mxu0 0
    %3091 = vmatpush1.bf16.msra.mxu0 %v3047
    %3092 = vmatprep.subr.bf16.mxu0 0
    %3093 = vmatpush1.bf16.msra.mxu0 0
    %3094 = vmatprep.subr.bf16.mxu0 0
    %3095 = vmatpush1.bf16.msra.mxu0 0
    %3096 = vmatprep.subr.bf16.mxu0 0
    %3097 = vmatpush1.bf16.msra.mxu0 0
    %3098 = vmatprep.subr.bf16.mxu0 0
    %3099 = vmatpush1.bf16.msra.mxu0 0
    %3100 = vmatprep.subr.bf16.mxu0 0
    %3101 = vmatpush1.bf16.msra.mxu0 0
    %3102 = vmatprep.subr.bf16.mxu0 0
    %3103 = vmatpush1.bf16.msra.mxu0 0
    %3104 = vmatprep.subr.bf16.mxu0 0
    %3105 = vmatpush1.bf16.msra.mxu0 0
    %3106 = vmatprep.subr.bf16.mxu0 0
    %3107 = vmatpush1.bf16.msra.mxu0 0
    %3108 = vmatprep.subr.bf16.mxu0 0
    %3109 = vmatpush1.bf16.msra.mxu0 0
    %3110 = vmatprep.subr.bf16.mxu0 0
    %3111 = vmatpush1.bf16.msra.mxu0 0
    %3112 = vmatprep.subr.bf16.mxu0 0
    %3113 = vmatpush1.bf16.msra.mxu0 0
    %3114 = vmatprep.subr.bf16.mxu0 0
    %3115 = vmatpush1.bf16.msra.mxu0 0
    %3116 = vmatprep.subr.bf16.mxu0 0
    %3117 = vmatpush1.bf16.msra.mxu0 0
    %3118 = vmatprep.subr.bf16.mxu0 0
    %3119 = vmatpush1.bf16.msra.mxu0 0
    %3120 = vmatprep.subr.bf16.mxu0 0
    %3121 = vmatpush1.bf16.msra.mxu0 0
    %3122 = vmatprep.mubr.bf16.mxu0 0
    %3123 = vmatmul.mubr.bf16.gmra.mrb[0].mxu0 %v956
    %v3124 = vpop.f32.mrb[0].mxu0
    %v3125 = vadd.f32 0.0, %v3124
    %v3126 = vpop.f32.mrb[0].mxu0
    %v3127 = vpop.f32.mrb[0].mxu0
    %v3128 = vpop.f32.mrb[0].mxu0
    %3129 = vdwg.mxu0
    %v3130 = vadd.f32 %v3025, %v3084
    %v3131 = vadd.f32 %v3026, %v3086
    %v3132 = vadd.f32 %v3027, %v3125
    %3133 = vrot.lane.b32.xlu0 %v2410, 103
    %v3134 = vpop.permute.xlu0 %3133
    %3135 = vrot.lane.b32.xlu0 %v2411, 103
    %v3136 = vpop.permute.xlu0 %3135
    %3137 = vrot.lane.b32.xlu0 %v2412, 103
    %v3138 = vpop.permute.xlu0 %3137
    %v3139 = vsel %vm1057, %v3136, %v3138
    %v3140 = vsel %vm1057, %v3134, %v3136
    %v3141 = vsel %vm1057, %v3138, %v3134
    %v3142 = vpack.c.bf16 %v3140, %v3140
    %v3143 = vpack.c.bf16 %v3139, %v3139
    %v3144 = vpack.c.bf16 %v3141, %v3141
    %v3146 = vsel %vm312, %v3142, 0
    %v3149 = vsel %vm312, %v3143, 0
    %v3152 = vsel %vm312, %v3144, 0
    %3154 = vmatprep.subr.bf16.mxu0 %v3149
    %3155 = vmatpush1.bf16.msra.mxu0 %v3146
    %3156 = vmatprep.subr.bf16.mxu0 0
    %3157 = vmatpush1.bf16.msra.mxu0 0
    %3158 = vmatprep.subr.bf16.mxu0 0
    %3159 = vmatpush1.bf16.msra.mxu0 0
    %3160 = vmatprep.subr.bf16.mxu0 0
    %3161 = vmatpush1.bf16.msra.mxu0 0
    %3162 = vmatprep.subr.bf16.mxu0 0
    %3163 = vmatpush1.bf16.msra.mxu0 0
    %3164 = vmatprep.subr.bf16.mxu0 0
    %3165 = vmatpush1.bf16.msra.mxu0 0
    %3166 = vmatprep.subr.bf16.mxu0 0
    %3167 = vmatpush1.bf16.msra.mxu0 0
    %3168 = vmatprep.subr.bf16.mxu0 0
    %3169 = vmatpush1.bf16.msra.mxu0 0
    %3170 = vmatprep.subr.bf16.mxu0 0
    %3171 = vmatpush1.bf16.msra.mxu0 0
    %3172 = vmatprep.subr.bf16.mxu0 0
    %3173 = vmatpush1.bf16.msra.mxu0 0
    %3174 = vmatprep.subr.bf16.mxu0 0
    %3175 = vmatpush1.bf16.msra.mxu0 0
    %3176 = vmatprep.subr.bf16.mxu0 0
    %3177 = vmatpush1.bf16.msra.mxu0 0
    %3178 = vmatprep.subr.bf16.mxu0 0
    %3179 = vmatpush1.bf16.msra.mxu0 0
    %3180 = vmatprep.subr.bf16.mxu0 0
    %3181 = vmatpush1.bf16.msra.mxu0 0
    %3182 = vmatprep.subr.bf16.mxu0 0
    %3183 = vmatpush1.bf16.msra.mxu0 0
    %3184 = vmatprep.subr.bf16.mxu0 0
    %3185 = vmatpush1.bf16.msra.mxu0 0
    %3186 = vmatprep.mubr.bf16.mxu0 0
    %3187 = vmatmul.mubr.bf16.gmra.mrb[0].mxu0 %v1067
    %v3188 = vpop.f32.mrb[0].mxu0
    %v3189 = vadd.f32 0.0, %v3188
    %v3190 = vpop.f32.mrb[0].mxu0
    %v3191 = vadd.f32 0.0, %v3190
    %v3192 = vpop.f32.mrb[0].mxu0
    %v3193 = vpop.f32.mrb[0].mxu0
    %3194 = vdwg.mxu0
    %3195 = vmatprep.subr.bf16.mxu0 0
    %3196 = vmatpush1.bf16.msra.mxu0 %v3152
    %3197 = vmatprep.subr.bf16.mxu0 0
    %3198 = vmatpush1.bf16.msra.mxu0 0
    %3199 = vmatprep.subr.bf16.mxu0 0
    %3200 = vmatpush1.bf16.msra.mxu0 0
    %3201 = vmatprep.subr.bf16.mxu0 0
    %3202 = vmatpush1.bf16.msra.mxu0 0
    %3203 = vmatprep.subr.bf16.mxu0 0
    %3204 = vmatpush1.bf16.msra.mxu0 0
    %3205 = vmatprep.subr.bf16.mxu0 0
    %3206 = vmatpush1.bf16.msra.mxu0 0
    %3207 = vmatprep.subr.bf16.mxu0 0
    %3208 = vmatpush1.bf16.msra.mxu0 0
    %3209 = vmatprep.subr.bf16.mxu0 0
    %3210 = vmatpush1.bf16.msra.mxu0 0
    %3211 = vmatprep.subr.bf16.mxu0 0
    %3212 = vmatpush1.bf16.msra.mxu0 0
    %3213 = vmatprep.subr.bf16.mxu0 0
    %3214 = vmatpush1.bf16.msra.mxu0 0
    %3215 = vmatprep.subr.bf16.mxu0 0
    %3216 = vmatpush1.bf16.msra.mxu0 0
    %3217 = vmatprep.subr.bf16.mxu0 0
    %3218 = vmatpush1.bf16.msra.mxu0 0
    %3219 = vmatprep.subr.bf16.mxu0 0
    %3220 = vmatpush1.bf16.msra.mxu0 0
    %3221 = vmatprep.subr.bf16.mxu0 0
    %3222 = vmatpush1.bf16.msra.mxu0 0
    %3223 = vmatprep.subr.bf16.mxu0 0
    %3224 = vmatpush1.bf16.msra.mxu0 0
    %3225 = vmatprep.subr.bf16.mxu0 0
    %3226 = vmatpush1.bf16.msra.mxu0 0
    %3227 = vmatprep.mubr.bf16.mxu0 0
    %3228 = vmatmul.mubr.bf16.gmra.mrb[0].mxu0 %v1067
    %v3229 = vpop.f32.mrb[0].mxu0
    %v3230 = vadd.f32 0.0, %v3229
    %v3231 = vpop.f32.mrb[0].mxu0
    %v3232 = vpop.f32.mrb[0].mxu0
    %v3233 = vpop.f32.mrb[0].mxu0
    %3234 = vdwg.mxu0
    %v3235 = vadd.f32 %v3130, %v3189
    %v3236 = vadd.f32 %v3131, %v3191
    %v3237 = vadd.f32 %v3132, %v3230
    %3238 = vrot.lane.b32.xlu0 %v2410, 102
    %v3239 = vpop.permute.xlu0 %3238
    %3240 = vrot.lane.b32.xlu0 %v2411, 102
    %v3241 = vpop.permute.xlu0 %3240
    %3242 = vrot.lane.b32.xlu0 %v2412, 102
    %v3243 = vpop.permute.xlu0 %3242
    %v3244 = vsel %vm1168, %v3241, %v3243
    %v3245 = vsel %vm1168, %v3239, %v3241
    %v3246 = vsel %vm1168, %v3243, %v3239
    %v3247 = vpack.c.bf16 %v3245, %v3245
    %v3248 = vpack.c.bf16 %v3244, %v3244
    %v3249 = vpack.c.bf16 %v3246, %v3246
    %v3251 = vsel %vm312, %v3247, 0
    %v3254 = vsel %vm312, %v3248, 0
    %v3257 = vsel %vm312, %v3249, 0
    %3259 = vmatprep.subr.bf16.mxu0 %v3254
    %3260 = vmatpush1.bf16.msra.mxu0 %v3251
    %3261 = vmatprep.subr.bf16.mxu0 0
    %3262 = vmatpush1.bf16.msra.mxu0 0
    %3263 = vmatprep.subr.bf16.mxu0 0
    %3264 = vmatpush1.bf16.msra.mxu0 0
    %3265 = vmatprep.subr.bf16.mxu0 0
    %3266 = vmatpush1.bf16.msra.mxu0 0
    %3267 = vmatprep.subr.bf16.mxu0 0
    %3268 = vmatpush1.bf16.msra.mxu0 0
    %3269 = vmatprep.subr.bf16.mxu0 0
    %3270 = vmatpush1.bf16.msra.mxu0 0
    %3271 = vmatprep.subr.bf16.mxu0 0
    %3272 = vmatpush1.bf16.msra.mxu0 0
    %3273 = vmatprep.subr.bf16.mxu0 0
    %3274 = vmatpush1.bf16.msra.mxu0 0
    %3275 = vmatprep.subr.bf16.mxu0 0
    %3276 = vmatpush1.bf16.msra.mxu0 0
    %3277 = vmatprep.subr.bf16.mxu0 0
    %3278 = vmatpush1.bf16.msra.mxu0 0
    %3279 = vmatprep.subr.bf16.mxu0 0
    %3280 = vmatpush1.bf16.msra.mxu0 0
    %3281 = vmatprep.subr.bf16.mxu0 0
    %3282 = vmatpush1.bf16.msra.mxu0 0
    %3283 = vmatprep.subr.bf16.mxu0 0
    %3284 = vmatpush1.bf16.msra.mxu0 0
    %3285 = vmatprep.subr.bf16.mxu0 0
    %3286 = vmatpush1.bf16.msra.mxu0 0
    %3287 = vmatprep.subr.bf16.mxu0 0
    %3288 = vmatpush1.bf16.msra.mxu0 0
    %3289 = vmatprep.subr.bf16.mxu0 0
    %3290 = vmatpush1.bf16.msra.mxu0 0
    %3291 = vmatprep.mubr.bf16.mxu0 0
    %3292 = vmatmul.mubr.bf16.gmra.mrb[0].mxu0 %v1178
    %v3293 = vpop.f32.mrb[0].mxu0
    %v3294 = vadd.f32 0.0, %v3293
    %v3295 = vpop.f32.mrb[0].mxu0
    %v3296 = vadd.f32 0.0, %v3295
    %v3297 = vpop.f32.mrb[0].mxu0
    %v3298 = vpop.f32.mrb[0].mxu0
    %3299 = vdwg.mxu0
    %3300 = vmatprep.subr.bf16.mxu0 0
    %3301 = vmatpush1.bf16.msra.mxu0 %v3257
    %3302 = vmatprep.subr.bf16.mxu0 0
    %3303 = vmatpush1.bf16.msra.mxu0 0
    %3304 = vmatprep.subr.bf16.mxu0 0
    %3305 = vmatpush1.bf16.msra.mxu0 0
    %3306 = vmatprep.subr.bf16.mxu0 0
    %3307 = vmatpush1.bf16.msra.mxu0 0
    %3308 = vmatprep.subr.bf16.mxu0 0
    %3309 = vmatpush1.bf16.msra.mxu0 0
    %3310 = vmatprep.subr.bf16.mxu0 0
    %3311 = vmatpush1.bf16.msra.mxu0 0
    %3312 = vmatprep.subr.bf16.mxu0 0
    %3313 = vmatpush1.bf16.msra.mxu0 0
    %3314 = vmatprep.subr.bf16.mxu0 0
    %3315 = vmatpush1.bf16.msra.mxu0 0
    %3316 = vmatprep.subr.bf16.mxu0 0
    %3317 = vmatpush1.bf16.msra.mxu0 0
    %3318 = vmatprep.subr.bf16.mxu0 0
    %3319 = vmatpush1.bf16.msra.mxu0 0
    %3320 = vmatprep.subr.bf16.mxu0 0
    %3321 = vmatpush1.bf16.msra.mxu0 0
    %3322 = vmatprep.subr.bf16.mxu0 0
    %3323 = vmatpush1.bf16.msra.mxu0 0
    %3324 = vmatprep.subr.bf16.mxu0 0
    %3325 = vmatpush1.bf16.msra.mxu0 0
    %3326 = vmatprep.subr.bf16.mxu0 0
    %3327 = vmatpush1.bf16.msra.mxu0 0
    %3328 = vmatprep.subr.bf16.mxu0 0
    %3329 = vmatpush1.bf16.msra.mxu0 0
    %3330 = vmatprep.subr.bf16.mxu0 0
    %3331 = vmatpush1.bf16.msra.mxu0 0
    %3332 = vmatprep.mubr.bf16.mxu0 0
    %3333 = vmatmul.mubr.bf16.gmra.mrb[0].mxu0 %v1178
    %v3334 = vpop.f32.mrb[0].mxu0
    %v3335 = vadd.f32 0.0, %v3334
    %v3336 = vpop.f32.mrb[0].mxu0
    %v3337 = vpop.f32.mrb[0].mxu0
    %v3338 = vpop.f32.mrb[0].mxu0
    %3339 = vdwg.mxu0
    %v3340 = vadd.f32 %v3235, %v3294
    %v3341 = vadd.f32 %v3236, %v3296
    %v3342 = vadd.f32 %v3237, %v3335
    %v3343 = vadd.f32 %v3340, %v1277
    %v3344 = vadd.f32 %v3341, %v1277
    %v3345 = vadd.f32 %v3342, %v1277
    %v3346 = vmax.f32 %v3343, 0.0
    %v3347 = vmax.f32 %v3344, 0.0
    %v3348 = vmax.f32 %v3345, 0.0
    %3349 = vst [vmem:[#allocation2] sm:$0xff] %v3346
    %3350 = vst [vmem:[#allocation2 + $0x8] sm:$0xff] %v3347
    %3351 = vst [vmem:[#allocation2 + $0x10] sm:$0xff] %v3348
    %v3352 = vld [vmem:[#allocation2] ss:$0 sm:$0xff]
    %vm3353 = vcmask 24576
    %3354 = vst.msk [vmem:[#allocation3] sm:$0x1] %vm3353, %v3352
    %v3355 = vld [vmem:[#allocation2] ss:$0 sm:$0xff]
    %3357 = vrot.lane.b32.xlu0 %v3355, 120
    %v3358 = vpop.permute.xlu0 %3357
    %vm3360 = vcmask 57376
    %3361 = vst.msk [vmem:[#allocation3] sm:$0x1] %vm3360, %v3358
    %v3362 = vld [vmem:[#allocation2] ss:$0 sm:$0xff]
    %3364 = vrot.lane.b32.xlu0 %v3362, 112
    %v3365 = vpop.permute.xlu0 %3364
    %vm3367 = vcmask 90176
    %3368 = vst.msk [vmem:[#allocation3] sm:$0x1] %vm3367, %v3365
    %v3369 = vld [vmem:[#allocation2] ss:$0 sm:$0xff]
    %3371 = vrot.lane.b32.xlu0 %v3369, 104
    %v3372 = vpop.permute.xlu0 %3371
    %vm3374 = vcmask 122976
    %3375 = vst.msk [vmem:[#allocation3] sm:$0x1] %vm3374, %v3372
    %v3376 = vld [vmem:[#allocation2 + $0x1] ss:$0 sm:$0xff]
    %3378 = vrot.lane.b32.xlu0 %v3376, 16
    %v3379 = vpop.permute.xlu0 %3378
    %vm3381 = vcmask 155776
    %3382 = vst.msk [vmem:[#allocation3] sm:$0x1] %vm3381, %v3379
    %v3383 = vld [vmem:[#allocation2 + $0x1] ss:$0 sm:$0xff]
    %3385 = vrot.lane.b32.xlu0 %v3383, 8
    %v3386 = vpop.permute.xlu0 %3385
    %vm3388 = vcmask 188576
    %3389 = vst.msk [vmem:[#allocation3] sm:$0x1] %vm3388, %v3386
    %v3390 = vld [vmem:[#allocation2 + $0x1] ss:$0 sm:$0xff]
    %vm3391 = vcmask 221376
    %3392 = vst.msk [vmem:[#allocation3] sm:$0x1] %vm3391, %v3390
    %v3393 = vld [vmem:[#allocation2 + $0x1] ss:$0 sm:$0xff]
    %3395 = vrot.lane.b32.xlu0 %v3393, 120
    %v3396 = vpop.permute.xlu0 %3395
    %vm3398 = vcmask 254176
    %3399 = vst.msk [vmem:[#allocation3] sm:$0x1] %vm3398, %v3396
    %v3400 = vld [vmem:[#allocation2 + $0x2] ss:$0 sm:$0xff]
    %3402 = vrot.lane.b32.xlu0 %v3400, 32
    %v3403 = vpop.permute.xlu0 %3402
    %vm3405 = vcmask 286976
    %3406 = vst.msk [vmem:[#allocation3] sm:$0x1] %vm3405, %v3403
    %v3407 = vld [vmem:[#allocation2 + $0x2] ss:$0 sm:$0xff]
    %3409 = vrot.lane.b32.xlu0 %v3407, 24
    %v3410 = vpop.permute.xlu0 %3409
    %vm3412 = vcmask 319776
    %3413 = vst.msk [vmem:[#allocation3] sm:$0x1] %vm3412, %v3410
    %v3414 = vld [vmem:[#allocation2 + $0x2] ss:$0 sm:$0xff]
    %3416 = vrot.lane.b32.xlu0 %v3414, 16
    %v3417 = vpop.permute.xlu0 %3416
    %vm3419 = vcmask 352576
    %3420 = vst.msk [vmem:[#allocation3] sm:$0x1] %vm3419, %v3417
    %v3421 = vld [vmem:[#allocation2 + $0x2] ss:$0 sm:$0xff]
    %3423 = vrot.lane.b32.xlu0 %v3421, 8
    %v3424 = vpop.permute.xlu0 %3423
    %vm3426 = vcmask 385376
    %3427 = vst.msk [vmem:[#allocation3] sm:$0x1] %vm3426, %v3424
    %v3428 = vld [vmem:[#allocation2 + $0x3] ss:$0 sm:$0xff]
    %3430 = vrot.lane.b32.xlu0 %v3428, 48
    %v3431 = vpop.permute.xlu0 %3430
    %vm3433 = vcmask 418176
    %3434 = vst.msk [vmem:[#allocation3] sm:$0x1] %vm3433, %v3431
    %v3435 = vld [vmem:[#allocation2 + $0x3] ss:$0 sm:$0xff]
    %3437 = vrot.lane.b32.xlu0 %v3435, 40
    %v3438 = vpop.permute.xlu0 %3437
    %vm3440 = vcmask 450976
    %3441 = vst.msk [vmem:[#allocation3] sm:$0x1] %vm3440, %v3438
    %v3442 = vld [vmem:[#allocation2 + $0x3] ss:$0 sm:$0xff]
    %3444 = vrot.lane.b32.xlu0 %v3442, 32
    %v3445 = vpop.permute.xlu0 %3444
    %vm3447 = vcmask 483776
    %3448 = vst.msk [vmem:[#allocation3] sm:$0x1] %vm3447, %v3445
    %v3449 = vld [vmem:[#allocation2 + $0x3] ss:$0 sm:$0xff]
    %3451 = vrot.lane.b32.xlu0 %v3449, 24
    %v3452 = vpop.permute.xlu0 %3451
    %vm3454 = vcmask 516576
    %3455 = vst.msk [vmem:[#allocation3] sm:$0x1] %vm3454, %v3452
    %v3456 = vld [vmem:[#allocation2 + $0x4] ss:$0 sm:$0xff]
    %3458 = vrot.lane.b32.xlu0 %v3456, 64
    %v3459 = vpop.permute.xlu0 %3458
    %vm3461 = vcmask 549376
    %3462 = vst.msk [vmem:[#allocation3] sm:$0x1] %vm3461, %v3459
    %v3463 = vld [vmem:[#allocation2 + $0x4] ss:$0 sm:$0xff]
    %3465 = vrot.lane.b32.xlu0 %v3463, 56
    %v3466 = vpop.permute.xlu0 %3465
    %vm3468 = vcmask 582176
    %3469 = vst.msk [vmem:[#allocation3] sm:$0x1] %vm3468, %v3466
    %v3470 = vld [vmem:[#allocation2 + $0x4] ss:$0 sm:$0xff]
    %3472 = vrot.lane.b32.xlu0 %v3470, 48
    %v3473 = vpop.permute.xlu0 %3472
    %vm3475 = vcmask 614976
    %3476 = vst.msk [vmem:[#allocation3] sm:$0x1] %vm3475, %v3473
    %v3477 = vld [vmem:[#allocation2 + $0x4] ss:$0 sm:$0xff]
    %3479 = vrot.lane.b32.xlu0 %v3477, 40
    %v3480 = vpop.permute.xlu0 %3479
    %vm3482 = vcmask 647776
    %3483 = vst.msk [vmem:[#allocation3] sm:$0x1] %vm3482, %v3480
    %v3484 = vld [vmem:[#allocation2 + $0x5] ss:$0 sm:$0xff]
    %3486 = vrot.lane.b32.xlu0 %v3484, 80
    %v3487 = vpop.permute.xlu0 %3486
    %vm3489 = vcmask 680576
    %3490 = vst.msk [vmem:[#allocation3] sm:$0x1] %vm3489, %v3487
    %v3491 = vld [vmem:[#allocation2 + $0x5] ss:$0 sm:$0xff]
    %3493 = vrot.lane.b32.xlu0 %v3491, 72
    %v3494 = vpop.permute.xlu0 %3493
    %vm3496 = vcmask 713376
    %3497 = vst.msk [vmem:[#allocation3] sm:$0x1] %vm3496, %v3494
    %v3498 = vld [vmem:[#allocation2 + $0x5] ss:$0 sm:$0xff]
    %3500 = vrot.lane.b32.xlu0 %v3498, 64
    %v3501 = vpop.permute.xlu0 %3500
    %vm3503 = vcmask 746176
    %3504 = vst.msk [vmem:[#allocation3] sm:$0x1] %vm3503, %v3501
    %v3505 = vld [vmem:[#allocation2 + $0x5] ss:$0 sm:$0xff]
    %3507 = vrot.lane.b32.xlu0 %v3505, 56
    %v3508 = vpop.permute.xlu0 %3507
    %vm3510 = vcmask 778976
    %3511 = vst.msk [vmem:[#allocation3] sm:$0x1] %vm3510, %v3508
    %v3512 = vld [vmem:[#allocation2 + $0x6] ss:$0 sm:$0xff]
    %3514 = vrot.lane.b32.xlu0 %v3512, 96
    %v3515 = vpop.permute.xlu0 %3514
    %vm3517 = vcmask 811776
    %3518 = vst.msk [vmem:[#allocation3] sm:$0x1] %vm3517, %v3515
    %v3519 = vld [vmem:[#allocation2 + $0x6] ss:$0 sm:$0xff]
    %3521 = vrot.lane.b32.xlu0 %v3519, 88
    %v3522 = vpop.permute.xlu0 %3521
    %vm3524 = vcmask 844576
    %3525 = vst.msk [vmem:[#allocation3] sm:$0x1] %vm3524, %v3522
    %v3526 = vld [vmem:[#allocation2 + $0x6] ss:$0 sm:$0xff]
    %3528 = vrot.lane.b32.xlu0 %v3526, 80
    %v3529 = vpop.permute.xlu0 %3528
    %vm3531 = vcmask 877376
    %3532 = vst.msk [vmem:[#allocation3] sm:$0x1] %vm3531, %v3529
    %v3533 = vld [vmem:[#allocation2 + $0x6] ss:$0 sm:$0xff]
    %3535 = vrot.lane.b32.xlu0 %v3533, 72
    %v3536 = vpop.permute.xlu0 %3535
    %vm3538 = vcmask 910176
    %3539 = vst.msk [vmem:[#allocation3] sm:$0x1] %vm3538, %v3536
    %v3540 = vld [vmem:[#allocation2 + $0x7] ss:$0 sm:$0xff]
    %3542 = vrot.lane.b32.xlu0 %v3540, 112
    %v3543 = vpop.permute.xlu0 %3542
    %vm3545 = vcmask 942976
    %3546 = vst.msk [vmem:[#allocation3] sm:$0x1] %vm3545, %v3543
    %v3547 = vld [vmem:[#allocation2 + $0x7] ss:$0 sm:$0xff]
    %3549 = vrot.lane.b32.xlu0 %v3547, 104
    %v3550 = vpop.permute.xlu0 %3549
    %vm3552 = vcmask 975776
    %3553 = vst.msk [vmem:[#allocation3] sm:$0x1] %vm3552, %v3550
    %v3554 = vld [vmem:[#allocation2 + $0x7] ss:$0 sm:$0xff]
    %3556 = vrot.lane.b32.xlu0 %v3554, 96
    %v3557 = vpop.permute.xlu0 %3556
    %vm3559 = vcmask 1008576
    %3560 = vst.msk [vmem:[#allocation3] sm:$0x1] %vm3559, %v3557
    %v3561 = vld [vmem:[#allocation2 + $0x7] ss:$0 sm:$0xff]
    %3563 = vrot.lane.b32.xlu0 %v3561, 88
    %v3564 = vpop.permute.xlu0 %3563
    %vm3566 = vcmask 1041376
    %3567 = vst.msk [vmem:[#allocation3] sm:$0x1] %vm3566, %v3564
    %v3568 = vld [vmem:[#allocation2 + $0x8] ss:$0 sm:$0xff]
    %3570 = vrot.lane.b32.xlu0 %v3568, 112
    %v3571 = vpop.permute.xlu0 %3570
    %3573 = vst.msk [vmem:[#allocation3 + $0x1] sm:$0x1] %vm3353, %v3571
    %v3574 = vld [vmem:[#allocation2 + $0x8] ss:$0 sm:$0xff]
    %3576 = vrot.lane.b32.xlu0 %v3574, 104
    %v3577 = vpop.permute.xlu0 %3576
    %3579 = vst.msk [vmem:[#allocation3 + $0x1] sm:$0x1] %vm3360, %v3577
    %v3580 = vld [vmem:[#allocation2 + $0x8] ss:$0 sm:$0xff]
    %3582 = vrot.lane.b32.xlu0 %v3580, 96
    %v3583 = vpop.permute.xlu0 %3582
    %3585 = vst.msk [vmem:[#allocation3 + $0x1] sm:$0x1] %vm3367, %v3583
    %v3586 = vld [vmem:[#allocation2 + $0x8] ss:$0 sm:$0xff]
    %3588 = vrot.lane.b32.xlu0 %v3586, 88
    %v3589 = vpop.permute.xlu0 %3588
    %3591 = vst.msk [vmem:[#allocation3 + $0x1] sm:$0x1] %vm3374, %v3589
    %v3592 = vld [vmem:[#allocation2 + $0x9] ss:$0 sm:$0xff]
    %3593 = vst.msk [vmem:[#allocation3 + $0x1] sm:$0x1] %vm3381, %v3592
    %v3594 = vld [vmem:[#allocation2 + $0x9] ss:$0 sm:$0xff]
    %3596 = vrot.lane.b32.xlu0 %v3594, 120
    %v3597 = vpop.permute.xlu0 %3596
    %3599 = vst.msk [vmem:[#allocation3 + $0x1] sm:$0x1] %vm3388, %v3597
    %v3600 = vld [vmem:[#allocation2 + $0x9] ss:$0 sm:$0xff]
    %3602 = vrot.lane.b32.xlu0 %v3600, 112
    %v3603 = vpop.permute.xlu0 %3602
    %3605 = vst.msk [vmem:[#allocation3 + $0x1] sm:$0x1] %vm3391, %v3603
    %v3606 = vld [vmem:[#allocation2 + $0x9] ss:$0 sm:$0xff]
    %3608 = vrot.lane.b32.xlu0 %v3606, 104
    %v3609 = vpop.permute.xlu0 %3608
    %3611 = vst.msk [vmem:[#allocation3 + $0x1] sm:$0x1] %vm3398, %v3609
    %v3612 = vld [vmem:[#allocation2 + $0xa] ss:$0 sm:$0xff]
    %3614 = vrot.lane.b32.xlu0 %v3612, 16
    %v3615 = vpop.permute.xlu0 %3614
    %3617 = vst.msk [vmem:[#allocation3 + $0x1] sm:$0x1] %vm3405, %v3615
    %v3618 = vld [vmem:[#allocation2 + $0xa] ss:$0 sm:$0xff]
    %3620 = vrot.lane.b32.xlu0 %v3618, 8
    %v3621 = vpop.permute.xlu0 %3620
    %3623 = vst.msk [vmem:[#allocation3 + $0x1] sm:$0x1] %vm3412, %v3621
    %v3624 = vld [vmem:[#allocation2 + $0xa] ss:$0 sm:$0xff]
    %3625 = vst.msk [vmem:[#allocation3 + $0x1] sm:$0x1] %vm3419, %v3624
    %v3626 = vld [vmem:[#allocation2 + $0xa] ss:$0 sm:$0xff]
    %3628 = vrot.lane.b32.xlu0 %v3626, 120
    %v3629 = vpop.permute.xlu0 %3628
    %3631 = vst.msk [vmem:[#allocation3 + $0x1] sm:$0x1] %vm3426, %v3629
    %v3632 = vld [vmem:[#allocation2 + $0xb] ss:$0 sm:$0xff]
    %3634 = vrot.lane.b32.xlu0 %v3632, 32
    %v3635 = vpop.permute.xlu0 %3634
    %3637 = vst.msk [vmem:[#allocation3 + $0x1] sm:$0x1] %vm3433, %v3635
    %v3638 = vld [vmem:[#allocation2 + $0xb] ss:$0 sm:$0xff]
    %3640 = vrot.lane.b32.xlu0 %v3638, 24
    %v3641 = vpop.permute.xlu0 %3640
    %3643 = vst.msk [vmem:[#allocation3 + $0x1] sm:$0x1] %vm3440, %v3641
    %v3644 = vld [vmem:[#allocation2 + $0xb] ss:$0 sm:$0xff]
    %3646 = vrot.lane.b32.xlu0 %v3644, 16
    %v3647 = vpop.permute.xlu0 %3646
    %3649 = vst.msk [vmem:[#allocation3 + $0x1] sm:$0x1] %vm3447, %v3647
    %v3650 = vld [vmem:[#allocation2 + $0xb] ss:$0 sm:$0xff]
    %3652 = vrot.lane.b32.xlu0 %v3650, 8
    %v3653 = vpop.permute.xlu0 %3652
    %3655 = vst.msk [vmem:[#allocation3 + $0x1] sm:$0x1] %vm3454, %v3653
    %v3656 = vld [vmem:[#allocation2 + $0xc] ss:$0 sm:$0xff]
    %3658 = vrot.lane.b32.xlu0 %v3656, 48
    %v3659 = vpop.permute.xlu0 %3658
    %3661 = vst.msk [vmem:[#allocation3 + $0x1] sm:$0x1] %vm3461, %v3659
    %v3662 = vld [vmem:[#allocation2 + $0xc] ss:$0 sm:$0xff]
    %3664 = vrot.lane.b32.xlu0 %v3662, 40
    %v3665 = vpop.permute.xlu0 %3664
    %3667 = vst.msk [vmem:[#allocation3 + $0x1] sm:$0x1] %vm3468, %v3665
    %v3668 = vld [vmem:[#allocation2 + $0xc] ss:$0 sm:$0xff]
    %3670 = vrot.lane.b32.xlu0 %v3668, 32
    %v3671 = vpop.permute.xlu0 %3670
    %3673 = vst.msk [vmem:[#allocation3 + $0x1] sm:$0x1] %vm3475, %v3671
    %v3674 = vld [vmem:[#allocation2 + $0xc] ss:$0 sm:$0xff]
    %3676 = vrot.lane.b32.xlu0 %v3674, 24
    %v3677 = vpop.permute.xlu0 %3676
    %3679 = vst.msk [vmem:[#allocation3 + $0x1] sm:$0x1] %vm3482, %v3677
    %v3680 = vld [vmem:[#allocation2 + $0xd] ss:$0 sm:$0xff]
    %3682 = vrot.lane.b32.xlu0 %v3680, 64
    %v3683 = vpop.permute.xlu0 %3682
    %3685 = vst.msk [vmem:[#allocation3 + $0x1] sm:$0x1] %vm3489, %v3683
    %v3686 = vld [vmem:[#allocation2 + $0xd] ss:$0 sm:$0xff]
    %3688 = vrot.lane.b32.xlu0 %v3686, 56
    %v3689 = vpop.permute.xlu0 %3688
    %3691 = vst.msk [vmem:[#allocation3 + $0x1] sm:$0x1] %vm3496, %v3689
    %v3692 = vld [vmem:[#allocation2 + $0xd] ss:$0 sm:$0xff]
    %3694 = vrot.lane.b32.xlu0 %v3692, 48
    %v3695 = vpop.permute.xlu0 %3694
    %3697 = vst.msk [vmem:[#allocation3 + $0x1] sm:$0x1] %vm3503, %v3695
    %v3698 = vld [vmem:[#allocation2 + $0xd] ss:$0 sm:$0xff]
    %3700 = vrot.lane.b32.xlu0 %v3698, 40
    %v3701 = vpop.permute.xlu0 %3700
    %3703 = vst.msk [vmem:[#allocation3 + $0x1] sm:$0x1] %vm3510, %v3701
    %v3704 = vld [vmem:[#allocation2 + $0xe] ss:$0 sm:$0xff]
    %3706 = vrot.lane.b32.xlu0 %v3704, 80
    %v3707 = vpop.permute.xlu0 %3706
    %3709 = vst.msk [vmem:[#allocation3 + $0x1] sm:$0x1] %vm3517, %v3707
    %v3710 = vld [vmem:[#allocation2 + $0xe] ss:$0 sm:$0xff]
    %3712 = vrot.lane.b32.xlu0 %v3710, 72
    %v3713 = vpop.permute.xlu0 %3712
    %3715 = vst.msk [vmem:[#allocation3 + $0x1] sm:$0x1] %vm3524, %v3713
    %v3716 = vld [vmem:[#allocation2 + $0xe] ss:$0 sm:$0xff]
    %3718 = vrot.lane.b32.xlu0 %v3716, 64
    %v3719 = vpop.permute.xlu0 %3718
    %3721 = vst.msk [vmem:[#allocation3 + $0x1] sm:$0x1] %vm3531, %v3719
    %v3722 = vld [vmem:[#allocation2 + $0xe] ss:$0 sm:$0xff]
    %3724 = vrot.lane.b32.xlu0 %v3722, 56
    %v3725 = vpop.permute.xlu0 %3724
    %3727 = vst.msk [vmem:[#allocation3 + $0x1] sm:$0x1] %vm3538, %v3725
    %v3728 = vld [vmem:[#allocation2 + $0xf] ss:$0 sm:$0xff]
    %3730 = vrot.lane.b32.xlu0 %v3728, 96
    %v3731 = vpop.permute.xlu0 %3730
    %3733 = vst.msk [vmem:[#allocation3 + $0x1] sm:$0x1] %vm3545, %v3731
    %v3734 = vld [vmem:[#allocation2 + $0xf] ss:$0 sm:$0xff]
    %3736 = vrot.lane.b32.xlu0 %v3734, 88
    %v3737 = vpop.permute.xlu0 %3736
    %3739 = vst.msk [vmem:[#allocation3 + $0x1] sm:$0x1] %vm3552, %v3737
    %v3740 = vld [vmem:[#allocation2 + $0xf] ss:$0 sm:$0xff]
    %3742 = vrot.lane.b32.xlu0 %v3740, 80
    %v3743 = vpop.permute.xlu0 %3742
    %3745 = vst.msk [vmem:[#allocation3 + $0x1] sm:$0x1] %vm3559, %v3743
    %v3746 = vld [vmem:[#allocation2 + $0xf] ss:$0 sm:$0xff]
    %3748 = vrot.lane.b32.xlu0 %v3746, 72
    %v3749 = vpop.permute.xlu0 %3748
    %3751 = vst.msk [vmem:[#allocation3 + $0x1] sm:$0x1] %vm3566, %v3749
    %v3752 = vld [vmem:[#allocation3] sm:$0x3]
    %v3753 = vpack.c.bf16 %v3752, %v3752
    %v3754 = vld [vmem:[#allocation5] sm:$0xff]
    %v3755 = vld [vmem:[#allocation5 + $0x8] sm:$0xff]
    %v3756 = vld [vmem:[#allocation5 + $0x10] sm:$0xff]
    %v3757 = vld [vmem:[#allocation5 + $0x18] sm:$0xff]
    %v3758 = vld [vmem:[#allocation5 + $0x20] sm:$0xff]
    %v3759 = vld [vmem:[#allocation5 + $0x28] sm:$0xff]
    %v3760 = vld [vmem:[#allocation5 + $0x30] sm:$0xff]
    %v3761 = vld [vmem:[#allocation5 + $0x38] sm:$0xff]
    %v3762 = vld [vmem:[#allocation5 + $0x40] sm:$0xff]
    %v3763 = vld [vmem:[#allocation5 + $0x48] sm:$0xff]
    %v3764 = vld [vmem:[#allocation5 + $0x50] sm:$0xff]
    %v3765 = vld [vmem:[#allocation5 + $0x58] sm:$0xff]
    %v3766 = vld [vmem:[#allocation5 + $0x60] sm:$0xff]
    %v3767 = vld [vmem:[#allocation5 + $0x68] sm:$0xff]
    %v3768 = vld [vmem:[#allocation5 + $0x70] sm:$0xff]
    %v3769 = vld [vmem:[#allocation5 + $0x78] sm:$0xff]
    %v3770 = vld [vmem:[#allocation5 + $0x80] sm:$0xff]
    %v3771 = vld [vmem:[#allocation5 + $0x88] sm:$0xff]
    %v3772 = vld [vmem:[#allocation5 + $0x90] sm:$0xff]
    %v3773 = vld [vmem:[#allocation5 + $0x98] sm:$0xff]
    %v3774 = vld [vmem:[#allocation5 + $0xa0] sm:$0xff]
    %v3775 = vld [vmem:[#allocation5 + $0xa8] sm:$0xff]
    %v3776 = vld [vmem:[#allocation5 + $0xb0] sm:$0xff]
    %v3777 = vld [vmem:[#allocation5 + $0xb8] sm:$0xff]
    %v3778 = vld [vmem:[#allocation5 + $0xc0] sm:$0xff]
    %v3779 = vld [vmem:[#allocation5 + $0xc8] sm:$0xff]
    %v3780 = vld [vmem:[#allocation5 + $0xd0] sm:$0xff]
    %v3781 = vld [vmem:[#allocation5 + $0xd8] sm:$0xff]
    %v3782 = vld [vmem:[#allocation5 + $0xe0] sm:$0xff]
    %v3783 = vld [vmem:[#allocation5 + $0xe8] sm:$0xff]
    %v3784 = vld [vmem:[#allocation5 + $0xf0] sm:$0xff]
    %v3785 = vld [vmem:[#allocation5 + $0xf8] sm:$0xff]
    %v3786 = vld [vmem:[#allocation5 + $0x100] sm:$0xff]
    %v3787 = vld [vmem:[#allocation5 + $0x108] sm:$0xff]
    %v3788 = vld [vmem:[#allocation5 + $0x110] sm:$0xff]
    %v3789 = vld [vmem:[#allocation5 + $0x118] sm:$0xff]
    %v3790 = vld [vmem:[#allocation5 + $0x120] sm:$0xff]
    %v3791 = vld [vmem:[#allocation5 + $0x128] sm:$0xff]
    %v3792 = vld [vmem:[#allocation5 + $0x130] sm:$0xff]
    %v3793 = vld [vmem:[#allocation5 + $0x138] sm:$0xff]
    %v3794 = vld [vmem:[#allocation5 + $0x140] sm:$0xff]
    %v3795 = vld [vmem:[#allocation5 + $0x148] sm:$0xff]
    %v3796 = vld [vmem:[#allocation5 + $0x150] sm:$0xff]
    %v3797 = vld [vmem:[#allocation5 + $0x158] sm:$0xff]
    %v3798 = vld [vmem:[#allocation5 + $0x160] sm:$0xff]
    %v3799 = vld [vmem:[#allocation5 + $0x168] sm:$0xff]
    %v3800 = vld [vmem:[#allocation5 + $0x170] sm:$0xff]
    %v3801 = vld [vmem:[#allocation5 + $0x178] sm:$0xff]
    %v3802 = vld [vmem:[#allocation5 + $0x180] sm:$0xff]
    %v3803 = vld [vmem:[#allocation5 + $0x188] sm:$0xff]
    %v3804 = vld [vmem:[#allocation5 + $0x190] sm:$0xff]
    %v3805 = vld [vmem:[#allocation5 + $0x198] sm:$0xff]
    %v3806 = vld [vmem:[#allocation5 + $0x1a0] sm:$0xff]
    %v3807 = vld [vmem:[#allocation5 + $0x1a8] sm:$0xff]
    %v3808 = vld [vmem:[#allocation5 + $0x1b0] sm:$0xff]
    %v3809 = vld [vmem:[#allocation5 + $0x1b8] sm:$0xff]
    %v3810 = vld [vmem:[#allocation5 + $0x1c0] sm:$0xff]
    %v3811 = vld [vmem:[#allocation5 + $0x1c8] sm:$0xff]
    %v3812 = vld [vmem:[#allocation5 + $0x1d0] sm:$0xff]
    %v3813 = vld [vmem:[#allocation5 + $0x1d8] sm:$0xff]
    %v3814 = vld [vmem:[#allocation5 + $0x1e0] sm:$0xff]
    %v3815 = vld [vmem:[#allocation5 + $0x1e8] sm:$0xff]
    %v3816 = vld [vmem:[#allocation5 + $0x1f0] sm:$0xff]
    %v3817 = vld [vmem:[#allocation5 + $0x1f8] sm:$0xff]
    %v3818 = vld [vmem:[%s8] sm:$0xff]
    %v3820 = vlaneseq
    %v3821 = vshrl.u32 %v3820, 7
    %v3822 = vsub.s32 0, %v3821
    %v3823 = vrot.slane %v3818, %v3822
    %v3824 = vlaneseq
    %v3825 = vshrl.u32 %v3824, 7
    %v3826 = vsub.s32 1, %v3825
    %v3827 = vrot.slane %v3818, %v3826
    %v3828 = vlaneseq
    %v3829 = vshrl.u32 %v3828, 7
    %v3830 = vsub.s32 2, %v3829
    %v3831 = vrot.slane %v3818, %v3830
    %v3832 = vlaneseq
    %v3833 = vshrl.u32 %v3832, 7
    %v3834 = vsub.s32 3, %v3833
    %v3835 = vrot.slane %v3818, %v3834
    %v3836 = vlaneseq
    %v3837 = vshrl.u32 %v3836, 7
    %v3838 = vsub.s32 4, %v3837
    %v3839 = vrot.slane %v3818, %v3838
    %v3840 = vlaneseq
    %v3841 = vshrl.u32 %v3840, 7
    %v3842 = vsub.s32 5, %v3841
    %v3843 = vrot.slane %v3818, %v3842
    %v3844 = vlaneseq
    %v3845 = vshrl.u32 %v3844, 7
    %v3846 = vsub.s32 6, %v3845
    %v3847 = vrot.slane %v3818, %v3846
    %v3848 = vlaneseq
    %v3849 = vshrl.u32 %v3848, 7
    %v3850 = vsub.s32 7, %v3849
    %v3851 = vrot.slane %v3818, %v3850
    %v3924 = vunpack.c.l.b16 %v3754
    %v3925 = vunpack.c.h.b16 %v3754
    %v3926 = vunpack.c.l.b16 %v3755
    %v3927 = vunpack.c.h.b16 %v3755
    %v3928 = vunpack.c.l.b16 %v3756
    %v3929 = vunpack.c.h.b16 %v3756
    %v3930 = vunpack.c.l.b16 %v3757
    %v3931 = vunpack.c.h.b16 %v3757
    %v3932 = vunpack.c.l.b16 %v3758
    %v3933 = vunpack.c.h.b16 %v3758
    %v3934 = vunpack.c.l.b16 %v3759
    %v3935 = vunpack.c.h.b16 %v3759
    %v3936 = vunpack.c.l.b16 %v3760
    %v3937 = vunpack.c.h.b16 %v3760
    %v3938 = vunpack.c.l.b16 %v3761
    %v3939 = vunpack.c.h.b16 %v3761
    %v3940 = vunpack.c.l.b16 %v3762
    %v3941 = vunpack.c.h.b16 %v3762
    %v3942 = vunpack.c.l.b16 %v3763
    %v3943 = vunpack.c.h.b16 %v3763
    %v3944 = vunpack.c.l.b16 %v3764
    %v3945 = vunpack.c.h.b16 %v3764
    %v3946 = vunpack.c.l.b16 %v3765
    %v3947 = vunpack.c.h.b16 %v3765
    %v3948 = vunpack.c.l.b16 %v3766
    %v3949 = vunpack.c.h.b16 %v3766
    %v3950 = vunpack.c.l.b16 %v3767
    %v3951 = vunpack.c.h.b16 %v3767
    %v3952 = vunpack.c.l.b16 %v3768
    %v3953 = vunpack.c.h.b16 %v3768
    %v3954 = vunpack.c.l.b16 %v3769
    %v3955 = vunpack.c.h.b16 %v3769
    %v3956 = vunpack.c.l.b16 %v3770
    %v3957 = vunpack.c.h.b16 %v3770
    %v3958 = vunpack.c.l.b16 %v3771
    %v3959 = vunpack.c.h.b16 %v3771
    %v3960 = vunpack.c.l.b16 %v3772
    %v3961 = vunpack.c.h.b16 %v3772
    %v3962 = vunpack.c.l.b16 %v3773
    %v3963 = vunpack.c.h.b16 %v3773
    %v3964 = vunpack.c.l.b16 %v3774
    %v3965 = vunpack.c.h.b16 %v3774
    %v3966 = vunpack.c.l.b16 %v3775
    %v3967 = vunpack.c.h.b16 %v3775
    %v3968 = vunpack.c.l.b16 %v3776
    %v3969 = vunpack.c.h.b16 %v3776
    %v3970 = vunpack.c.l.b16 %v3777
    %v3971 = vunpack.c.h.b16 %v3777
    %v3972 = vunpack.c.l.b16 %v3778
    %v3973 = vunpack.c.h.b16 %v3778
    %v3974 = vunpack.c.l.b16 %v3779
    %v3975 = vunpack.c.h.b16 %v3779
    %v3976 = vunpack.c.l.b16 %v3780
    %v3977 = vunpack.c.h.b16 %v3780
    %v3978 = vunpack.c.l.b16 %v3781
    %v3979 = vunpack.c.h.b16 %v3781
    %v3980 = vunpack.c.l.b16 %v3782
    %v3981 = vunpack.c.h.b16 %v3782
    %v3982 = vunpack.c.l.b16 %v3783
    %v3983 = vunpack.c.h.b16 %v3783
    %v3984 = vunpack.c.l.b16 %v3784
    %v3985 = vunpack.c.h.b16 %v3784
    %v3986 = vunpack.c.l.b16 %v3785
    %v3987 = vunpack.c.h.b16 %v3785
    %v3988 = vunpack.c.l.b16 %v3786
    %v3989 = vunpack.c.h.b16 %v3786
    %v3990 = vunpack.c.l.b16 %v3787
    %v3991 = vunpack.c.h.b16 %v3787
    %v3992 = vunpack.c.l.b16 %v3788
    %v3993 = vunpack.c.h.b16 %v3788
    %v3994 = vunpack.c.l.b16 %v3789
    %v3995 = vunpack.c.h.b16 %v3789
    %v3996 = vunpack.c.l.b16 %v3790
    %v3997 = vunpack.c.h.b16 %v3790
    %v3998 = vunpack.c.l.b16 %v3791
    %v3999 = vunpack.c.h.b16 %v3791
    %v4000 = vunpack.c.l.b16 %v3792
    %v4001 = vunpack.c.h.b16 %v3792
    %v4002 = vunpack.c.l.b16 %v3793
    %v4003 = vunpack.c.h.b16 %v3793
    %v4004 = vunpack.c.l.b16 %v3794
    %v4005 = vunpack.c.h.b16 %v3794
    %v4006 = vunpack.c.l.b16 %v3795
    %v4007 = vunpack.c.h.b16 %v3795
    %v4008 = vunpack.c.l.b16 %v3796
    %v4009 = vunpack.c.h.b16 %v3796
    %v4010 = vunpack.c.l.b16 %v3797
    %v4011 = vunpack.c.h.b16 %v3797
    %v4012 = vunpack.c.l.b16 %v3798
    %v4013 = vunpack.c.h.b16 %v3798
    %v4014 = vunpack.c.l.b16 %v3799
    %v4015 = vunpack.c.h.b16 %v3799
    %v4016 = vunpack.c.l.b16 %v3800
    %v4017 = vunpack.c.h.b16 %v3800
    %v4018 = vunpack.c.l.b16 %v3801
    %v4019 = vunpack.c.h.b16 %v3801
    %v4020 = vunpack.c.l.b16 %v3802
    %v4021 = vunpack.c.h.b16 %v3802
    %v4022 = vunpack.c.l.b16 %v3803
    %v4023 = vunpack.c.h.b16 %v3803
    %v4024 = vunpack.c.l.b16 %v3804
    %v4025 = vunpack.c.h.b16 %v3804
    %v4026 = vunpack.c.l.b16 %v3805
    %v4027 = vunpack.c.h.b16 %v3805
    %v4028 = vunpack.c.l.b16 %v3806
    %v4029 = vunpack.c.h.b16 %v3806
    %v4030 = vunpack.c.l.b16 %v3807
    %v4031 = vunpack.c.h.b16 %v3807
    %v4032 = vunpack.c.l.b16 %v3808
    %v4033 = vunpack.c.h.b16 %v3808
    %v4034 = vunpack.c.l.b16 %v3809
    %v4035 = vunpack.c.h.b16 %v3809
    %v4036 = vunpack.c.l.b16 %v3810
    %v4037 = vunpack.c.h.b16 %v3810
    %v4038 = vunpack.c.l.b16 %v3811
    %v4039 = vunpack.c.h.b16 %v3811
    %v4040 = vunpack.c.l.b16 %v3812
    %v4041 = vunpack.c.h.b16 %v3812
    %v4042 = vunpack.c.l.b16 %v3813
    %v4043 = vunpack.c.h.b16 %v3813
    %v4044 = vunpack.c.l.b16 %v3814
    %v4045 = vunpack.c.h.b16 %v3814
    %v4046 = vunpack.c.l.b16 %v3815
    %v4047 = vunpack.c.h.b16 %v3815
    %v4048 = vunpack.c.l.b16 %v3816
    %v4049 = vunpack.c.h.b16 %v3816
    %v4050 = vunpack.c.l.b16 %v3817
    %v4051 = vunpack.c.h.b16 %v3817
    %v4052 = vpack.c.b16 %v3932, %v3924
    %v4053 = vpack.c.b16 %v3933, %v3925
    %v4054 = vpack.c.b16 %v3934, %v3926
    %v4055 = vpack.c.b16 %v3935, %v3927
    %v4056 = vpack.c.b16 %v3936, %v3928
    %v4057 = vpack.c.b16 %v3937, %v3929
    %v4058 = vpack.c.b16 %v3938, %v3930
    %v4059 = vpack.c.b16 %v3939, %v3931
    %v4060 = vpack.c.b16 %v3948, %v3940
    %v4061 = vpack.c.b16 %v3949, %v3941
    %v4062 = vpack.c.b16 %v3950, %v3942
    %v4063 = vpack.c.b16 %v3951, %v3943
    %v4064 = vpack.c.b16 %v3952, %v3944
    %v4065 = vpack.c.b16 %v3953, %v3945
    %v4066 = vpack.c.b16 %v3954, %v3946
    %v4067 = vpack.c.b16 %v3955, %v3947
    %v4068 = vpack.c.b16 %v3964, %v3956
    %v4069 = vpack.c.b16 %v3965, %v3957
    %v4070 = vpack.c.b16 %v3966, %v3958
    %v4071 = vpack.c.b16 %v3967, %v3959
    %v4072 = vpack.c.b16 %v3968, %v3960
    %v4073 = vpack.c.b16 %v3969, %v3961
    %v4074 = vpack.c.b16 %v3970, %v3962
    %v4075 = vpack.c.b16 %v3971, %v3963
    %v4076 = vpack.c.b16 %v3980, %v3972
    %v4077 = vpack.c.b16 %v3981, %v3973
    %v4078 = vpack.c.b16 %v3982, %v3974
    %v4079 = vpack.c.b16 %v3983, %v3975
    %v4080 = vpack.c.b16 %v3984, %v3976
    %v4081 = vpack.c.b16 %v3985, %v3977
    %v4082 = vpack.c.b16 %v3986, %v3978
    %v4083 = vpack.c.b16 %v3987, %v3979
    %v4084 = vpack.c.b16 %v3996, %v3988
    %v4085 = vpack.c.b16 %v3997, %v3989
    %v4086 = vpack.c.b16 %v3998, %v3990
    %v4087 = vpack.c.b16 %v3999, %v3991
    %v4088 = vpack.c.b16 %v4000, %v3992
    %v4089 = vpack.c.b16 %v4001, %v3993
    %v4090 = vpack.c.b16 %v4002, %v3994
    %v4091 = vpack.c.b16 %v4003, %v3995
    %v4092 = vpack.c.b16 %v4012, %v4004
    %v4093 = vpack.c.b16 %v4013, %v4005
    %v4094 = vpack.c.b16 %v4014, %v4006
    %v4095 = vpack.c.b16 %v4015, %v4007
    %v4096 = vpack.c.b16 %v4016, %v4008
    %v4097 = vpack.c.b16 %v4017, %v4009
    %v4098 = vpack.c.b16 %v4018, %v4010
    %v4099 = vpack.c.b16 %v4019, %v4011
    %v4100 = vpack.c.b16 %v4028, %v4020
    %v4101 = vpack.c.b16 %v4029, %v4021
    %v4102 = vpack.c.b16 %v4030, %v4022
    %v4103 = vpack.c.b16 %v4031, %v4023
    %v4104 = vpack.c.b16 %v4032, %v4024
    %v4105 = vpack.c.b16 %v4033, %v4025
    %v4106 = vpack.c.b16 %v4034, %v4026
    %v4107 = vpack.c.b16 %v4035, %v4027
    %v4108 = vpack.c.b16 %v4044, %v4036
    %v4109 = vpack.c.b16 %v4045, %v4037
    %v4110 = vpack.c.b16 %v4046, %v4038
    %v4111 = vpack.c.b16 %v4047, %v4039
    %v4112 = vpack.c.b16 %v4048, %v4040
    %v4113 = vpack.c.b16 %v4049, %v4041
    %v4114 = vpack.c.b16 %v4050, %v4042
    %v4115 = vpack.c.b16 %v4051, %v4043
    %4180 = vmatprep.subr.bf16.mxu0 %v4053
    %4181 = vmatpush1.bf16.msra.mxu0 %v4052
    %4182 = vmatprep.subr.bf16.mxu0 %v4061
    %4183 = vmatpush1.bf16.msra.mxu0 %v4060
    %4184 = vmatprep.subr.bf16.mxu0 %v4069
    %4185 = vmatpush1.bf16.msra.mxu0 %v4068
    %4186 = vmatprep.subr.bf16.mxu0 %v4077
    %4187 = vmatpush1.bf16.msra.mxu0 %v4076
    %4188 = vmatprep.subr.bf16.mxu0 %v4085
    %4189 = vmatpush1.bf16.msra.mxu0 %v4084
    %4190 = vmatprep.subr.bf16.mxu0 %v4093
    %4191 = vmatpush1.bf16.msra.mxu0 %v4092
    %4192 = vmatprep.subr.bf16.mxu0 %v4101
    %4193 = vmatpush1.bf16.msra.mxu0 %v4100
    %4194 = vmatprep.subr.bf16.mxu0 %v4109
    %4195 = vmatpush1.bf16.msra.mxu0 %v4108
    %4196 = vmatprep.subr.bf16.mxu0 0
    %4197 = vmatpush1.bf16.msra.mxu0 0
    %4198 = vmatprep.subr.bf16.mxu0 0
    %4199 = vmatpush1.bf16.msra.mxu0 0
    %4200 = vmatprep.subr.bf16.mxu0 0
    %4201 = vmatpush1.bf16.msra.mxu0 0
    %4202 = vmatprep.subr.bf16.mxu0 0
    %4203 = vmatpush1.bf16.msra.mxu0 0
    %4204 = vmatprep.subr.bf16.mxu0 0
    %4205 = vmatpush1.bf16.msra.mxu0 0
    %4206 = vmatprep.subr.bf16.mxu0 0
    %4207 = vmatpush1.bf16.msra.mxu0 0
    %4208 = vmatprep.subr.bf16.mxu0 0
    %4209 = vmatpush1.bf16.msra.mxu0 0
    %4210 = vmatprep.subr.bf16.mxu0 0
    %4211 = vmatpush1.bf16.msra.mxu0 0
    %4212 = vmatprep.mubr.bf16.mxu0 0
    %4213 = vmatmul.mubr.bf16.gmra.mrb[0].mxu0 %v3753
    %v4214 = vpop.f32.mrb[0].mxu0
    %v4215 = vadd.f32 %v3823, %v4214
    %v4216 = vpop.f32.mrb[0].mxu0
    %v4217 = vadd.f32 %v3827, %v4216
    %v4218 = vpop.f32.mrb[0].mxu0
    %v4219 = vpop.f32.mrb[0].mxu0
    %4220 = vdwg.mxu0
    %4221 = vmatprep.subr.bf16.mxu0 %v4055
    %4222 = vmatpush1.bf16.msra.mxu0 %v4054
    %4223 = vmatprep.subr.bf16.mxu0 %v4063
    %4224 = vmatpush1.bf16.msra.mxu0 %v4062
    %4225 = vmatprep.subr.bf16.mxu0 %v4071
    %4226 = vmatpush1.bf16.msra.mxu0 %v4070
    %4227 = vmatprep.subr.bf16.mxu0 %v4079
    %4228 = vmatpush1.bf16.msra.mxu0 %v4078
    %4229 = vmatprep.subr.bf16.mxu0 %v4087
    %4230 = vmatpush1.bf16.msra.mxu0 %v4086
    %4231 = vmatprep.subr.bf16.mxu0 %v4095
    %4232 = vmatpush1.bf16.msra.mxu0 %v4094
    %4233 = vmatprep.subr.bf16.mxu0 %v4103
    %4234 = vmatpush1.bf16.msra.mxu0 %v4102
    %4235 = vmatprep.subr.bf16.mxu0 %v4111
    %4236 = vmatpush1.bf16.msra.mxu0 %v4110
    %4237 = vmatprep.subr.bf16.mxu0 0
    %4238 = vmatpush1.bf16.msra.mxu0 0
    %4239 = vmatprep.subr.bf16.mxu0 0
    %4240 = vmatpush1.bf16.msra.mxu0 0
    %4241 = vmatprep.subr.bf16.mxu0 0
    %4242 = vmatpush1.bf16.msra.mxu0 0
    %4243 = vmatprep.subr.bf16.mxu0 0
    %4244 = vmatpush1.bf16.msra.mxu0 0
    %4245 = vmatprep.subr.bf16.mxu0 0
    %4246 = vmatpush1.bf16.msra.mxu0 0
    %4247 = vmatprep.subr.bf16.mxu0 0
    %4248 = vmatpush1.bf16.msra.mxu0 0
    %4249 = vmatprep.subr.bf16.mxu0 0
    %4250 = vmatpush1.bf16.msra.mxu0 0
    %4251 = vmatprep.subr.bf16.mxu0 0
    %4252 = vmatpush1.bf16.msra.mxu0 0
    %4253 = vmatprep.mubr.bf16.mxu0 0
    %4254 = vmatmul.mubr.bf16.gmra.mrb[0].mxu0 %v3753
    %v4255 = vpop.f32.mrb[0].mxu0
    %v4256 = vadd.f32 %v3831, %v4255
    %v4257 = vpop.f32.mrb[0].mxu0
    %v4258 = vadd.f32 %v3835, %v4257
    %v4259 = vpop.f32.mrb[0].mxu0
    %v4260 = vpop.f32.mrb[0].mxu0
    %4261 = vdwg.mxu0
    %4262 = vmatprep.subr.bf16.mxu0 %v4057
    %4263 = vmatpush1.bf16.msra.mxu0 %v4056
    %4264 = vmatprep.subr.bf16.mxu0 %v4065
    %4265 = vmatpush1.bf16.msra.mxu0 %v4064
    %4266 = vmatprep.subr.bf16.mxu0 %v4073
    %4267 = vmatpush1.bf16.msra.mxu0 %v4072
    %4268 = vmatprep.subr.bf16.mxu0 %v4081
    %4269 = vmatpush1.bf16.msra.mxu0 %v4080
    %4270 = vmatprep.subr.bf16.mxu0 %v4089
    %4271 = vmatpush1.bf16.msra.mxu0 %v4088
    %4272 = vmatprep.subr.bf16.mxu0 %v4097
    %4273 = vmatpush1.bf16.msra.mxu0 %v4096
    %4274 = vmatprep.subr.bf16.mxu0 %v4105
    %4275 = vmatpush1.bf16.msra.mxu0 %v4104
    %4276 = vmatprep.subr.bf16.mxu0 %v4113
    %4277 = vmatpush1.bf16.msra.mxu0 %v4112
    %4278 = vmatprep.subr.bf16.mxu0 0
    %4279 = vmatpush1.bf16.msra.mxu0 0
    %4280 = vmatprep.subr.bf16.mxu0 0
    %4281 = vmatpush1.bf16.msra.mxu0 0
    %4282 = vmatprep.subr.bf16.mxu0 0
    %4283 = vmatpush1.bf16.msra.mxu0 0
    %4284 = vmatprep.subr.bf16.mxu0 0
    %4285 = vmatpush1.bf16.msra.mxu0 0
    %4286 = vmatprep.subr.bf16.mxu0 0
    %4287 = vmatpush1.bf16.msra.mxu0 0
    %4288 = vmatprep.subr.bf16.mxu0 0
    %4289 = vmatpush1.bf16.msra.mxu0 0
    %4290 = vmatprep.subr.bf16.mxu0 0
    %4291 = vmatpush1.bf16.msra.mxu0 0
    %4292 = vmatprep.subr.bf16.mxu0 0
    %4293 = vmatpush1.bf16.msra.mxu0 0
    %4294 = vmatprep.mubr.bf16.mxu0 0
    %4295 = vmatmul.mubr.bf16.gmra.mrb[0].mxu0 %v3753
    %v4296 = vpop.f32.mrb[0].mxu0
    %v4297 = vadd.f32 %v3839, %v4296
    %v4298 = vpop.f32.mrb[0].mxu0
    %v4299 = vadd.f32 %v3843, %v4298
    %v4300 = vpop.f32.mrb[0].mxu0
    %v4301 = vpop.f32.mrb[0].mxu0
    %4302 = vdwg.mxu0
    %4303 = vmatprep.subr.bf16.mxu0 %v4059
    %4304 = vmatpush1.bf16.msra.mxu0 %v4058
    %4305 = vmatprep.subr.bf16.mxu0 %v4067
    %4306 = vmatpush1.bf16.msra.mxu0 %v4066
    %4307 = vmatprep.subr.bf16.mxu0 %v4075
    %4308 = vmatpush1.bf16.msra.mxu0 %v4074
    %4309 = vmatprep.subr.bf16.mxu0 %v4083
    %4310 = vmatpush1.bf16.msra.mxu0 %v4082
    %4311 = vmatprep.subr.bf16.mxu0 %v4091
    %4312 = vmatpush1.bf16.msra.mxu0 %v4090
    %4313 = vmatprep.subr.bf16.mxu0 %v4099
    %4314 = vmatpush1.bf16.msra.mxu0 %v4098
    %4315 = vmatprep.subr.bf16.mxu0 %v4107
    %4316 = vmatpush1.bf16.msra.mxu0 %v4106
    %4317 = vmatprep.subr.bf16.mxu0 %v4115
    %4318 = vmatpush1.bf16.msra.mxu0 %v4114
    %4319 = vmatprep.subr.bf16.mxu0 0
    %4320 = vmatpush1.bf16.msra.mxu0 0
    %4321 = vmatprep.subr.bf16.mxu0 0
    %4322 = vmatpush1.bf16.msra.mxu0 0
    %4323 = vmatprep.subr.bf16.mxu0 0
    %4324 = vmatpush1.bf16.msra.mxu0 0
    %4325 = vmatprep.subr.bf16.mxu0 0
    %4326 = vmatpush1.bf16.msra.mxu0 0
    %4327 = vmatprep.subr.bf16.mxu0 0
    %4328 = vmatpush1.bf16.msra.mxu0 0
    %4329 = vmatprep.subr.bf16.mxu0 0
    %4330 = vmatpush1.bf16.msra.mxu0 0
    %4331 = vmatprep.subr.bf16.mxu0 0
    %4332 = vmatpush1.bf16.msra.mxu0 0
    %4333 = vmatprep.subr.bf16.mxu0 0
    %4334 = vmatpush1.bf16.msra.mxu0 0
    %4335 = vmatprep.mubr.bf16.mxu0 0
    %4336 = vmatmul.mubr.bf16.gmra.mrb[0].mxu0 %v3753
    %v4337 = vpop.f32.mrb[0].mxu0
    %v4338 = vadd.f32 %v3847, %v4337
    %v4339 = vpop.f32.mrb[0].mxu0
    %v4340 = vadd.f32 %v3851, %v4339
    %v4341 = vpop.f32.mrb[0].mxu0
    %v4342 = vpop.f32.mrb[0].mxu0
    %4343 = vdwg.mxu0
    %v4344 = vmax.f32 %v4215, 0.0
    %v4345 = vmax.f32 %v4217, 0.0
    %v4346 = vmax.f32 %v4256, 0.0
    %v4347 = vmax.f32 %v4258, 0.0
    %v4348 = vmax.f32 %v4297, 0.0
    %v4349 = vmax.f32 %v4299, 0.0
    %v4350 = vmax.f32 %v4338, 0.0
    %v4351 = vmax.f32 %v4340, 0.0
    %v4352 = vld [vmem:[%s9] sm:$0xff]
    %v4354 = vlaneseq
    %v4355 = vshrl.u32 %v4354, 7
    %v4356 = vsub.s32 0, %v4355
    %v4357 = vrot.slane %v4352, %v4356
    %v4358 = vlaneseq
    %v4359 = vshrl.u32 %v4358, 7
    %v4360 = vsub.s32 1, %v4359
    %v4361 = vrot.slane %v4352, %v4360
    %v4362 = vlaneseq
    %v4363 = vshrl.u32 %v4362, 7
    %v4364 = vsub.s32 2, %v4363
    %v4365 = vrot.slane %v4352, %v4364
    %v4366 = vlaneseq
    %v4367 = vshrl.u32 %v4366, 7
    %v4368 = vsub.s32 3, %v4367
    %v4369 = vrot.slane %v4352, %v4368
    %v4370 = vlaneseq
    %v4371 = vshrl.u32 %v4370, 7
    %v4372 = vsub.s32 4, %v4371
    %v4373 = vrot.slane %v4352, %v4372
    %v4374 = vlaneseq
    %v4375 = vshrl.u32 %v4374, 7
    %v4376 = vsub.s32 5, %v4375
    %v4377 = vrot.slane %v4352, %v4376
    %v4378 = vlaneseq
    %v4379 = vshrl.u32 %v4378, 7
    %v4380 = vsub.s32 6, %v4379
    %v4381 = vrot.slane %v4352, %v4380
    %v4382 = vlaneseq
    %v4383 = vshrl.u32 %v4382, 7
    %v4384 = vsub.s32 7, %v4383
    %v4385 = vrot.slane %v4352, %v4384
    %v4394 = vmul.f32 %v4344, %v4357
    %v4395 = vmul.f32 %v4345, %v4361
    %v4396 = vmul.f32 %v4346, %v4365
    %v4397 = vmul.f32 %v4347, %v4369
    %v4398 = vmul.f32 %v4348, %v4373
    %v4399 = vmul.f32 %v4349, %v4377
    %v4400 = vmul.f32 %v4350, %v4381
    %v4401 = vmul.f32 %v4351, %v4385
    %vm4402 = vcmask 1041408
    %v4403 = vsel %vm4402, %v4394, 0.0
    %v4404 = vsel %vm4402, %v4395, 0.0
    %v4405 = vadd.f32 %v4403, %v4404
    %v4406 = vsel %vm4402, %v4396, 0.0
    %v4407 = vadd.f32 %v4405, %v4406
    %v4408 = vsel %vm4402, %v4397, 0.0
    %v4409 = vadd.f32 %v4407, %v4408
    %v4410 = vsel %vm4402, %v4398, 0.0
    %v4411 = vadd.f32 %v4409, %v4410
    %v4412 = vsel %vm4402, %v4399, 0.0
    %v4413 = vadd.f32 %v4411, %v4412
    %v4414 = vsel %vm4402, %v4400, 0.0
    %v4415 = vadd.f32 %v4413, %v4414
    %v4416 = vsel %vm4402, %v4401, 0.0
    %v4417 = vadd.f32 %v4415, %v4416
    %4418 = vadd.xlane.f32.xlu0 %v4417
    %v4419 = vpop.xlane.xlu0 %4418
    %v4420 = vld [vmem:[#allocation4] sm:$0x1]
    %v4422 = vlaneseq
    %v4423 = vshrl.u32 %v4422, 7
    %v4424 = vsub.s32 0, %v4423
    %v4425 = vrot.slane %v4420, %v4424
    %v4427 = vadd.f32 %v4419, %v4425
    %v4428 = vmax.f32 %v4427, 0.0
    %4430 = vset.pattern.permute.xlu0 0
    %4431 = vperm.xlu0 %4430, %v4428
    %v4432 = vpop.permute.xlu0 %4431
    %4434 = vst [vmem:[%s11] sm:$0x3] %v4432
    // Predicated region
    $region50: #{net_forward.1} parent=1 // pred_check
      _
    $region51: #{net_forward.1} parent=1 // pred_check_branch
      %4436 = sbr.rel (0) target = $region53
    $region52: #{net_forward.1} parent=1 // pred_region
      _
    $region53: #{net_forward.1} parent=1 // pred_fallthru
      _
    // Predicated region
    $region54: #{net_forward.1} parent=1 // pred_check
      _
    $region55: #{net_forward.1} parent=1 // pred_check_branch
      %4438 = sbr.rel (0) target = $region57
    $region56: #{net_forward.1} parent=1 // pred_region
      _
    $region57: #{net_forward.1} parent=1 // pred_fallthru
      _
    %4439 = vsyncpa [#allocation6], 1

</llo_original>
